<compile_context>
chip_gen: v7x
topology: tpu7x:2x2x1
jax: 0.10.0
libtpu: 0.0.40
codegen_flags: <defaults>
</compile_context>

<pallas_src>
import functools

import jax
import jax.numpy as jnp
from jax.experimental import pallas as pl
from jax.experimental.pallas import tpu as pltpu


# ------------------------------ in-kernel math ------------------------------ #

def _ln(x, g, b, eps=1e-6):
    # LayerNorm over last dim in f32 (DINO ViT uses eps=1e-6).
    mean = jnp.mean(x, axis=-1, keepdims=True)
    xc = x - mean
    var = jnp.mean(xc * xc, axis=-1, keepdims=True)
    return xc * jax.lax.rsqrt(var + eps) * g + b


def _gelu_tanh(h):
    c = jnp.float32(0.7978845608028654)  # sqrt(2/pi)
    return 0.5 * h * (1.0 + jnp.tanh(c * (h + 0.044715 * h * h * h)))


def _bdot(a, b):
    # bf16 MXU matmul with f32 accumulation.
    return jnp.dot(a.astype(jnp.bfloat16), b.astype(jnp.bfloat16),
                   preferred_element_type=jnp.float32)


# ----------------------------- Pallas kernels ------------------------------ #

def _linear_kernel(x_ref, w_ref, b_ref, o_ref):
    # o = x @ w + b ; x tile (tm, K) f32, w (K, N) bf16, b (1, N) f32.
    acc = jnp.dot(x_ref[...].astype(jnp.bfloat16), w_ref[...],
                  preferred_element_type=jnp.float32)
    o_ref[...] = (acc + b_ref[...]).astype(o_ref.dtype)


def _vit_blocks_kernel(x_ref,
                       ln1_g_ref, ln1_b_ref,
                       qkv_w_ref, qkv_b_ref,
                       proj_w_ref, proj_b_ref,
                       ln2_g_ref, ln2_b_ref,
                       fc1_w_ref, fc1_b_ref,
                       fc2_w_ref, fc2_b_ref,
                       norm_g_ref, norm_b_ref,
                       o_ref,
                       attn_acc_ref,
                       *, num_heads, bt, tokens, tokens_padded):
    """One fused transformer block per depth grid step.

    grid = (batch_groups, depth); the o_ref block index depends only on the
    group axis, so the (Bt*Tp, D) activation slab stays resident in VMEM as an
    accumulator across the depth axis. Dense GEMMs run with the batch folded
    into M = Bt*Tp rows; only the attention-score section loops per example.
    """
    d = pl.program_id(1)
    last = pl.num_programs(1) - 1

    @pl.when(d == 0)
    def _():
        o_ref[...] = x_ref[...]          # initialize accumulator with tokens

    x = o_ref[...]                        # (M, D) f32 residual stream
    M, D = x.shape
    hd = D // num_heads
    Tp = tokens_padded
    scale = float(hd) ** -0.5

    # Key-padding mask (static): keys at index >= tokens are padding.
    key_ids = jax.lax.broadcasted_iota(jnp.int32, (Tp, Tp), 1)
    key_mask = key_ids < tokens
    neg_big = jnp.float32(-1e30)

    # ---- multi-head self-attention (pre-norm) ----
    y = _ln(x, ln1_g_ref[0], ln1_b_ref[0])                     # (M, D) f32
    attn_acc_ref[...] = jnp.zeros_like(attn_acc_ref)

    def _head_body(h, carry):
        # Per-head weights indexed on a leading axis -> no lane-offset slicing.
        w_h = qkv_w_ref[0, h]                                   # (D, 3*hd) bf16
        b_h = qkv_b_ref[0, h]                                   # (1, 3*hd) f32
        pw_h = proj_w_ref[0, h]                                 # (hd, D)  bf16

        qkv_h = _bdot(y, w_h) + b_h                             # (M, 3*hd) f32
        q = qkv_h[:, 0:hd]
        k = qkv_h[:, hd:2 * hd]
        v = qkv_h[:, 2 * hd:3 * hd]

        for b in range(bt):                                     # static, small
            r0 = b * Tp
            qb = q[r0:r0 + Tp]
            kb = k[r0:r0 + Tp]
            vb = v[r0:r0 + Tp]
            s = jax.lax.dot_general(
                qb.astype(jnp.bfloat16), kb.astype(jnp.bfloat16),
                dimension_numbers=(((1,), (1,)), ((), ())),
                preferred_element_type=jnp.float32) * scale     # (Tp, Tp)
            s = jnp.where(key_mask, s, neg_big)                 # mask padded keys
            s = s - jnp.max(s, axis=-1, keepdims=True)
            p = jnp.exp(s)
            p = p * pl.reciprocal(jnp.sum(p, axis=-1, keepdims=True), approx=True)
            ob = _bdot(p, vb)                                   # (Tp, hd)
            # Per-head output projection, accumulated full-lane-width (no concat).
            attn_acc_ref[r0:r0 + Tp, :] += _bdot(ob, pw_h)      # (Tp, D)
        return carry

    jax.lax.fori_loop(0, num_heads, _head_body, 0)

    # projection bias + residual add fused
    x = x + attn_acc_ref[...] + proj_b_ref[0]

    # ---- MLP (pre-norm), GELU fused, residual fused into fc2 epilogue ----
    y = _ln(x, ln2_g_ref[0], ln2_b_ref[0])
    hmid = _gelu_tanh(_bdot(y, fc1_w_ref[0]) + fc1_b_ref[0])
    x = x + _bdot(hmid, fc2_w_ref[0]) + fc2_b_ref[0]

    # get_intermediate_feat applies the final LayerNorm to the last block out.
    @pl.when(d == last)
    def _():
        o_ref[...] = _ln(x, norm_g_ref[...], norm_b_ref[...]).astype(o_ref.dtype)

    @pl.when(d != last)
    def _():
        o_ref[...] = x.astype(o_ref.dtype)


# ----------------------------- Pallas wrappers ----------------------------- #

def _pick_tile_m(m, target_steps=4):
    # Prefer a tile that yields a few pipelined grid steps; fall back to any
    # divisor (tiny M at toy scale).
    for t in (512, 256, 128, 64, 32, 16, 8):
        if m % t == 0 and m // t >= target_steps:
            return t
    for t in (512, 256, 128, 64, 32, 16, 8):
        if m % t == 0:
            return t
    return m


def pallas_linear(x, w, b):
    """Row-tiled o = x @ w + b (used for the patch embed)."""
    M, K = x.shape
    N = w.shape[1]
    tm = _pick_tile_m(M)
    return pl.pallas_call(
        _linear_kernel,
        out_shape=jax.ShapeDtypeStruct((M, N), jnp.float32),
        grid=(M // tm,),
        in_specs=[pl.BlockSpec((tm, K), lambda i: (i, 0)),
                  pl.BlockSpec((K, N), lambda i: (0, 0)),
                  pl.BlockSpec((1, N), lambda i: (0, 0))],
        out_specs=pl.BlockSpec((tm, N), lambda i: (i, 0)),
        compiler_params=pltpu.CompilerParams(
            dimension_semantics=("parallel",)),
    )(x, w, b.reshape(1, N))


def vit_blocks(x_flat, blocks, norm_g, norm_b, *,
               num_heads, bt, tokens, tokens_padded):
    """Whole pre-norm transformer stack + final LN in one pallas_call.

    x_flat: (B * Tp, D) f32, batch-major (token rows of example i are rows
    [i*Tp, (i+1)*Tp)).  Resident block is (Bt*Tp, D); grid = (B//Bt, depth).
    """
    M_total, D = x_flat.shape
    Tp = tokens_padded
    Mb = bt * Tp
    groups = M_total // Mb
    depth = blocks["qkv_w"].shape[0]
    H = num_heads
    hd = D // H
    hid = blocks["fc1_w"].shape[-1]

    def blk(shape):
        # depth-stacked per-block parameter: stream block d's slice each step.
        nd = len(shape)
        return pl.BlockSpec((1,) + shape, lambda g, d, _n=nd: (d,) + (0,) * _n)

    def full(shape):
        nd = len(shape)
        return pl.BlockSpec(shape, lambda g, d, _n=nd: (0,) * _n)

    x_spec = pl.BlockSpec((Mb, D), lambda g, d: (g, 0))

    grid_spec = pltpu.PrefetchScalarGridSpec(
        num_scalar_prefetch=0,
        grid=(groups, depth),
        in_specs=[
            x_spec,
            blk((1, D)), blk((1, D)),              # ln1 gamma/beta
            blk((H, D, 3 * hd)), blk((H, 1, 3 * hd)),   # per-head qkv w/b
            blk((H, hd, D)), blk((1, D)),          # per-head proj w, proj bias
            blk((1, D)), blk((1, D)),              # ln2 gamma/beta
            blk((D, hid)), blk((1, hid)),          # fc1 weight/bias
            blk((hid, D)), blk((1, D)),            # fc2 weight/bias
            full((1, D)), full((1, D)),            # final norm gamma/beta
        ],
        out_specs=x_spec,                          # resident across depth axis
        scratch_shapes=[pltpu.VMEM((Mb, D), jnp.float32)],   # attn accumulator
    )

    return pl.pallas_call(
        functools.partial(_vit_blocks_kernel, num_heads=num_heads, bt=bt,
                          tokens=tokens, tokens_padded=tokens_padded),
        out_shape=jax.ShapeDtypeStruct((M_total, D), jnp.float32),
        grid_spec=grid_spec,
        compiler_params=pltpu.CompilerParams(
            dimension_semantics=("parallel", "arbitrary"),
            vmem_limit_bytes=48 * 1024 * 1024),    # v5e default is only 16 MiB
    )(x_flat,
      blocks["ln1_g"], blocks["ln1_b"],
      blocks["qkv_w"], blocks["qkv_b"],
      blocks["proj_w"], blocks["proj_b"],
      blocks["ln2_g"], blocks["ln2_b"],
      blocks["fc1_w"], blocks["fc1_b"],
      blocks["fc2_w"], blocks["fc2_b"],
      norm_g, norm_b)


def _to_per_head_layout(blocks, num_heads):
    """Re-pack canonical QKV/proj weights so the head index is a leading axis.

    qkv_w: (depth, D, 3D) [Q|K|V, heads column-grouped] -> (depth, H, D, 3*hd)
    qkv_b: (depth, 1, 3D)                               -> (depth, H, 1, 3*hd)
    proj_w: (depth, D, D)  [rows head-grouped]          -> (depth, H, hd, D)
    """
    depth, D, _ = blocks["qkv_w"].shape
    H = num_heads
    hd = D // H
    qkv_w = blocks["qkv_w"].reshape(depth, D, 3, H, hd)
    qkv_w = qkv_w.transpose(0, 3, 1, 2, 4).reshape(depth, H, D, 3 * hd)
    qkv_b = blocks["qkv_b"].reshape(depth, 1, 3, H, hd)
    qkv_b = qkv_b.transpose(0, 3, 1, 2, 4).reshape(depth, H, 1, 3 * hd)
    proj_w = blocks["proj_w"].reshape(depth, H, hd, D)
    out = dict(blocks)
    out["qkv_w"] = qkv_w
    out["qkv_b"] = qkv_b
    out["proj_w"] = proj_w
    return out


# ------------------------------ mini DINO ViT ------------------------------ #

def init_params(key, patch_in_dim, embed_dim, depth, mlp_ratio, num_tokens):
    keys = jax.random.split(key, 3 + depth)

    def nrm(k, shape, dtype=jnp.float32):
        return (0.02 * jax.random.normal(k, shape, dtype=jnp.float32)).astype(dtype)

    hid = embed_dim * mlp_ratio
    blk_keys = [jax.random.split(keys[3 + i], 4) for i in range(depth)]

    params = {
        # matmul weights in bf16 (MXU path); biases / LN params / embeds in f32.
        "patch_w": nrm(keys[0], (patch_in_dim, embed_dim), jnp.bfloat16),
        "patch_b": jnp.zeros((embed_dim,), jnp.float32),
        "cls_token": nrm(keys[1], (1, 1, embed_dim)),
        "pos_embed": nrm(keys[2], (1, num_tokens, embed_dim)),
        "norm_g": jnp.ones((1, embed_dim), jnp.float32),
        "norm_b": jnp.zeros((1, embed_dim), jnp.float32),
        "blocks": {
            "ln1_g": jnp.ones((depth, 1, embed_dim), jnp.float32),
            "ln1_b": jnp.zeros((depth, 1, embed_dim), jnp.float32),
            "qkv_w": jnp.stack([nrm(bk[0], (embed_dim, 3 * embed_dim),
                                    jnp.bfloat16) for bk in blk_keys]),
            "qkv_b": jnp.zeros((depth, 1, 3 * embed_dim), jnp.float32),
            "proj_w": jnp.stack([nrm(bk[1], (embed_dim, embed_dim),
                                     jnp.bfloat16) for bk in blk_keys]),
            "proj_b": jnp.zeros((depth, 1, embed_dim), jnp.float32),
            "ln2_g": jnp.ones((depth, 1, embed_dim), jnp.float32),
            "ln2_b": jnp.zeros((depth, 1, embed_dim), jnp.float32),
            "fc1_w": jnp.stack([nrm(bk[2], (embed_dim, hid),
                                    jnp.bfloat16) for bk in blk_keys]),
            "fc1_b": jnp.zeros((depth, 1, hid), jnp.float32),
            "fc2_w": jnp.stack([nrm(bk[3], (hid, embed_dim),
                                    jnp.bfloat16) for bk in blk_keys]),
            "fc2_b": jnp.zeros((depth, 1, embed_dim), jnp.float32),
        },
    }
    return params


def dino_featurizer_forward(img, params, *, patch_size, num_heads,
                            feat_type="feat", return_class_feat=False):
    """Matches DinoFeaturizer.forward(img, n=1) for feat_type == 'feat'."""
    B, C, H, W = img.shape
    assert H % patch_size == 0 and W % patch_size == 0
    feat_h, feat_w = H // patch_size, W // patch_size
    P = patch_size
    N = feat_h * feat_w
    D = params["patch_w"].shape[1]

    # Patch-embed Conv2d(C, D, kernel=P, stride=P) == patchify + matmul.
    x = img.reshape(B, C, feat_h, P, feat_w, P)
    x = x.transpose(0, 2, 4, 1, 3, 5).reshape(B * N, C * P * P)
    x = pallas_linear(x, params["patch_w"], params["patch_b"]).reshape(B, N, D)

    # cls token + positional embedding (prepare_tokens); small glue in JAX.
    cls = jnp.broadcast_to(params["cls_token"], (B, 1, D))
    x = jnp.concatenate([cls, x], axis=1) + params["pos_embed"]     # (B, T, D)

    # Pad token axis to a sublane multiple; padded keys are masked in-kernel.
    T = N + 1
    Tp = ((T + 7) // 8) * 8
    x = jnp.pad(x, ((0, 0), (0, Tp - T), (0, 0)))

    # Fold batch into the GEMM M dimension while keeping >=2 parallel blocks.
    bt = max(1, B // 2)
    while B % bt != 0:
        bt -= 1
    x_flat = x.reshape(B * Tp, D)

    # One-time weight re-pack: per-head leading axis (no lane-offset slicing).
    blocks = _to_per_head_layout(params["blocks"], num_heads)

    # All transformer blocks + final LayerNorm in one fused pallas_call.
    feat_flat = vit_blocks(x_flat, blocks, params["norm_g"], params["norm_b"],
                           num_heads=num_heads, bt=bt,
                           tokens=T, tokens_padded=Tp)               # (B*Tp, D)
    feat = feat_flat.reshape(B, Tp, D)[:, :T, :]                     # strip pad

    if return_class_feat:
        return feat[:, :1, :].reshape(B, 1, 1, D).transpose(0, 3, 1, 2)

    if feat_type == "feat":
        image_feat = feat[:, 1:, :].reshape(B, feat_h, feat_w, D)
        return image_feat.transpose(0, 3, 1, 2)                      # NCHW
    raise ValueError(f"Unknown feat type: {feat_type}")


# ---------------------------------- main ----------------------------------- #

if __name__ == "__main__":
    key = jax.random.PRNGKey(0)
    k_img, k_par = jax.random.split(key)

    B, C, H, W = 4, 3, 32, 32
    patch_size = 8           # cfg.dino_patch_size
    embed_dim = 128          # lane-friendly stand-in for vit_small's 384
    num_heads = 2            # head_dim = 64
    depth = 2
    mlp_ratio = 4

    img = jax.random.normal(k_img, (B, C, H, W), dtype=jnp.float32)
    feat_h, feat_w = H // patch_size, W // patch_size
    params = init_params(k_par, C * patch_size * patch_size, embed_dim,
                         depth, mlp_ratio, feat_h * feat_w + 1)

    fwd = jax.jit(functools.partial(dino_featurizer_forward,
                                    patch_size=patch_size,
                                    num_heads=num_heads,
                                    feat_type="feat"))
    out = jax.block_until_ready(fwd(img, params))
    assert out.shape == (B, embed_dim, feat_h, feat_w), out.shape
    assert bool(jnp.all(jnp.isfinite(out)))
    print("KERNEL_OK")
</pallas_src>

<mosaic_0001>
module attributes {stable_mosaic.version = 11 : i64} {
  func.func @_linear_kernel(%arg0: i32, %arg1: memref<16x192xf32, #tpu.memory_space<vmem>>, %arg2: memref<192x128xbf16, #tpu.memory_space<vmem>>, %arg3: memref<1x128xf32, #tpu.memory_space<vmem>>, %arg4: memref<16x128xf32, #tpu.memory_space<vmem>>) attributes {dimension_semantics = [#tpu.dimension_semantics<parallel>], iteration_bounds = array<i64: 4>, scalar_prefetch = 0 : i64, scratch_operands = 0 : i64, tpu.core_type = #tpu.core_type<tc>, window_params = [{transform_indices = @transform_0, window_bounds = array<i64: 16, 192>}, {pipeline_mode = #tpu.pipeline_mode<synchronous>, transform_indices = @transform_1, window_bounds = array<i64: 192, 128>}, {pipeline_mode = #tpu.pipeline_mode<synchronous>, transform_indices = @transform_2, window_bounds = array<i64: 1, 128>}, {transform_indices = @transform_3, window_bounds = array<i64: 16, 128>}]} {
    %c0 = arith.constant 0 : index
    %c0_0 = arith.constant 0 : index
    %0 = vector.load %arg1[%c0, %c0_0] : memref<16x192xf32, #tpu.memory_space<vmem>>, vector<16x192xf32>
    %1 = arith.truncf %0 : vector<16x192xf32> to vector<16x192xbf16>
    %c0_1 = arith.constant 0 : index
    %c0_2 = arith.constant 0 : index
    %2 = vector.load %arg2[%c0_1, %c0_2] : memref<192x128xbf16, #tpu.memory_space<vmem>>, vector<192x128xbf16>
    %cst = arith.constant dense<0.000000e+00> : vector<16x128xf32>
    %3 = tpu.matmul %1, %2, %cst {dimension_numbers = #tpu.dot_dimension_numbers<[1], [0], [0], [1], [0, 0, 1, 1], [], []>} : vector<16x192xbf16>, vector<192x128xbf16>, vector<16x128xf32> -> vector<16x128xf32>
    %c0_3 = arith.constant 0 : index
    %c0_4 = arith.constant 0 : index
    %4 = vector.load %arg3[%c0_3, %c0_4] : memref<1x128xf32, #tpu.memory_space<vmem>>, vector<1x128xf32>
    %5 = vector.broadcast %4 : vector<1x128xf32> to vector<16x128xf32>
    %6 = arith.addf %3, %5 : vector<16x128xf32>
    %c0_5 = arith.constant 0 : index
    %c0_6 = arith.constant 0 : index
    %7 = vector.load %arg4[%c0_5, %c0_6] : memref<16x128xf32, #tpu.memory_space<vmem>>, vector<16x128xf32>
    tpu.vector_store %arg4[%c0_5, %c0_6], %6 {strides = array<i32>} : memref<16x128xf32, #tpu.memory_space<vmem>>, vector<16x128xf32>,
    return
  }
  func.func @transform_0(%arg0: i32) -> (i32, i32) {
    %c0_i32 = arith.constant 0 : i32
    %c0_i32_0 = arith.constant 0 : i32
    return %arg0, %c0_i32 : i32, i32
  }
  func.func @transform_1(%arg0: i32) -> (i32, i32) {
    %c0_i32 = arith.constant 0 : i32
    %c0_i32_0 = arith.constant 0 : i32
    %c0_i32_1 = arith.constant 0 : i32
    return %c0_i32, %c0_i32_0 : i32, i32
  }
  func.func @transform_2(%arg0: i32) -> (i32, i32) {
    %c0_i32 = arith.constant 0 : i32
    %c0_i32_0 = arith.constant 0 : i32
    %c0_i32_1 = arith.constant 0 : i32
    return %c0_i32, %c0_i32_0 : i32, i32
  }
  func.func @transform_3(%arg0: i32) -> (i32, i32) {
    %c0_i32 = arith.constant 0 : i32
    %c0_i32_0 = arith.constant 0 : i32
    return %arg0, %c0_i32 : i32, i32
  }
}

module attributes {stable_mosaic.version = 11 : i64} {
  func.func @_vit_blocks_kernel(%arg0: i32, %arg1: i32, %arg2: memref<48x128xf32, #tpu.memory_space<vmem>>, %arg3: memref<1x1x128xf32, #tpu.memory_space<vmem>>, %arg4: memref<1x1x128xf32, #tpu.memory_space<vmem>>, %arg5: memref<1x2x128x192xbf16, #tpu.memory_space<vmem>>, %arg6: memref<1x2x1x192xf32, #tpu.memory_space<vmem>>, %arg7: memref<1x2x64x128xbf16, #tpu.memory_space<vmem>>, %arg8: memref<1x1x128xf32, #tpu.memory_space<vmem>>, %arg9: memref<1x1x128xf32, #tpu.memory_space<vmem>>, %arg10: memref<1x1x128xf32, #tpu.memory_space<vmem>>, %arg11: memref<1x128x512xbf16, #tpu.memory_space<vmem>>, %arg12: memref<1x1x512xf32, #tpu.memory_space<vmem>>, %arg13: memref<1x512x128xbf16, #tpu.memory_space<vmem>>, %arg14: memref<1x1x128xf32, #tpu.memory_space<vmem>>, %arg15: memref<1x128xf32, #tpu.memory_space<vmem>>, %arg16: memref<1x128xf32, #tpu.memory_space<vmem>>, %arg17: memref<48x128xf32, #tpu.memory_space<vmem>>, %arg18: memref<48x128xf32, #tpu.memory_space<vmem>>) attributes {dimension_semantics = [#tpu.dimension_semantics<parallel>, #tpu.dimension_semantics<arbitrary>], iteration_bounds = array<i64: 2, 2>, scalar_prefetch = 0 : i64, scratch_operands = 1 : i64, tpu.core_type = #tpu.core_type<tc>, window_params = [{transform_indices = @transform_0, window_bounds = array<i64: 48, 128>}, {transform_indices = @transform_1, window_bounds = array<i64: 1, 1, 128>}, {transform_indices = @transform_2, window_bounds = array<i64: 1, 1, 128>}, {transform_indices = @transform_3, window_bounds = array<i64: 1, 2, 128, 192>}, {transform_indices = @transform_4, window_bounds = array<i64: 1, 2, 1, 192>}, {transform_indices = @transform_5, window_bounds = array<i64: 1, 2, 64, 128>}, {transform_indices = @transform_6, window_bounds = array<i64: 1, 1, 128>}, {transform_indices = @transform_7, window_bounds = array<i64: 1, 1, 128>}, {transform_indices = @transform_8, window_bounds = array<i64: 1, 1, 128>}, {transform_indices = @transform_9, window_bounds = array<i64: 1, 128, 512>}, {transform_indices = @transform_10, window_bounds = array<i64: 1, 1, 512>}, {transform_indices = @transform_11, window_bounds = array<i64: 1, 512, 128>}, {transform_indices = @transform_12, window_bounds = array<i64: 1, 1, 128>}, {pipeline_mode = #tpu.pipeline_mode<synchronous>, transform_indices = @transform_13, window_bounds = array<i64: 1, 128>}, {pipeline_mode = #tpu.pipeline_mode<synchronous>, transform_indices = @transform_14, window_bounds = array<i64: 1, 128>}, {transform_indices = @transform_15, window_bounds = array<i64: 48, 128>}]} {
    %c0_i32 = arith.constant 0 : i32
    %0 = arith.cmpi eq, %arg1, %c0_i32 : i32
    %1 = arith.extui %0 : i1 to i32
    %c0_i32_0 = arith.constant 0 : i32
    %2 = arith.cmpi ne, %1, %c0_i32_0 : i32
    scf.if %2 {
      %c0_56 = arith.constant 0 : index
      %c0_57 = arith.constant 0 : index
      %100 = vector.load %arg2[%c0_56, %c0_57] : memref<48x128xf32, #tpu.memory_space<vmem>>, vector<48x128xf32>
      %c0_58 = arith.constant 0 : index
      %c0_59 = arith.constant 0 : index
      %101 = vector.load %arg17[%c0_58, %c0_59] : memref<48x128xf32, #tpu.memory_space<vmem>>, vector<48x128xf32>
      tpu.vector_store %arg17[%c0_58, %c0_59], %100 {strides = array<i32>} : memref<48x128xf32, #tpu.memory_space<vmem>>, vector<48x128xf32>,
    } else {
    }
    %c0 = arith.constant 0 : index
    %c0_1 = arith.constant 0 : index
    %3 = vector.load %arg17[%c0, %c0_1] : memref<48x128xf32, #tpu.memory_space<vmem>>, vector<48x128xf32>
    %4 = tpu.iota {dimensions = array<i32: 1>} : vector<24x24xi32>
    %c17_i32 = arith.constant 17 : i32
    %5 = vector.broadcast %c17_i32 : i32 to vector<24x24xi32>
    %6 = arith.cmpi slt, %4, %5 : vector<24x24xi32>
    %c0_2 = arith.constant 0 : index
    %c0_3 = arith.constant 0 : index
    %c0_4 = arith.constant 0 : index
    %7 = vector.load %arg3[%c0_2, %c0_3, %c0_4] : memref<1x1x128xf32, #tpu.memory_space<vmem>>, vector<1x1x128xf32>
    %8 = vector.shape_cast %7 : vector<1x1x128xf32> to vector<1x128xf32>
    %c0_5 = arith.constant 0 : index
    %c0_6 = arith.constant 0 : index
    %c0_7 = arith.constant 0 : index
    %9 = vector.load %arg4[%c0_5, %c0_6, %c0_7] : memref<1x1x128xf32, #tpu.memory_space<vmem>>, vector<1x1x128xf32>
    %10 = vector.shape_cast %9 : vector<1x1x128xf32> to vector<1x128xf32>
    %cst = arith.constant dense<0.000000e+00> : vector<48xf32>
    %11 = vector.multi_reduction <add>, %3, %cst [1] : vector<48x128xf32> to vector<48xf32>
    %12 = vector.shape_cast %11 : vector<48xf32> to vector<48x1xf32>
    %cst_8 = arith.constant 1.280000e+02 : f32
    %13 = vector.broadcast %cst_8 : f32 to vector<48x1xf32>
    %14 = arith.divf %12, %13 : vector<48x1xf32>
    %15 = vector.broadcast %14 : vector<48x1xf32> to vector<48x128xf32>
    %16 = arith.subf %3, %15 : vector<48x128xf32>
    %17 = arith.mulf %16, %16 : vector<48x128xf32>
    %cst_9 = arith.constant dense<0.000000e+00> : vector<48xf32>
    %18 = vector.multi_reduction <add>, %17, %cst_9 [1] : vector<48x128xf32> to vector<48xf32>
    %19 = vector.shape_cast %18 : vector<48xf32> to vector<48x1xf32>
    %cst_10 = arith.constant 1.280000e+02 : f32
    %20 = vector.broadcast %cst_10 : f32 to vector<48x1xf32>
    %21 = arith.divf %19, %20 : vector<48x1xf32>
    %cst_11 = arith.constant 9.99999997E-7 : f32
    %22 = vector.broadcast %cst_11 : f32 to vector<48x1xf32>
    %23 = arith.addf %21, %22 : vector<48x1xf32>
    %24 = math.rsqrt %23 : vector<48x1xf32>
    %25 = vector.broadcast %24 : vector<48x1xf32> to vector<48x128xf32>
    %26 = arith.mulf %16, %25 : vector<48x128xf32>
    %27 = vector.broadcast %8 : vector<1x128xf32> to vector<48x128xf32>
    %28 = arith.mulf %26, %27 : vector<48x128xf32>
    %29 = vector.broadcast %10 : vector<1x128xf32> to vector<48x128xf32>
    %30 = arith.addf %28, %29 : vector<48x128xf32>
    %cst_12 = arith.constant 0.000000e+00 : f32
    %31 = vector.broadcast %cst_12 : f32 to vector<48x128xf32>
    %c0_13 = arith.constant 0 : index
    %c0_14 = arith.constant 0 : index
    %32 = vector.load %arg18[%c0_13, %c0_14] : memref<48x128xf32, #tpu.memory_space<vmem>>, vector<48x128xf32>
    tpu.vector_store %arg18[%c0_13, %c0_14], %31 {strides = array<i32>} : memref<48x128xf32, #tpu.memory_space<vmem>>, vector<48x128xf32>,
    %cst_15 = arith.constant -1.000000e+30 : f32
    %c0_i32_16 = arith.constant 0 : i32
    %c2_i32 = arith.constant 2 : i32
    %33 = arith.addi %c0_i32_16, %c2_i32 : i32
    %c1_i32 = arith.constant 1 : i32
    scf.for %arg19 = %c0_i32_16 to %33 step %c1_i32  : i32 {
      %c0_56 = arith.constant 0 : index
      %100 = arith.index_cast %arg19 : i32 to index
      %c0_57 = arith.constant 0 : index
      %c0_58 = arith.constant 0 : index
      %101 = vector.load %arg5[%c0_56, %100, %c0_57, %c0_58] : memref<1x2x128x192xbf16, #tpu.memory_space<vmem>>, vector<1x1x128x192xbf16>
      %102 = vector.shape_cast %101 : vector<1x1x128x192xbf16> to vector<128x192xbf16>
      %c0_59 = arith.constant 0 : index
      %103 = arith.index_cast %arg19 : i32 to index
      %c0_60 = arith.constant 0 : index
      %c0_61 = arith.constant 0 : index
      %104 = vector.load %arg6[%c0_59, %103, %c0_60, %c0_61] : memref<1x2x1x192xf32, #tpu.memory_space<vmem>>, vector<1x1x1x192xf32>
      %105 = vector.shape_cast %104 : vector<1x1x1x192xf32> to vector<1x192xf32>
      %c0_62 = arith.constant 0 : index
      %106 = arith.index_cast %arg19 : i32 to index
      %c0_63 = arith.constant 0 : index
      %c0_64 = arith.constant 0 : index
      %107 = vector.load %arg7[%c0_62, %106, %c0_63, %c0_64] : memref<1x2x64x128xbf16, #tpu.memory_space<vmem>>, vector<1x1x64x128xbf16>
      %108 = vector.shape_cast %107 : vector<1x1x64x128xbf16> to vector<64x128xbf16>
      %109 = arith.truncf %30 : vector<48x128xf32> to vector<48x128xbf16>
      %cst_65 = arith.constant dense<0.000000e+00> : vector<48x192xf32>
      %110 = tpu.matmul %109, %102, %cst_65 {dimension_numbers = #tpu.dot_dimension_numbers<[1], [0], [0], [1], [0, 0, 1, 1], [], []>} : vector<48x128xbf16>, vector<128x192xbf16>, vector<48x192xf32> -> vector<48x192xf32>
      %111 = vector.broadcast %105 : vector<1x192xf32> to vector<48x192xf32>
      %112 = arith.addf %110, %111 : vector<48x192xf32>
      %113 = vector.extract_strided_slice %112 {offsets = [0, 0], sizes = [48, 64], strides = [1, 1]} : vector<48x192xf32> to vector<48x64xf32>
      %114 = vector.extract_strided_slice %112 {offsets = [0, 64], sizes = [48, 64], strides = [1, 1]} : vector<48x192xf32> to vector<48x64xf32>
      %115 = vector.extract_strided_slice %112 {offsets = [0, 128], sizes = [48, 64], strides = [1, 1]} : vector<48x192xf32> to vector<48x64xf32>
      %116 = vector.extract_strided_slice %113 {offsets = [0, 0], sizes = [24, 64], strides = [1, 1]} : vector<48x64xf32> to vector<24x64xf32>
      %117 = vector.extract_strided_slice %114 {offsets = [0, 0], sizes = [24, 64], strides = [1, 1]} : vector<48x64xf32> to vector<24x64xf32>
      %118 = vector.extract_strided_slice %115 {offsets = [0, 0], sizes = [24, 64], strides = [1, 1]} : vector<48x64xf32> to vector<24x64xf32>
      %119 = arith.truncf %116 : vector<24x64xf32> to vector<24x64xbf16>
      %120 = arith.truncf %117 : vector<24x64xf32> to vector<24x64xbf16>
      %cst_66 = arith.constant dense<0.000000e+00> : vector<24x24xf32>
      %121 = tpu.matmul %119, %120, %cst_66 {dimension_numbers = #tpu.dot_dimension_numbers<[1], [1], [0], [0], [0, 0, 1, 0], [], []>} : vector<24x64xbf16>, vector<24x64xbf16>, vector<24x24xf32> -> vector<24x24xf32>
      %cst_67 = arith.constant 1.250000e-01 : f32
      %122 = vector.broadcast %cst_67 : f32 to vector<24x24xf32>
      %123 = arith.mulf %121, %122 : vector<24x24xf32>
      %124 = vector.broadcast %cst_15 : f32 to vector<24x24xf32>
      %125 = arith.select %6, %123, %124 : vector<24x24xi1>, vector<24x24xf32>
      %cst_68 = arith.constant dense<0xFF800000> : vector<24xf32>
      %126 = vector.multi_reduction <maximumf>, %125, %cst_68 [1] : vector<24x24xf32> to vector<24xf32>
      %127 = vector.shape_cast %126 : vector<24xf32> to vector<24x1xf32>
      %128 = vector.broadcast %127 : vector<24x1xf32> to vector<24x24xf32>
      %129 = arith.subf %125, %128 : vector<24x24xf32>
      %130 = math.exp %129 : vector<24x24xf32>
      %cst_69 = arith.constant dense<0.000000e+00> : vector<24xf32>
      %131 = vector.multi_reduction <add>, %130, %cst_69 [1] : vector<24x24xf32> to vector<24xf32>
      %132 = vector.shape_cast %131 : vector<24xf32> to vector<24x1xf32>
      %133 = tpu.reciprocal %132 {approx = true} : vector<24x1xf32> -> vector<24x1xf32>
      %134 = vector.broadcast %133 : vector<24x1xf32> to vector<24x24xf32>
      %135 = arith.mulf %130, %134 : vector<24x24xf32>
      %136 = arith.truncf %135 : vector<24x24xf32> to vector<24x24xbf16>
      %137 = arith.truncf %118 : vector<24x64xf32> to vector<24x64xbf16>
      %cst_70 = arith.constant dense<0.000000e+00> : vector<24x64xf32>
      %138 = tpu.matmul %136, %137, %cst_70 {dimension_numbers = #tpu.dot_dimension_numbers<[1], [0], [0], [1], [0, 0, 1, 1], [], []>} : vector<24x24xbf16>, vector<24x64xbf16>, vector<24x64xf32> -> vector<24x64xf32>
      %c0_71 = arith.constant 0 : index
      %c0_72 = arith.constant 0 : index
      %139 = vector.load %arg18[%c0_71, %c0_72] : memref<48x128xf32, #tpu.memory_space<vmem>>, vector<24x128xf32>
      %140 = arith.truncf %138 : vector<24x64xf32> to vector<24x64xbf16>
      %cst_73 = arith.constant dense<0.000000e+00> : vector<24x128xf32>
      %141 = tpu.matmul %140, %108, %cst_73 {dimension_numbers = #tpu.dot_dimension_numbers<[1], [0], [0], [1], [0, 0, 1, 1], [], []>} : vector<24x64xbf16>, vector<64x128xbf16>, vector<24x128xf32> -> vector<24x128xf32>
      %142 = arith.addf %139, %141 : vector<24x128xf32>
      %c0_74 = arith.constant 0 : index
      %c0_75 = arith.constant 0 : index
      %143 = vector.load %arg18[%c0_74, %c0_75] : memref<48x128xf32, #tpu.memory_space<vmem>>, vector<24x128xf32>
      tpu.vector_store %arg18[%c0_74, %c0_75], %142 {strides = array<i32>} : memref<48x128xf32, #tpu.memory_space<vmem>>, vector<24x128xf32>,
      %144 = vector.extract_strided_slice %113 {offsets = [24, 0], sizes = [24, 64], strides = [1, 1]} : vector<48x64xf32> to vector<24x64xf32>
      %145 = vector.extract_strided_slice %114 {offsets = [24, 0], sizes = [24, 64], strides = [1, 1]} : vector<48x64xf32> to vector<24x64xf32>
      %146 = vector.extract_strided_slice %115 {offsets = [24, 0], sizes = [24, 64], strides = [1, 1]} : vector<48x64xf32> to vector<24x64xf32>
      %147 = arith.truncf %144 : vector<24x64xf32> to vector<24x64xbf16>
      %148 = arith.truncf %145 : vector<24x64xf32> to vector<24x64xbf16>
      %cst_76 = arith.constant dense<0.000000e+00> : vector<24x24xf32>
      %149 = tpu.matmul %147, %148, %cst_76 {dimension_numbers = #tpu.dot_dimension_numbers<[1], [1], [0], [0], [0, 0, 1, 0], [], []>} : vector<24x64xbf16>, vector<24x64xbf16>, vector<24x24xf32> -> vector<24x24xf32>
      %cst_77 = arith.constant 1.250000e-01 : f32
      %150 = vector.broadcast %cst_77 : f32 to vector<24x24xf32>
      %151 = arith.mulf %149, %150 : vector<24x24xf32>
      %152 = vector.broadcast %cst_15 : f32 to vector<24x24xf32>
      %153 = arith.select %6, %151, %152 : vector<24x24xi1>, vector<24x24xf32>
      %cst_78 = arith.constant dense<0xFF800000> : vector<24xf32>
      %154 = vector.multi_reduction <maximumf>, %153, %cst_78 [1] : vector<24x24xf32> to vector<24xf32>
      %155 = vector.shape_cast %154 : vector<24xf32> to vector<24x1xf32>
      %156 = vector.broadcast %155 : vector<24x1xf32> to vector<24x24xf32>
      %157 = arith.subf %153, %156 : vector<24x24xf32>
      %158 = math.exp %157 : vector<24x24xf32>
      %cst_79 = arith.constant dense<0.000000e+00> : vector<24xf32>
      %159 = vector.multi_reduction <add>, %158, %cst_79 [1] : vector<24x24xf32> to vector<24xf32>
      %160 = vector.shape_cast %159 : vector<24xf32> to vector<24x1xf32>
      %161 = tpu.reciprocal %160 {approx = true} : vector<24x1xf32> -> vector<24x1xf32>
      %162 = vector.broadcast %161 : vector<24x1xf32> to vector<24x24xf32>
      %163 = arith.mulf %158, %162 : vector<24x24xf32>
      %164 = arith.truncf %163 : vector<24x24xf32> to vector<24x24xbf16>
      %165 = arith.truncf %146 : vector<24x64xf32> to vector<24x64xbf16>
      %cst_80 = arith.constant dense<0.000000e+00> : vector<24x64xf32>
      %166 = tpu.matmul %164, %165, %cst_80 {dimension_numbers = #tpu.dot_dimension_numbers<[1], [0], [0], [1], [0, 0, 1, 1], [], []>} : vector<24x24xbf16>, vector<24x64xbf16>, vector<24x64xf32> -> vector<24x64xf32>
      %c24 = arith.constant 24 : index
      %c0_81 = arith.constant 0 : index
      %167 = vector.load %arg18[%c24, %c0_81] : memref<48x128xf32, #tpu.memory_space<vmem>>, vector<24x128xf32>
      %168 = arith.truncf %166 : vector<24x64xf32> to vector<24x64xbf16>
      %cst_82 = arith.constant dense<0.000000e+00> : vector<24x128xf32>
      %169 = tpu.matmul %168, %108, %cst_82 {dimension_numbers = #tpu.dot_dimension_numbers<[1], [0], [0], [1], [0, 0, 1, 1], [], []>} : vector<24x64xbf16>, vector<64x128xbf16>, vector<24x128xf32> -> vector<24x128xf32>
      %170 = arith.addf %167, %169 : vector<24x128xf32>
      %c24_83 = arith.constant 24 : index
      %c0_84 = arith.constant 0 : index
      %171 = vector.load %arg18[%c24_83, %c0_84] : memref<48x128xf32, #tpu.memory_space<vmem>>, vector<24x128xf32>
      tpu.vector_store %arg18[%c24_83, %c0_84], %170 {strides = array<i32>} : memref<48x128xf32, #tpu.memory_space<vmem>>, vector<24x128xf32>,
    }
    %c2_i32_17 = arith.constant 2 : i32
    %c0_18 = arith.constant 0 : index
    %c0_19 = arith.constant 0 : index
    %34 = vector.load %arg18[%c0_18, %c0_19] : memref<48x128xf32, #tpu.memory_space<vmem>>, vector<48x128xf32>
    %35 = arith.addf %3, %34 : vector<48x128xf32>
    %c0_20 = arith.constant 0 : index
    %c0_21 = arith.constant 0 : index
    %c0_22 = arith.constant 0 : index
    %36 = vector.load %arg8[%c0_20, %c0_21, %c0_22] : memref<1x1x128xf32, #tpu.memory_space<vmem>>, vector<1x1x128xf32>
    %37 = vector.shape_cast %36 : vector<1x1x128xf32> to vector<1x128xf32>
    %38 = vector.broadcast %37 : vector<1x128xf32> to vector<48x128xf32>
    %39 = arith.addf %35, %38 : vector<48x128xf32>
    %c0_23 = arith.constant 0 : index
    %c0_24 = arith.constant 0 : index
    %c0_25 = arith.constant 0 : index
    %40 = vector.load %arg9[%c0_23, %c0_24, %c0_25] : memref<1x1x128xf32, #tpu.memory_space<vmem>>, vector<1x1x128xf32>
    %41 = vector.shape_cast %40 : vector<1x1x128xf32> to vector<1x128xf32>
    %c0_26 = arith.constant 0 : index
    %c0_27 = arith.constant 0 : index
    %c0_28 = arith.constant 0 : index
    %42 = vector.load %arg10[%c0_26, %c0_27, %c0_28] : memref<1x1x128xf32, #tpu.memory_space<vmem>>, vector<1x1x128xf32>
    %43 = vector.shape_cast %42 : vector<1x1x128xf32> to vector<1x128xf32>
    %cst_29 = arith.constant dense<0.000000e+00> : vector<48xf32>
    %44 = vector.multi_reduction <add>, %39, %cst_29 [1] : vector<48x128xf32> to vector<48xf32>
    %45 = vector.shape_cast %44 : vector<48xf32> to vector<48x1xf32>
    %cst_30 = arith.constant 1.280000e+02 : f32
    %46 = vector.broadcast %cst_30 : f32 to vector<48x1xf32>
    %47 = arith.divf %45, %46 : vector<48x1xf32>
    %48 = vector.broadcast %47 : vector<48x1xf32> to vector<48x128xf32>
    %49 = arith.subf %39, %48 : vector<48x128xf32>
    %50 = arith.mulf %49, %49 : vector<48x128xf32>
    %cst_31 = arith.constant dense<0.000000e+00> : vector<48xf32>
    %51 = vector.multi_reduction <add>, %50, %cst_31 [1] : vector<48x128xf32> to vector<48xf32>
    %52 = vector.shape_cast %51 : vector<48xf32> to vector<48x1xf32>
    %cst_32 = arith.constant 1.280000e+02 : f32
    %53 = vector.broadcast %cst_32 : f32 to vector<48x1xf32>
    %54 = arith.divf %52, %53 : vector<48x1xf32>
    %cst_33 = arith.constant 9.99999997E-7 : f32
    %55 = vector.broadcast %cst_33 : f32 to vector<48x1xf32>
    %56 = arith.addf %54, %55 : vector<48x1xf32>
    %57 = math.rsqrt %56 : vector<48x1xf32>
    %58 = vector.broadcast %57 : vector<48x1xf32> to vector<48x128xf32>
    %59 = arith.mulf %49, %58 : vector<48x128xf32>
    %60 = vector.broadcast %41 : vector<1x128xf32> to vector<48x128xf32>
    %61 = arith.mulf %59, %60 : vector<48x128xf32>
    %62 = vector.broadcast %43 : vector<1x128xf32> to vector<48x128xf32>
    %63 = arith.addf %61, %62 : vector<48x128xf32>
    %c0_34 = arith.constant 0 : index
    %c0_35 = arith.constant 0 : index
    %c0_36 = arith.constant 0 : index
    %64 = vector.load %arg11[%c0_34, %c0_35, %c0_36] : memref<1x128x512xbf16, #tpu.memory_space<vmem>>, vector<1x128x512xbf16>
    %65 = vector.shape_cast %64 : vector<1x128x512xbf16> to vector<128x512xbf16>
    %66 = arith.truncf %63 : vector<48x128xf32> to vector<48x128xbf16>
    %cst_37 = arith.constant dense<0.000000e+00> : vector<48x512xf32>
    %67 = tpu.matmul %66, %65, %cst_37 {dimension_numbers = #tpu.dot_dimension_numbers<[1], [0], [0], [1], [0, 0, 1, 1], [], []>} : vector<48x128xbf16>, vector<128x512xbf16>, vector<48x512xf32> -> vector<48x512xf32>
    %c0_38 = arith.constant 0 : index
    %c0_39 = arith.constant 0 : index
    %c0_40 = arith.constant 0 : index
    %68 = vector.load %arg12[%c0_38, %c0_39, %c0_40] : memref<1x1x512xf32, #tpu.memory_space<vmem>>, vector<1x1x512xf32>
    %69 = vector.shape_cast %68 : vector<1x1x512xf32> to vector<1x512xf32>
    %70 = vector.broadcast %69 : vector<1x512xf32> to vector<48x512xf32>
    %71 = arith.addf %67, %70 : vector<48x512xf32>
    %cst_41 = arith.constant 5.000000e-01 : f32
    %72 = vector.broadcast %cst_41 : f32 to vector<48x512xf32>
    %73 = arith.mulf %72, %71 : vector<48x512xf32>
    %cst_42 = arith.constant 4.471500e-02 : f32
    %74 = vector.broadcast %cst_42 : f32 to vector<48x512xf32>
    %75 = arith.mulf %74, %71 : vector<48x512xf32>
    %76 = arith.mulf %75, %71 : vector<48x512xf32>
    %77 = arith.mulf %76, %71 : vector<48x512xf32>
    %78 = arith.addf %71, %77 : vector<48x512xf32>
    %cst_43 = arith.constant 0.797884583 : f32
    %79 = vector.broadcast %cst_43 : f32 to vector<48x512xf32>
    %80 = arith.mulf %79, %78 : vector<48x512xf32>
    %81 = math.tanh %80 : vector<48x512xf32>
    %cst_44 = arith.constant 1.000000e+00 : f32
    %82 = vector.broadcast %cst_44 : f32 to vector<48x512xf32>
    %83 = arith.addf %82, %81 : vector<48x512xf32>
    %84 = arith.mulf %73, %83 : vector<48x512xf32>
    %c0_45 = arith.constant 0 : index
    %c0_46 = arith.constant 0 : index
    %c0_47 = arith.constant 0 : index
    %85 = vector.load %arg13[%c0_45, %c0_46, %c0_47] : memref<1x512x128xbf16, #tpu.memory_space<vmem>>, vector<1x512x128xbf16>
    %86 = vector.shape_cast %85 : vector<1x512x128xbf16> to vector<512x128xbf16>
    %87 = arith.truncf %84 : vector<48x512xf32> to vector<48x512xbf16>
    %cst_48 = arith.constant dense<0.000000e+00> : vector<48x128xf32>
    %88 = tpu.matmul %87, %86, %cst_48 {dimension_numbers = #tpu.dot_dimension_numbers<[1], [0], [0], [1], [0, 0, 1, 1], [], []>} : vector<48x512xbf16>, vector<512x128xbf16>, vector<48x128xf32> -> vector<48x128xf32>
    %89 = arith.addf %39, %88 : vector<48x128xf32>
    %c0_49 = arith.constant 0 : index
    %c0_50 = arith.constant 0 : index
    %c0_51 = arith.constant 0 : index
    %90 = vector.load %arg14[%c0_49, %c0_50, %c0_51] : memref<1x1x128xf32, #tpu.memory_space<vmem>>, vector<1x1x128xf32>
    %91 = vector.shape_cast %90 : vector<1x1x128xf32> to vector<1x128xf32>
    %92 = vector.broadcast %91 : vector<1x128xf32> to vector<48x128xf32>
    %93 = arith.addf %89, %92 : vector<48x128xf32>
    %c1_i32_52 = arith.constant 1 : i32
    %94 = arith.cmpi eq, %arg1, %c1_i32_52 : i32
    %95 = arith.extui %94 : i1 to i32
    %c0_i32_53 = arith.constant 0 : i32
    %96 = arith.cmpi ne, %95, %c0_i32_53 : i32
    scf.if %96 {
      %c0_56 = arith.constant 0 : index
      %c0_57 = arith.constant 0 : index
      %100 = vector.load %arg15[%c0_56, %c0_57] : memref<1x128xf32, #tpu.memory_space<vmem>>, vector<1x128xf32>
      %c0_58 = arith.constant 0 : index
      %c0_59 = arith.constant 0 : index
      %101 = vector.load %arg16[%c0_58, %c0_59] : memref<1x128xf32, #tpu.memory_space<vmem>>, vector<1x128xf32>
      %cst_60 = arith.constant dense<0.000000e+00> : vector<48xf32>
      %102 = vector.multi_reduction <add>, %93, %cst_60 [1] : vector<48x128xf32> to vector<48xf32>
      %103 = vector.shape_cast %102 : vector<48xf32> to vector<48x1xf32>
      %cst_61 = arith.constant 1.280000e+02 : f32
      %104 = vector.broadcast %cst_61 : f32 to vector<48x1xf32>
      %105 = arith.divf %103, %104 : vector<48x1xf32>
      %106 = vector.broadcast %105 : vector<48x1xf32> to vector<48x128xf32>
      %107 = arith.subf %93, %106 : vector<48x128xf32>
      %108 = arith.mulf %107, %107 : vector<48x128xf32>
      %cst_62 = arith.constant dense<0.000000e+00> : vector<48xf32>
      %109 = vector.multi_reduction <add>, %108, %cst_62 [1] : vector<48x128xf32> to vector<48xf32>
      %110 = vector.shape_cast %109 : vector<48xf32> to vector<48x1xf32>
      %cst_63 = arith.constant 1.280000e+02 : f32
      %111 = vector.broadcast %cst_63 : f32 to vector<48x1xf32>
      %112 = arith.divf %110, %111 : vector<48x1xf32>
      %cst_64 = arith.constant 9.99999997E-7 : f32
      %113 = vector.broadcast %cst_64 : f32 to vector<48x1xf32>
      %114 = arith.addf %112, %113 : vector<48x1xf32>
      %115 = math.rsqrt %114 : vector<48x1xf32>
      %116 = vector.broadcast %115 : vector<48x1xf32> to vector<48x128xf32>
      %117 = arith.mulf %107, %116 : vector<48x128xf32>
      %118 = vector.broadcast %100 : vector<1x128xf32> to vector<48x128xf32>
      %119 = arith.mulf %117, %118 : vector<48x128xf32>
      %120 = vector.broadcast %101 : vector<1x128xf32> to vector<48x128xf32>
      %121 = arith.addf %119, %120 : vector<48x128xf32>
      %c0_65 = arith.constant 0 : index
      %c0_66 = arith.constant 0 : index
      %122 = vector.load %arg17[%c0_65, %c0_66] : memref<48x128xf32, #tpu.memory_space<vmem>>, vector<48x128xf32>
      tpu.vector_store %arg17[%c0_65, %c0_66], %121 {strides = array<i32>} : memref<48x128xf32, #tpu.memory_space<vmem>>, vector<48x128xf32>,
    } else {
    }
    %c1_i32_54 = arith.constant 1 : i32
    %97 = arith.cmpi ne, %arg1, %c1_i32_54 : i32
    %98 = arith.extui %97 : i1 to i32
    %c0_i32_55 = arith.constant 0 : i32
    %99 = arith.cmpi ne, %98, %c0_i32_55 : i32
    scf.if %99 {
      %c0_56 = arith.constant 0 : index
      %c0_57 = arith.constant 0 : index
      %100 = vector.load %arg17[%c0_56, %c0_57] : memref<48x128xf32, #tpu.memory_space<vmem>>, vector<48x128xf32>
      tpu.vector_store %arg17[%c0_56, %c0_57], %93 {strides = array<i32>} : memref<48x128xf32, #tpu.memory_space<vmem>>, vector<48x128xf32>,
    } else {
    }
    return
  }
  func.func @transform_0(%arg0: i32, %arg1: i32) -> (i32, i32) {
    %c0_i32 = arith.constant 0 : i32
    %c0_i32_0 = arith.constant 0 : i32
    return %arg0, %c0_i32 : i32, i32
  }
  func.func @transform_1(%arg0: i32, %arg1: i32) -> (i32, i32, i32) {
    %c0_i32 = arith.constant 0 : i32
    %c0_i32_0 = arith.constant 0 : i32
    %c0_i32_1 = arith.constant 0 : i32
    return %arg1, %c0_i32, %c0_i32_0 : i32, i32, i32
  }
  func.func @transform_2(%arg0: i32, %arg1: i32) -> (i32, i32, i32) {
    %c0_i32 = arith.constant 0 : i32
    %c0_i32_0 = arith.constant 0 : i32
    %c0_i32_1 = arith.constant 0 : i32
    return %arg1, %c0_i32, %c0_i32_0 : i32, i32, i32
  }
  func.func @transform_3(%arg0: i32, %arg1: i32) -> (i32, i32, i32, i32) {
    %c0_i32 = arith.constant 0 : i32
    %c0_i32_0 = arith.constant 0 : i32
    %c0_i32_1 = arith.constant 0 : i32
    %c0_i32_2 = arith.constant 0 : i32
    return %arg1, %c0_i32, %c0_i32_0, %c0_i32_1 : i32, i32, i32, i32
  }
  func.func @transform_4(%arg0: i32, %arg1: i32) -> (i32, i32, i32, i32) {
    %c0_i32 = arith.constant 0 : i32
    %c0_i32_0 = arith.constant 0 : i32
    %c0_i32_1 = arith.constant 0 : i32
    %c0_i32_2 = arith.constant 0 : i32
    return %arg1, %c0_i32, %c0_i32_0, %c0_i32_1 : i32, i32, i32, i32
  }
  func.func @transform_5(%arg0: i32, %arg1: i32) -> (i32, i32, i32, i32) {
    %c0_i32 = arith.constant 0 : i32
    %c0_i32_0 = arith.constant 0 : i32
    %c0_i32_1 = arith.constant 0 : i32
    %c0_i32_2 = arith.constant 0 : i32
    return %arg1, %c0_i32, %c0_i32_0, %c0_i32_1 : i32, i32, i32, i32
  }
  func.func @transform_6(%arg0: i32, %arg1: i32) -> (i32, i32, i32) {
    %c0_i32 = arith.constant 0 : i32
    %c0_i32_0 = arith.constant 0 : i32
    %c0_i32_1 = arith.constant 0 : i32
    return %arg1, %c0_i32, %c0_i32_0 : i32, i32, i32
  }
  func.func @transform_7(%arg0: i32, %arg1: i32) -> (i32, i32, i32) {
    %c0_i32 = arith.constant 0 : i32
    %c0_i32_0 = arith.constant 0 : i32
    %c0_i32_1 = arith.constant 0 : i32
    return %arg1, %c0_i32, %c0_i32_0 : i32, i32, i32
  }
  func.func @transform_8(%arg0: i32, %arg1: i32) -> (i32, i32, i32) {
    %c0_i32 = arith.constant 0 : i32
    %c0_i32_0 = arith.constant 0 : i32
    %c0_i32_1 = arith.constant 0 : i32
    return %arg1, %c0_i32, %c0_i32_0 : i32, i32, i32
  }
  func.func @transform_9(%arg0: i32, %arg1: i32) -> (i32, i32, i32) {
    %c0_i32 = arith.constant 0 : i32
    %c0_i32_0 = arith.constant 0 : i32
    %c0_i32_1 = arith.constant 0 : i32
    return %arg1, %c0_i32, %c0_i32_0 : i32, i32, i32
  }
  func.func @transform_10(%arg0: i32, %arg1: i32) -> (i32, i32, i32) {
    %c0_i32 = arith.constant 0 : i32
    %c0_i32_0 = arith.constant 0 : i32
    %c0_i32_1 = arith.constant 0 : i32
    return %arg1, %c0_i32, %c0_i32_0 : i32, i32, i32
  }
  func.func @transform_11(%arg0: i32, %arg1: i32) -> (i32, i32, i32) {
    %c0_i32 = arith.constant 0 : i32
    %c0_i32_0 = arith.constant 0 : i32
    %c0_i32_1 = arith.constant 0 : i32
    return %arg1, %c0_i32, %c0_i32_0 : i32, i32, i32
  }
  func.func @transform_12(%arg0: i32, %arg1: i32) -> (i32, i32, i32) {
    %c0_i32 = arith.constant 0 : i32
    %c0_i32_0 = arith.constant 0 : i32
    %c0_i32_1 = arith.constant 0 : i32
    return %arg1, %c0_i32, %c0_i32_0 : i32, i32, i32
  }
  func.func @transform_13(%arg0: i32, %arg1: i32) -> (i32, i32) {
    %c0_i32 = arith.constant 0 : i32
    %c0_i32_0 = arith.constant 0 : i32
    %c0_i32_1 = arith.constant 0 : i32
    return %c0_i32, %c0_i32_0 : i32, i32
  }
  func.func @transform_14(%arg0: i32, %arg1: i32) -> (i32, i32) {
    %c0_i32 = arith.constant 0 : i32
    %c0_i32_0 = arith.constant 0 : i32
    %c0_i32_1 = arith.constant 0 : i32
    return %c0_i32, %c0_i32_0 : i32, i32
  }
  func.func @transform_15(%arg0: i32, %arg1: i32) -> (i32, i32) {
    %c0_i32 = arith.constant 0 : i32
    %c0_i32_0 = arith.constant 0 : i32
    return %arg0, %c0_i32 : i32, i32
  }
}

</mosaic_0001>

<llo_original>
// kernel: dino_featurizer_forward.2
$region0: #{dino_featurizer_forward.2}
  #allocation0 [shape = 'u32[]', space=smem, size = 0x4, offset = 0x4, fixed_abs, tag = 'smem constant byte address 0x4 - core index']
  #allocation1 [shape = 'u32[144,128]{1,0:T(1,128)}', space=vmem, size = 0x12000, scoped, tag = 'internal scratch']
  %s0 = inlined_call_operand.vmem [shape: f32[64,192], index: 0, kind: input, shape index: {}]
  %s1 = inlined_call_operand.vmem [shape: bf16[192,128], index: 1, kind: input, shape index: {}]
  %s2 = inlined_call_operand.vmem [shape: f32[1,128], index: 2, kind: input, shape index: {}]
  %s3 = inlined_call_operand.vmem [shape: f32[64,128], index: 3, kind: output, shape index: {}]
  %s4 = sld [smem:[#allocation0]]
  $region45: #{dino_featurizer_forward.2} parent=0
    _
  %s6 = ssub.s32 1, %s4
  %s7 = scalar_select 0, %s6, %s4
  loop: start=0, step=1, limit=6
  $region2: #{dino_featurizer_forward.2} parent=0 // loop_pre_header
    _
  $region3: #{dino_featurizer_forward.2} parent=0 // loop_header
    %s9 = sphi 0, %s13
    %p10 = scmp.ge.s32.totalorder %s9, 6
    %s19 = sphi 0, %s21
    %s22 = sphi 0, %s19
    %s23 = sphi 0, %s22
    %s39 = sphi 0, %s23
    %s43 = sphi 0, %s43
    %s45 = sphi 0, %s43
    %s46 = sphi 0, %s45
    %s60 = sphi 0, %s46
    %s64 = sphi 0, %s64
    %s66 = sphi 0, %s64
    %s67 = sphi 0, %s66
    %s81 = sphi 0, %s67
    %s87 = sphi 0, %s89
    %s90 = sphi 0, %s87
    %s91 = sphi 0, %s90
    %s107 = sphi 0, %s91
  $region4: #{dino_featurizer_forward.2} parent=0 // loop_header_branch
    %12 = sbr.rel (%p10) target = $region8
  $region5: #{dino_featurizer_forward.2} parent=0 // loop_body
    %s14 = ssub.s32 %s9, 1
    %s15 = ssub.s32 %s9, 2
    %s16 = sadd.s32 %s9, 1
    %s17 = ssub.s32 %s9, %s16
    %p18 = scmp.eq.s32.totalorder %s17, 0
    %s20 = sadd.s32 %s19, 1
    %s21 = scalar_select %p18, %s19, %s20
    %p24 = pneg %p18
    %p25 = scmp.eq.s32.totalorder %s9, 3
    %p26 = por %p24, %p25
    %p27 = scmp.ne.s32.totalorder %s19, %s22
    %p28 = scmp.eq.s32.totalorder %s9, 0
    %p29 = por %p27, %p28
    %p30 = scmp.ne.s32.totalorder %s19, %s22
    %p31 = scmp.eq.s32.totalorder %s14, 3
    %p32 = por %p30, %p31
    %p33 = scmp.ne.s32.totalorder %s22, %s23
    %p34 = scmp.eq.s32.totalorder %s14, 0
    %p35 = por %p33, %p34
    %p36 = scmp.ne.s32.totalorder %s22, %s23
    %p37 = scmp.eq.s32.totalorder %s15, 3
    %p38 = por %p36, %p37
    %p40 = scmp.ne.s32.totalorder %s23, %s39
    %p41 = scmp.eq.s32.totalorder %s15, 0
    %p42 = por %p40, %p41
    %s44 = sadd.s32 %s43, 1
    %p47 = scmp.eq.s32.totalorder %s9, 3
    %p48 = scmp.ne.s32.totalorder %s43, %s45
    %p49 = scmp.eq.s32.totalorder %s9, 0
    %p50 = por %p48, %p49
    %p51 = scmp.ne.s32.totalorder %s43, %s45
    %p52 = scmp.eq.s32.totalorder %s14, 3
    %p53 = por %p51, %p52
    %p54 = scmp.ne.s32.totalorder %s45, %s46
    %p55 = scmp.eq.s32.totalorder %s14, 0
    %p56 = por %p54, %p55
    %p57 = scmp.ne.s32.totalorder %s45, %s46
    %p58 = scmp.eq.s32.totalorder %s15, 3
    %p59 = por %p57, %p58
    %p61 = scmp.ne.s32.totalorder %s46, %s60
    %p62 = scmp.eq.s32.totalorder %s15, 0
    %p63 = por %p61, %p62
    %s65 = sadd.s32 %s64, 1
    %p68 = scmp.eq.s32.totalorder %s9, 3
    %p69 = scmp.ne.s32.totalorder %s64, %s66
    %p70 = scmp.eq.s32.totalorder %s9, 0
    %p71 = por %p69, %p70
    %p72 = scmp.ne.s32.totalorder %s64, %s66
    %p73 = scmp.eq.s32.totalorder %s14, 3
    %p74 = por %p72, %p73
    %p75 = scmp.ne.s32.totalorder %s66, %s67
    %p76 = scmp.eq.s32.totalorder %s14, 0
    %p77 = por %p75, %p76
    %p78 = scmp.ne.s32.totalorder %s66, %s67
    %p79 = scmp.eq.s32.totalorder %s15, 3
    %p80 = por %p78, %p79
    %p82 = scmp.ne.s32.totalorder %s67, %s81
    %p83 = scmp.eq.s32.totalorder %s15, 0
    %p84 = por %p82, %p83
    %s85 = ssub.s32 %s9, %s16
    %p86 = scmp.eq.s32.totalorder %s85, 0
    %s88 = sadd.s32 %s87, 1
    %s89 = scalar_select %p86, %s87, %s88
    %p92 = pneg %p86
    %p93 = scmp.eq.s32.totalorder %s9, 3
    %p94 = por %p92, %p93
    %p95 = scmp.ne.s32.totalorder %s87, %s90
    %p96 = scmp.eq.s32.totalorder %s9, 0
    %p97 = por %p95, %p96
    %p98 = scmp.ne.s32.totalorder %s87, %s90
    %p99 = scmp.eq.s32.totalorder %s14, 3
    %p100 = por %p98, %p99
    %p101 = scmp.ne.s32.totalorder %s90, %s91
    %p102 = scmp.eq.s32.totalorder %s14, 0
    %p103 = por %p101, %p102
    %p104 = scmp.ne.s32.totalorder %s90, %s91
    %p105 = scmp.eq.s32.totalorder %s15, 3
    %p106 = por %p104, %p105
    %p108 = scmp.ne.s32.totalorder %s91, %s107
    %p109 = scmp.eq.s32.totalorder %s15, 0
    %p110 = por %p108, %p109
    %p111 = scmp.le.s32.totalorder 1, %s9
    %p112 = scmp.lt.s32.totalorder %s9, 5
    %p113 = pnand %p111, %p112
    %p114 = pneg %p113
    // Predicated region
    $region9: #{dino_featurizer_forward.2} parent=5 // pred_check
      _
    $region10: #{dino_featurizer_forward.2} parent=5 // pred_check_branch
      %116 = sbr.rel (%p113) target = $region12
    $region11: #{dino_featurizer_forward.2} parent=5 // pred_region
      %s117 = ssub.s32 %s9, 1
      // Predicated region
      $region13: #{dino_featurizer_forward.2} parent=11 // pred_check
        %p118 = pneg %p56
      $region14: #{dino_featurizer_forward.2} parent=11 // pred_check_branch
        %120 = sbr.rel (%p118) target = $region16
      $region15: #{dino_featurizer_forward.2} parent=11 // pred_region
        _
      $region16: #{dino_featurizer_forward.2} parent=11 // pred_fallthru
        _
      // Predicated region
      $region17: #{dino_featurizer_forward.2} parent=11 // pred_check
        %p121 = pneg %p77
      $region18: #{dino_featurizer_forward.2} parent=11 // pred_check_branch
        %123 = sbr.rel (%p121) target = $region20
      $region19: #{dino_featurizer_forward.2} parent=11 // pred_region
        _
      $region20: #{dino_featurizer_forward.2} parent=11 // pred_fallthru
        _
    $region12: #{dino_featurizer_forward.2} parent=5 // pred_fallthru
      _
    %p124 = scmp.lt.s32.totalorder %s9, 4
    // Predicated region
    $region21: #{dino_featurizer_forward.2} parent=5 // pred_check
      %p125 = pneg %p124
    $region22: #{dino_featurizer_forward.2} parent=5 // pred_check_branch
      %127 = sbr.rel (%p125) target = $region24
    $region23: #{dino_featurizer_forward.2} parent=5 // pred_region
      // Predicated region
      $region25: #{dino_featurizer_forward.2} parent=23 // pred_check
        %p128 = pneg %p29
      $region26: #{dino_featurizer_forward.2} parent=23 // pred_check_branch
        %130 = sbr.rel (%p128) target = $region28
      $region27: #{dino_featurizer_forward.2} parent=23 // pred_region
        %s131 = smul.u32 2, %s9
        %p132 = scmp.lt.s32.totalorder %s131, 7
        %s133 = scalar_select %p132, %s131, 7
        %s134 = smul.addr %s133, 2
        %s135 = smul.addr %s134, 8
        %s136 = scalar_lea.vmem %s0, %s135
        %s137 = smul.u32 2, %s9
      $region28: #{dino_featurizer_forward.2} parent=23 // pred_fallthru
        _
    $region24: #{dino_featurizer_forward.2} parent=5 // pred_fallthru
      _
    %p138 = scmp.le.s32.totalorder 1, %s9
    %p139 = scmp.lt.s32.totalorder %s9, 5
    %p140 = pnand %p138, %p139
    %p141 = pneg %p140
    // Predicated region
    $region29: #{dino_featurizer_forward.2} parent=5 // pred_check
      _
    $region30: #{dino_featurizer_forward.2} parent=5 // pred_check_branch
      %143 = sbr.rel (%p140) target = $region32
    $region31: #{dino_featurizer_forward.2} parent=5 // pred_region
      %s144 = ssub.s32 %s9, 1
      %s145 = smul.u32 2, %s14
      %p146 = scmp.lt.s32.totalorder %s145, 7
      %s147 = scalar_select %p146, %s145, 7
      %s148 = smul.addr %s147, 2
      %s149 = smul.addr %s148, 8
      %s150 = scalar_lea.vmem %s0, %s149
      %p151 = pneg %p35
      %p152 = pneg %p32
      %p153 = pneg %p56
      %p154 = pneg %p53
      %p155 = pneg %p77
      %p156 = pneg %p74
      %p157 = pneg %p103
      %p158 = pneg %p100
      %s159 = smul.u32 2, %s14
      %p160 = scmp.lt.s32.totalorder %s159, 7
      %s161 = scalar_select %p160, %s159, 7
      %s162 = smul.addr %s161, 8
      %s163 = scalar_lea.vmem %s3, %s162
      %s164 = smul.u32 2, %s14
      %p165 = scmp.lt.s32.totalorder %s164, 7
      %s166 = scalar_select %p165, %s164, 7
      %s167 = smul.addr %s166, 2
      %s168 = smul.addr %s167, 8
      %s169 = scalar_lea.vmem %s0, %s168
      %s170 = smul.u32 2, %s14
      %s171 = smul.u32 2, %s14
      %p172 = scmp.lt.s32.totalorder %s171, 7
      %s173 = scalar_select %p172, %s171, 7
      %s174 = smul.addr %s173, 8
      %s175 = scalar_lea.vmem %s3, %s174
      %s176 = smul.u32 2, %s14
      %v178 = vld [vmem:[%s169] sm:$0xff]
      %v179 = vld [vmem:[%s169 + $0x8] sm:$0xff]
      %v180 = vld [vmem:[%s169 + $0x10] sm:$0xff]
      %v181 = vld [vmem:[%s169 + $0x18] sm:$0xff]
      %v182 = vpack.c.bf16 %v180, %v178
      %v183 = vpack.c.bf16 %v181, %v179
      %v184 = vld [vmem:[%s1] sm:$0xf]
      %v185 = vld [vmem:[%s1 + $0x4] sm:$0xf]
      %v186 = vld [vmem:[%s1 + $0x8] sm:$0xf]
      %v187 = vld [vmem:[%s1 + $0xc] sm:$0xf]
      %v188 = vld [vmem:[%s1 + $0x10] sm:$0xf]
      %v189 = vld [vmem:[%s1 + $0x14] sm:$0xf]
      %v190 = vld [vmem:[%s1 + $0x18] sm:$0xf]
      %v191 = vld [vmem:[%s1 + $0x1c] sm:$0xf]
      %v192 = vld [vmem:[%s1 + $0x20] sm:$0xf]
      %v193 = vld [vmem:[%s1 + $0x24] sm:$0xf]
      %v194 = vld [vmem:[%s1 + $0x28] sm:$0xf]
      %v195 = vld [vmem:[%s1 + $0x2c] sm:$0xf]
      %v196 = vld [vmem:[%s1 + $0x30] sm:$0xf]
      %v197 = vld [vmem:[%s1 + $0x34] sm:$0xf]
      %v198 = vld [vmem:[%s1 + $0x38] sm:$0xf]
      %v199 = vld [vmem:[%s1 + $0x3c] sm:$0xf]
      %v200 = vld [vmem:[%s1 + $0x40] sm:$0xf]
      %v201 = vld [vmem:[%s1 + $0x44] sm:$0xf]
      %v202 = vld [vmem:[%s1 + $0x48] sm:$0xf]
      %v203 = vld [vmem:[%s1 + $0x4c] sm:$0xf]
      %v204 = vld [vmem:[%s1 + $0x50] sm:$0xf]
      %v205 = vld [vmem:[%s1 + $0x54] sm:$0xf]
      %v206 = vld [vmem:[%s1 + $0x58] sm:$0xf]
      %v207 = vld [vmem:[%s1 + $0x5c] sm:$0xf]
      %v208 = vld [vmem:[%s2] sm:$0x1]
      %v210 = vlaneseq
      %v211 = vshrl.u32 %v210, 7
      %v212 = vsub.s32 0, %v211
      %v213 = vrot.slane %v208, %v212
      %v239 = vunpack.c.l.b16 %v184
      %v240 = vunpack.c.l.b16 %v185
      %v241 = vunpack.c.l.b16 %v186
      %v242 = vunpack.c.l.b16 %v187
      %v243 = vunpack.c.l.b16 %v188
      %v244 = vunpack.c.l.b16 %v189
      %v245 = vunpack.c.l.b16 %v190
      %v246 = vunpack.c.l.b16 %v191
      %v247 = vunpack.c.l.b16 %v192
      %v248 = vunpack.c.l.b16 %v193
      %v249 = vunpack.c.l.b16 %v194
      %v250 = vunpack.c.l.b16 %v195
      %v251 = vunpack.c.l.b16 %v196
      %v252 = vunpack.c.l.b16 %v197
      %v253 = vunpack.c.l.b16 %v198
      %v254 = vunpack.c.l.b16 %v199
      %v255 = vunpack.c.l.b16 %v200
      %v256 = vunpack.c.l.b16 %v201
      %v257 = vunpack.c.l.b16 %v202
      %v258 = vunpack.c.l.b16 %v203
      %v259 = vunpack.c.l.b16 %v204
      %v260 = vunpack.c.l.b16 %v205
      %v261 = vunpack.c.l.b16 %v206
      %v262 = vunpack.c.l.b16 %v207
      %v263 = vpack.c.b16 %v240, %v239
      %v264 = vpack.c.b16 %v242, %v241
      %v265 = vpack.c.b16 %v244, %v243
      %v266 = vpack.c.b16 %v246, %v245
      %v267 = vpack.c.b16 %v248, %v247
      %v268 = vpack.c.b16 %v250, %v249
      %v269 = vpack.c.b16 %v252, %v251
      %v270 = vpack.c.b16 %v254, %v253
      %v271 = vpack.c.b16 %v256, %v255
      %v272 = vpack.c.b16 %v258, %v257
      %v273 = vpack.c.b16 %v260, %v259
      %v274 = vpack.c.b16 %v262, %v261
      %vm287 = vcmask 523264
      %v289 = vsel %vm287, %v183, 0
      %291 = vmatprep.subr.bf16.mxu0 0
      %292 = vmatpush1.bf16.msra.mxu0 %v263
      %293 = vmatprep.subr.bf16.mxu0 0
      %294 = vmatpush1.bf16.msra.mxu0 %v264
      %295 = vmatprep.subr.bf16.mxu0 0
      %296 = vmatpush1.bf16.msra.mxu0 %v265
      %297 = vmatprep.subr.bf16.mxu0 0
      %298 = vmatpush1.bf16.msra.mxu0 %v266
      %299 = vmatprep.subr.bf16.mxu0 0
      %300 = vmatpush1.bf16.msra.mxu0 %v267
      %301 = vmatprep.subr.bf16.mxu0 0
      %302 = vmatpush1.bf16.msra.mxu0 %v268
      %303 = vmatprep.subr.bf16.mxu0 0
      %304 = vmatpush1.bf16.msra.mxu0 %v269
      %305 = vmatprep.subr.bf16.mxu0 0
      %306 = vmatpush1.bf16.msra.mxu0 %v270
      %307 = vmatprep.subr.bf16.mxu0 0
      %308 = vmatpush1.bf16.msra.mxu0 %v271
      %309 = vmatprep.subr.bf16.mxu0 0
      %310 = vmatpush1.bf16.msra.mxu0 %v272
      %311 = vmatprep.subr.bf16.mxu0 0
      %312 = vmatpush1.bf16.msra.mxu0 %v273
      %313 = vmatprep.subr.bf16.mxu0 0
      %314 = vmatpush1.bf16.msra.mxu0 %v274
      %315 = vmatprep.subr.bf16.mxu0 0
      %316 = vmatpush1.bf16.msra.mxu0 0
      %317 = vmatprep.subr.bf16.mxu0 0
      %318 = vmatpush1.bf16.msra.mxu0 0
      %319 = vmatprep.subr.bf16.mxu0 0
      %320 = vmatpush1.bf16.msra.mxu0 0
      %321 = vmatprep.subr.bf16.mxu0 0
      %322 = vmatpush1.bf16.msra.mxu0 0
      %323 = vmatprep.mubr.bf16.mxu0 %v289
      %324 = vmatmul.mubr.bf16.gmra.mrb[0].mxu0 %v182
      %v325 = vpop.f32.mrb[0].mxu0
      %v326 = vadd.f32 %v213, %v325
      %v327 = vpop.f32.mrb[0].mxu0
      %v328 = vpop.f32.mrb[0].mxu0
      %v329 = vadd.f32 %v213, %v328
      %v330 = vpop.f32.mrb[0].mxu0
      %331 = vdwg.mxu0
      %332 = vst [vmem:[%s175] sm:$0xff] %v326
      %333 = vst [vmem:[%s175 + $0x8] sm:$0xff] %v329
      %s334 = smul.u32 2, %s14
      %p335 = scmp.lt.s32.totalorder %s334, 7
      %s336 = scalar_select %p335, %s334, 7
      %s337 = smul.addr %s336, 8
      %s338 = scalar_lea.vmem %s3, %s337
      // Predicated region
      $region33: #{dino_featurizer_forward.2} parent=31 // pred_check
        %p339 = pneg %p100
      $region34: #{dino_featurizer_forward.2} parent=31 // pred_check_branch
        %341 = sbr.rel (%p339) target = $region36
      $region35: #{dino_featurizer_forward.2} parent=31 // pred_region
        %s342 = smul.u32 2, %s14
      $region36: #{dino_featurizer_forward.2} parent=31 // pred_fallthru
        _
    $region32: #{dino_featurizer_forward.2} parent=5 // pred_fallthru
      _
    %p343 = scmp.le.s32.totalorder 2, %s9
    // Predicated region
    $region37: #{dino_featurizer_forward.2} parent=5 // pred_check
      %p344 = pneg %p343
    $region38: #{dino_featurizer_forward.2} parent=5 // pred_check_branch
      %346 = sbr.rel (%p344) target = $region40
    $region39: #{dino_featurizer_forward.2} parent=5 // pred_region
      %s347 = ssub.s32 %s9, 2
      // Predicated region
      $region41: #{dino_featurizer_forward.2} parent=39 // pred_check
        %p348 = pneg %p106
      $region42: #{dino_featurizer_forward.2} parent=39 // pred_check_branch
        %350 = sbr.rel (%p348) target = $region44
      $region43: #{dino_featurizer_forward.2} parent=39 // pred_region
        %s351 = smul.u32 2, %s15
        %p352 = scmp.lt.s32.totalorder %s351, 7
        %s353 = scalar_select %p352, %s351, 7
        %s354 = smul.addr %s353, 8
        %s355 = scalar_lea.vmem %s3, %s354
      $region44: #{dino_featurizer_forward.2} parent=39 // pred_fallthru
        _
    $region40: #{dino_featurizer_forward.2} parent=5 // pred_fallthru
      _
  $region6: #{dino_featurizer_forward.2} parent=0 // loop_footer
    %s13 = sadd.s32 1, %s9
  $region7: #{dino_featurizer_forward.2} parent=0 // loop_footer_branch
    %8 = sbr.rel target = $region3
  $region8: #{dino_featurizer_forward.2} parent=0 // loop_exit
    _

// kernel: dino_featurizer_forward.3
$region0: #{dino_featurizer_forward.3}
  #allocation0 [shape = 'u32[]', space=smem, size = 0x4, offset = 0x4, fixed_abs, tag = 'smem constant byte address 0x4 - core index']
  #allocation1 [shape = 'u32[144,128]{1,0:T(1,128)}', space=vmem, size = 0x12000, scoped, tag = 'internal scratch']
  #allocation2 [shape = 'f32[48,128]{1,0:T(8,128)}', space=vmem, size = 0x6000, scoped, tag = 'scratch operand']
  %s0 = inlined_call_operand.vmem [shape: f32[96,128], index: 0, kind: input, shape index: {}]
  %s1 = inlined_call_operand.vmem [shape: f32[2,1,128], index: 1, kind: input, shape index: {}]
  %s2 = inlined_call_operand.vmem [shape: f32[2,1,128], index: 2, kind: input, shape index: {}]
  %s3 = inlined_call_operand.vmem [shape: bf16[2,2,128,192], index: 3, kind: input, shape index: {}]
  %s4 = inlined_call_operand.vmem [shape: f32[2,2,1,192], index: 4, kind: input, shape index: {}]
  %s5 = inlined_call_operand.vmem [shape: bf16[2,2,64,128], index: 5, kind: input, shape index: {}]
  %s6 = inlined_call_operand.vmem [shape: f32[2,1,128], index: 6, kind: input, shape index: {}]
  %s7 = inlined_call_operand.vmem [shape: f32[2,1,128], index: 7, kind: input, shape index: {}]
  %s8 = inlined_call_operand.vmem [shape: f32[2,1,128], index: 8, kind: input, shape index: {}]
  %s9 = inlined_call_operand.vmem [shape: bf16[2,128,512], index: 9, kind: input, shape index: {}]
  %s10 = inlined_call_operand.vmem [shape: f32[2,1,512], index: 10, kind: input, shape index: {}]
  %s11 = inlined_call_operand.vmem [shape: bf16[2,512,128], index: 11, kind: input, shape index: {}]
  %s12 = inlined_call_operand.vmem [shape: f32[2,1,128], index: 12, kind: input, shape index: {}]
  %s13 = inlined_call_operand.vmem [shape: f32[1,128], index: 13, kind: input, shape index: {}]
  %s14 = inlined_call_operand.vmem [shape: f32[1,128], index: 14, kind: input, shape index: {}]
  %s15 = inlined_call_operand.vmem [shape: f32[96,128], index: 15, kind: output, shape index: {}]
  %s16 = sld [smem:[#allocation0]]
  $region112: #{dino_featurizer_forward.3} parent=0
    _
  %s18 = ssub.s32 1, %s16
  %s19 = scalar_select 0, %s18, %s16
  loop: start=0, step=1, limit=6
  $region2: #{dino_featurizer_forward.3} parent=0 // loop_pre_header
    _
  $region3: #{dino_featurizer_forward.3} parent=0 // loop_header
    %s21 = sphi 0, %s25
    %p22 = scmp.ge.s32.totalorder %s21, 6
    %s28 = sphi 0, %s40
    %s29 = sphi 0, %s36
    %s30 = sphi 0, %s28
    %s31 = sphi 0, %s29
    %s32 = sphi 0, %s30
    %s33 = sphi 0, %s31
    %s43 = sphi 0, %s45
    %s46 = sphi 0, %s43
    %s47 = sphi 0, %s46
    %s63 = sphi 0, %s47
    %s69 = sphi 0, %s71
    %s72 = sphi 0, %s69
    %s73 = sphi 0, %s72
    %s89 = sphi 0, %s73
    %s95 = sphi 0, %s97
    %s98 = sphi 0, %s95
    %s99 = sphi 0, %s98
    %s115 = sphi 0, %s99
    %s121 = sphi 0, %s123
    %s124 = sphi 0, %s121
    %s125 = sphi 0, %s124
    %s141 = sphi 0, %s125
    %s147 = sphi 0, %s149
    %s150 = sphi 0, %s147
    %s151 = sphi 0, %s150
    %s167 = sphi 0, %s151
    %s173 = sphi 0, %s175
    %s176 = sphi 0, %s173
    %s177 = sphi 0, %s176
    %s193 = sphi 0, %s177
    %s199 = sphi 0, %s201
    %s202 = sphi 0, %s199
    %s203 = sphi 0, %s202
    %s219 = sphi 0, %s203
    %s225 = sphi 0, %s227
    %s228 = sphi 0, %s225
    %s229 = sphi 0, %s228
    %s245 = sphi 0, %s229
    %s251 = sphi 0, %s253
    %s254 = sphi 0, %s251
    %s255 = sphi 0, %s254
    %s271 = sphi 0, %s255
    %s277 = sphi 0, %s279
    %s280 = sphi 0, %s277
    %s281 = sphi 0, %s280
    %s297 = sphi 0, %s281
    %s303 = sphi 0, %s305
    %s306 = sphi 0, %s303
    %s307 = sphi 0, %s306
    %s323 = sphi 0, %s307
    %s329 = sphi 0, %s331
    %s332 = sphi 0, %s329
    %s333 = sphi 0, %s332
    %s349 = sphi 0, %s333
    %s355 = sphi 0, %s357
    %s358 = sphi 0, %s355
    %s359 = sphi 0, %s358
    %s375 = sphi 0, %s359
    %s379 = sphi 0, %s379
    %s381 = sphi 0, %s379
    %s382 = sphi 0, %s381
    %s396 = sphi 0, %s382
    %s400 = sphi 0, %s400
    %s402 = sphi 0, %s400
    %s403 = sphi 0, %s402
    %s417 = sphi 0, %s403
    %s423 = sphi 0, %s425
    %s426 = sphi 0, %s423
    %s427 = sphi 0, %s426
    %s443 = sphi 0, %s427
  $region4: #{dino_featurizer_forward.3} parent=0 // loop_header_branch
    %24 = sbr.rel (%p22) target = $region8
  $region5: #{dino_featurizer_forward.3} parent=0 // loop_body
    %s26 = ssub.s32 %s21, 1
    %s27 = ssub.s32 %s21, 2
    %s34 = sadd.s32 1, %s29
    %p35 = scmp.ge.s32.totalorder %s34, 2
    %s36 = scalar_select %p35, 0, %s34
    %s37 = sadd.s32 1, %s28
    %s38 = scalar_select %p35, %s37, %s28
    %p39 = scmp.ge.s32.totalorder %s38, 2
    %s40 = scalar_select %p39, 0, %s38
    %s41 = ssub.s32 %s28, %s40
    %p42 = scmp.eq.s32.totalorder %s41, 0
    %s44 = sadd.s32 %s43, 1
    %s45 = scalar_select %p42, %s43, %s44
    %p48 = pneg %p42
    %p49 = scmp.eq.s32.totalorder %s21, 3
    %p50 = por %p48, %p49
    %p51 = scmp.ne.s32.totalorder %s43, %s46
    %p52 = scmp.eq.s32.totalorder %s21, 0
    %p53 = por %p51, %p52
    %p54 = scmp.ne.s32.totalorder %s43, %s46
    %p55 = scmp.eq.s32.totalorder %s26, 3
    %p56 = por %p54, %p55
    %p57 = scmp.ne.s32.totalorder %s46, %s47
    %p58 = scmp.eq.s32.totalorder %s26, 0
    %p59 = por %p57, %p58
    %p60 = scmp.ne.s32.totalorder %s46, %s47
    %p61 = scmp.eq.s32.totalorder %s27, 3
    %p62 = por %p60, %p61
    %p64 = scmp.ne.s32.totalorder %s47, %s63
    %p65 = scmp.eq.s32.totalorder %s27, 0
    %p66 = por %p64, %p65
    %s67 = ssub.s32 %s29, %s36
    %p68 = scmp.eq.s32.totalorder %s67, 0
    %s70 = sadd.s32 %s69, 1
    %s71 = scalar_select %p68, %s69, %s70
    %p74 = pneg %p68
    %p75 = scmp.eq.s32.totalorder %s21, 3
    %p76 = por %p74, %p75
    %p77 = scmp.ne.s32.totalorder %s69, %s72
    %p78 = scmp.eq.s32.totalorder %s21, 0
    %p79 = por %p77, %p78
    %p80 = scmp.ne.s32.totalorder %s69, %s72
    %p81 = scmp.eq.s32.totalorder %s26, 3
    %p82 = por %p80, %p81
    %p83 = scmp.ne.s32.totalorder %s72, %s73
    %p84 = scmp.eq.s32.totalorder %s26, 0
    %p85 = por %p83, %p84
    %p86 = scmp.ne.s32.totalorder %s72, %s73
    %p87 = scmp.eq.s32.totalorder %s27, 3
    %p88 = por %p86, %p87
    %p90 = scmp.ne.s32.totalorder %s73, %s89
    %p91 = scmp.eq.s32.totalorder %s27, 0
    %p92 = por %p90, %p91
    %s93 = ssub.s32 %s29, %s36
    %p94 = scmp.eq.s32.totalorder %s93, 0
    %s96 = sadd.s32 %s95, 1
    %s97 = scalar_select %p94, %s95, %s96
    %p100 = pneg %p94
    %p101 = scmp.eq.s32.totalorder %s21, 3
    %p102 = por %p100, %p101
    %p103 = scmp.ne.s32.totalorder %s95, %s98
    %p104 = scmp.eq.s32.totalorder %s21, 0
    %p105 = por %p103, %p104
    %p106 = scmp.ne.s32.totalorder %s95, %s98
    %p107 = scmp.eq.s32.totalorder %s26, 3
    %p108 = por %p106, %p107
    %p109 = scmp.ne.s32.totalorder %s98, %s99
    %p110 = scmp.eq.s32.totalorder %s26, 0
    %p111 = por %p109, %p110
    %p112 = scmp.ne.s32.totalorder %s98, %s99
    %p113 = scmp.eq.s32.totalorder %s27, 3
    %p114 = por %p112, %p113
    %p116 = scmp.ne.s32.totalorder %s99, %s115
    %p117 = scmp.eq.s32.totalorder %s27, 0
    %p118 = por %p116, %p117
    %s119 = ssub.s32 %s29, %s36
    %p120 = scmp.eq.s32.totalorder %s119, 0
    %s122 = sadd.s32 %s121, 1
    %s123 = scalar_select %p120, %s121, %s122
    %p126 = pneg %p120
    %p127 = scmp.eq.s32.totalorder %s21, 3
    %p128 = por %p126, %p127
    %p129 = scmp.ne.s32.totalorder %s121, %s124
    %p130 = scmp.eq.s32.totalorder %s21, 0
    %p131 = por %p129, %p130
    %p132 = scmp.ne.s32.totalorder %s121, %s124
    %p133 = scmp.eq.s32.totalorder %s26, 3
    %p134 = por %p132, %p133
    %p135 = scmp.ne.s32.totalorder %s124, %s125
    %p136 = scmp.eq.s32.totalorder %s26, 0
    %p137 = por %p135, %p136
    %p138 = scmp.ne.s32.totalorder %s124, %s125
    %p139 = scmp.eq.s32.totalorder %s27, 3
    %p140 = por %p138, %p139
    %p142 = scmp.ne.s32.totalorder %s125, %s141
    %p143 = scmp.eq.s32.totalorder %s27, 0
    %p144 = por %p142, %p143
    %s145 = ssub.s32 %s29, %s36
    %p146 = scmp.eq.s32.totalorder %s145, 0
    %s148 = sadd.s32 %s147, 1
    %s149 = scalar_select %p146, %s147, %s148
    %p152 = pneg %p146
    %p153 = scmp.eq.s32.totalorder %s21, 3
    %p154 = por %p152, %p153
    %p155 = scmp.ne.s32.totalorder %s147, %s150
    %p156 = scmp.eq.s32.totalorder %s21, 0
    %p157 = por %p155, %p156
    %p158 = scmp.ne.s32.totalorder %s147, %s150
    %p159 = scmp.eq.s32.totalorder %s26, 3
    %p160 = por %p158, %p159
    %p161 = scmp.ne.s32.totalorder %s150, %s151
    %p162 = scmp.eq.s32.totalorder %s26, 0
    %p163 = por %p161, %p162
    %p164 = scmp.ne.s32.totalorder %s150, %s151
    %p165 = scmp.eq.s32.totalorder %s27, 3
    %p166 = por %p164, %p165
    %p168 = scmp.ne.s32.totalorder %s151, %s167
    %p169 = scmp.eq.s32.totalorder %s27, 0
    %p170 = por %p168, %p169
    %s171 = ssub.s32 %s29, %s36
    %p172 = scmp.eq.s32.totalorder %s171, 0
    %s174 = sadd.s32 %s173, 1
    %s175 = scalar_select %p172, %s173, %s174
    %p178 = pneg %p172
    %p179 = scmp.eq.s32.totalorder %s21, 3
    %p180 = por %p178, %p179
    %p181 = scmp.ne.s32.totalorder %s173, %s176
    %p182 = scmp.eq.s32.totalorder %s21, 0
    %p183 = por %p181, %p182
    %p184 = scmp.ne.s32.totalorder %s173, %s176
    %p185 = scmp.eq.s32.totalorder %s26, 3
    %p186 = por %p184, %p185
    %p187 = scmp.ne.s32.totalorder %s176, %s177
    %p188 = scmp.eq.s32.totalorder %s26, 0
    %p189 = por %p187, %p188
    %p190 = scmp.ne.s32.totalorder %s176, %s177
    %p191 = scmp.eq.s32.totalorder %s27, 3
    %p192 = por %p190, %p191
    %p194 = scmp.ne.s32.totalorder %s177, %s193
    %p195 = scmp.eq.s32.totalorder %s27, 0
    %p196 = por %p194, %p195
    %s197 = ssub.s32 %s29, %s36
    %p198 = scmp.eq.s32.totalorder %s197, 0
    %s200 = sadd.s32 %s199, 1
    %s201 = scalar_select %p198, %s199, %s200
    %p204 = pneg %p198
    %p205 = scmp.eq.s32.totalorder %s21, 3
    %p206 = por %p204, %p205
    %p207 = scmp.ne.s32.totalorder %s199, %s202
    %p208 = scmp.eq.s32.totalorder %s21, 0
    %p209 = por %p207, %p208
    %p210 = scmp.ne.s32.totalorder %s199, %s202
    %p211 = scmp.eq.s32.totalorder %s26, 3
    %p212 = por %p210, %p211
    %p213 = scmp.ne.s32.totalorder %s202, %s203
    %p214 = scmp.eq.s32.totalorder %s26, 0
    %p215 = por %p213, %p214
    %p216 = scmp.ne.s32.totalorder %s202, %s203
    %p217 = scmp.eq.s32.totalorder %s27, 3
    %p218 = por %p216, %p217
    %p220 = scmp.ne.s32.totalorder %s203, %s219
    %p221 = scmp.eq.s32.totalorder %s27, 0
    %p222 = por %p220, %p221
    %s223 = ssub.s32 %s29, %s36
    %p224 = scmp.eq.s32.totalorder %s223, 0
    %s226 = sadd.s32 %s225, 1
    %s227 = scalar_select %p224, %s225, %s226
    %p230 = pneg %p224
    %p231 = scmp.eq.s32.totalorder %s21, 3
    %p232 = por %p230, %p231
    %p233 = scmp.ne.s32.totalorder %s225, %s228
    %p234 = scmp.eq.s32.totalorder %s21, 0
    %p235 = por %p233, %p234
    %p236 = scmp.ne.s32.totalorder %s225, %s228
    %p237 = scmp.eq.s32.totalorder %s26, 3
    %p238 = por %p236, %p237
    %p239 = scmp.ne.s32.totalorder %s228, %s229
    %p240 = scmp.eq.s32.totalorder %s26, 0
    %p241 = por %p239, %p240
    %p242 = scmp.ne.s32.totalorder %s228, %s229
    %p243 = scmp.eq.s32.totalorder %s27, 3
    %p244 = por %p242, %p243
    %p246 = scmp.ne.s32.totalorder %s229, %s245
    %p247 = scmp.eq.s32.totalorder %s27, 0
    %p248 = por %p246, %p247
    %s249 = ssub.s32 %s29, %s36
    %p250 = scmp.eq.s32.totalorder %s249, 0
    %s252 = sadd.s32 %s251, 1
    %s253 = scalar_select %p250, %s251, %s252
    %p256 = pneg %p250
    %p257 = scmp.eq.s32.totalorder %s21, 3
    %p258 = por %p256, %p257
    %p259 = scmp.ne.s32.totalorder %s251, %s254
    %p260 = scmp.eq.s32.totalorder %s21, 0
    %p261 = por %p259, %p260
    %p262 = scmp.ne.s32.totalorder %s251, %s254
    %p263 = scmp.eq.s32.totalorder %s26, 3
    %p264 = por %p262, %p263
    %p265 = scmp.ne.s32.totalorder %s254, %s255
    %p266 = scmp.eq.s32.totalorder %s26, 0
    %p267 = por %p265, %p266
    %p268 = scmp.ne.s32.totalorder %s254, %s255
    %p269 = scmp.eq.s32.totalorder %s27, 3
    %p270 = por %p268, %p269
    %p272 = scmp.ne.s32.totalorder %s255, %s271
    %p273 = scmp.eq.s32.totalorder %s27, 0
    %p274 = por %p272, %p273
    %s275 = ssub.s32 %s29, %s36
    %p276 = scmp.eq.s32.totalorder %s275, 0
    %s278 = sadd.s32 %s277, 1
    %s279 = scalar_select %p276, %s277, %s278
    %p282 = pneg %p276
    %p283 = scmp.eq.s32.totalorder %s21, 3
    %p284 = por %p282, %p283
    %p285 = scmp.ne.s32.totalorder %s277, %s280
    %p286 = scmp.eq.s32.totalorder %s21, 0
    %p287 = por %p285, %p286
    %p288 = scmp.ne.s32.totalorder %s277, %s280
    %p289 = scmp.eq.s32.totalorder %s26, 3
    %p290 = por %p288, %p289
    %p291 = scmp.ne.s32.totalorder %s280, %s281
    %p292 = scmp.eq.s32.totalorder %s26, 0
    %p293 = por %p291, %p292
    %p294 = scmp.ne.s32.totalorder %s280, %s281
    %p295 = scmp.eq.s32.totalorder %s27, 3
    %p296 = por %p294, %p295
    %p298 = scmp.ne.s32.totalorder %s281, %s297
    %p299 = scmp.eq.s32.totalorder %s27, 0
    %p300 = por %p298, %p299
    %s301 = ssub.s32 %s29, %s36
    %p302 = scmp.eq.s32.totalorder %s301, 0
    %s304 = sadd.s32 %s303, 1
    %s305 = scalar_select %p302, %s303, %s304
    %p308 = pneg %p302
    %p309 = scmp.eq.s32.totalorder %s21, 3
    %p310 = por %p308, %p309
    %p311 = scmp.ne.s32.totalorder %s303, %s306
    %p312 = scmp.eq.s32.totalorder %s21, 0
    %p313 = por %p311, %p312
    %p314 = scmp.ne.s32.totalorder %s303, %s306
    %p315 = scmp.eq.s32.totalorder %s26, 3
    %p316 = por %p314, %p315
    %p317 = scmp.ne.s32.totalorder %s306, %s307
    %p318 = scmp.eq.s32.totalorder %s26, 0
    %p319 = por %p317, %p318
    %p320 = scmp.ne.s32.totalorder %s306, %s307
    %p321 = scmp.eq.s32.totalorder %s27, 3
    %p322 = por %p320, %p321
    %p324 = scmp.ne.s32.totalorder %s307, %s323
    %p325 = scmp.eq.s32.totalorder %s27, 0
    %p326 = por %p324, %p325
    %s327 = ssub.s32 %s29, %s36
    %p328 = scmp.eq.s32.totalorder %s327, 0
    %s330 = sadd.s32 %s329, 1
    %s331 = scalar_select %p328, %s329, %s330
    %p334 = pneg %p328
    %p335 = scmp.eq.s32.totalorder %s21, 3
    %p336 = por %p334, %p335
    %p337 = scmp.ne.s32.totalorder %s329, %s332
    %p338 = scmp.eq.s32.totalorder %s21, 0
    %p339 = por %p337, %p338
    %p340 = scmp.ne.s32.totalorder %s329, %s332
    %p341 = scmp.eq.s32.totalorder %s26, 3
    %p342 = por %p340, %p341
    %p343 = scmp.ne.s32.totalorder %s332, %s333
    %p344 = scmp.eq.s32.totalorder %s26, 0
    %p345 = por %p343, %p344
    %p346 = scmp.ne.s32.totalorder %s332, %s333
    %p347 = scmp.eq.s32.totalorder %s27, 3
    %p348 = por %p346, %p347
    %p350 = scmp.ne.s32.totalorder %s333, %s349
    %p351 = scmp.eq.s32.totalorder %s27, 0
    %p352 = por %p350, %p351
    %s353 = ssub.s32 %s29, %s36
    %p354 = scmp.eq.s32.totalorder %s353, 0
    %s356 = sadd.s32 %s355, 1
    %s357 = scalar_select %p354, %s355, %s356
    %p360 = pneg %p354
    %p361 = scmp.eq.s32.totalorder %s21, 3
    %p362 = por %p360, %p361
    %p363 = scmp.ne.s32.totalorder %s355, %s358
    %p364 = scmp.eq.s32.totalorder %s21, 0
    %p365 = por %p363, %p364
    %p366 = scmp.ne.s32.totalorder %s355, %s358
    %p367 = scmp.eq.s32.totalorder %s26, 3
    %p368 = por %p366, %p367
    %p369 = scmp.ne.s32.totalorder %s358, %s359
    %p370 = scmp.eq.s32.totalorder %s26, 0
    %p371 = por %p369, %p370
    %p372 = scmp.ne.s32.totalorder %s358, %s359
    %p373 = scmp.eq.s32.totalorder %s27, 3
    %p374 = por %p372, %p373
    %p376 = scmp.ne.s32.totalorder %s359, %s375
    %p377 = scmp.eq.s32.totalorder %s27, 0
    %p378 = por %p376, %p377
    %s380 = sadd.s32 %s379, 1
    %p383 = scmp.eq.s32.totalorder %s21, 3
    %p384 = scmp.ne.s32.totalorder %s379, %s381
    %p385 = scmp.eq.s32.totalorder %s21, 0
    %p386 = por %p384, %p385
    %p387 = scmp.ne.s32.totalorder %s379, %s381
    %p388 = scmp.eq.s32.totalorder %s26, 3
    %p389 = por %p387, %p388
    %p390 = scmp.ne.s32.totalorder %s381, %s382
    %p391 = scmp.eq.s32.totalorder %s26, 0
    %p392 = por %p390, %p391
    %p393 = scmp.ne.s32.totalorder %s381, %s382
    %p394 = scmp.eq.s32.totalorder %s27, 3
    %p395 = por %p393, %p394
    %p397 = scmp.ne.s32.totalorder %s382, %s396
    %p398 = scmp.eq.s32.totalorder %s27, 0
    %p399 = por %p397, %p398
    %s401 = sadd.s32 %s400, 1
    %p404 = scmp.eq.s32.totalorder %s21, 3
    %p405 = scmp.ne.s32.totalorder %s400, %s402
    %p406 = scmp.eq.s32.totalorder %s21, 0
    %p407 = por %p405, %p406
    %p408 = scmp.ne.s32.totalorder %s400, %s402
    %p409 = scmp.eq.s32.totalorder %s26, 3
    %p410 = por %p408, %p409
    %p411 = scmp.ne.s32.totalorder %s402, %s403
    %p412 = scmp.eq.s32.totalorder %s26, 0
    %p413 = por %p411, %p412
    %p414 = scmp.ne.s32.totalorder %s402, %s403
    %p415 = scmp.eq.s32.totalorder %s27, 3
    %p416 = por %p414, %p415
    %p418 = scmp.ne.s32.totalorder %s403, %s417
    %p419 = scmp.eq.s32.totalorder %s27, 0
    %p420 = por %p418, %p419
    %s421 = ssub.s32 %s28, %s40
    %p422 = scmp.eq.s32.totalorder %s421, 0
    %s424 = sadd.s32 %s423, 1
    %s425 = scalar_select %p422, %s423, %s424
    %p428 = pneg %p422
    %p429 = scmp.eq.s32.totalorder %s21, 3
    %p430 = por %p428, %p429
    %p431 = scmp.ne.s32.totalorder %s423, %s426
    %p432 = scmp.eq.s32.totalorder %s21, 0
    %p433 = por %p431, %p432
    %p434 = scmp.ne.s32.totalorder %s423, %s426
    %p435 = scmp.eq.s32.totalorder %s26, 3
    %p436 = por %p434, %p435
    %p437 = scmp.ne.s32.totalorder %s426, %s427
    %p438 = scmp.eq.s32.totalorder %s26, 0
    %p439 = por %p437, %p438
    %p440 = scmp.ne.s32.totalorder %s426, %s427
    %p441 = scmp.eq.s32.totalorder %s27, 3
    %p442 = por %p440, %p441
    %p444 = scmp.ne.s32.totalorder %s427, %s443
    %p445 = scmp.eq.s32.totalorder %s27, 0
    %p446 = por %p444, %p445
    %p447 = scmp.le.s32.totalorder 1, %s21
    %p448 = scmp.lt.s32.totalorder %s21, 5
    %p449 = pnand %p447, %p448
    %p450 = pneg %p449
    // Predicated region
    $region9: #{dino_featurizer_forward.3} parent=5 // pred_check
      _
    $region10: #{dino_featurizer_forward.3} parent=5 // pred_check_branch
      %452 = sbr.rel (%p449) target = $region12
    $region11: #{dino_featurizer_forward.3} parent=5 // pred_region
      %s453 = ssub.s32 %s21, 1
      // Predicated region
      $region13: #{dino_featurizer_forward.3} parent=11 // pred_check
        %p454 = pneg %p392
      $region14: #{dino_featurizer_forward.3} parent=11 // pred_check_branch
        %456 = sbr.rel (%p454) target = $region16
      $region15: #{dino_featurizer_forward.3} parent=11 // pred_region
        _
      $region16: #{dino_featurizer_forward.3} parent=11 // pred_fallthru
        _
      // Predicated region
      $region17: #{dino_featurizer_forward.3} parent=11 // pred_check
        %p457 = pneg %p413
      $region18: #{dino_featurizer_forward.3} parent=11 // pred_check_branch
        %459 = sbr.rel (%p457) target = $region20
      $region19: #{dino_featurizer_forward.3} parent=11 // pred_region
        _
      $region20: #{dino_featurizer_forward.3} parent=11 // pred_fallthru
        _
    $region12: #{dino_featurizer_forward.3} parent=5 // pred_fallthru
      _
    %p460 = scmp.lt.s32.totalorder %s21, 4
    // Predicated region
    $region21: #{dino_featurizer_forward.3} parent=5 // pred_check
      %p461 = pneg %p460
    $region22: #{dino_featurizer_forward.3} parent=5 // pred_check_branch
      %463 = sbr.rel (%p461) target = $region24
    $region23: #{dino_featurizer_forward.3} parent=5 // pred_region
      // Predicated region
      $region25: #{dino_featurizer_forward.3} parent=23 // pred_check
        %p464 = pneg %p53
      $region26: #{dino_featurizer_forward.3} parent=23 // pred_check_branch
        %466 = sbr.rel (%p464) target = $region28
      $region27: #{dino_featurizer_forward.3} parent=23 // pred_region
        %s467 = smul.u32 6, %s28
        %p468 = scmp.lt.s32.totalorder %s467, 11
        %s469 = scalar_select %p468, %s467, 11
        %s470 = smul.addr %s469, 8
        %s471 = scalar_lea.vmem %s0, %s470
        %s472 = smul.u32 6, %s28
      $region28: #{dino_featurizer_forward.3} parent=23 // pred_fallthru
        _
      // Predicated region
      $region29: #{dino_featurizer_forward.3} parent=23 // pred_check
        %p473 = pneg %p79
      $region30: #{dino_featurizer_forward.3} parent=23 // pred_check_branch
        %475 = sbr.rel (%p473) target = $region32
      $region31: #{dino_featurizer_forward.3} parent=23 // pred_region
        %p476 = scmp.lt.s32.totalorder %s29, 1
        %s477 = scalar_select %p476, %s29, 1
        %s478 = scalar_lea.vmem %s1, %s477
      $region32: #{dino_featurizer_forward.3} parent=23 // pred_fallthru
        _
      // Predicated region
      $region33: #{dino_featurizer_forward.3} parent=23 // pred_check
        %p479 = pneg %p105
      $region34: #{dino_featurizer_forward.3} parent=23 // pred_check_branch
        %481 = sbr.rel (%p479) target = $region36
      $region35: #{dino_featurizer_forward.3} parent=23 // pred_region
        %p482 = scmp.lt.s32.totalorder %s29, 1
        %s483 = scalar_select %p482, %s29, 1
        %s484 = scalar_lea.vmem %s2, %s483
      $region36: #{dino_featurizer_forward.3} parent=23 // pred_fallthru
        _
      // Predicated region
      $region37: #{dino_featurizer_forward.3} parent=23 // pred_check
        %p485 = pneg %p131
      $region38: #{dino_featurizer_forward.3} parent=23 // pred_check_branch
        %487 = sbr.rel (%p485) target = $region40
      $region39: #{dino_featurizer_forward.3} parent=23 // pred_region
        %p488 = scmp.lt.s32.totalorder %s29, 1
        %s489 = scalar_select %p488, %s29, 1
        %s490 = smul.addr %s489, 64
        %s491 = smul.addr %s490, 4
        %s492 = scalar_lea.vmem %s3, %s491
      $region40: #{dino_featurizer_forward.3} parent=23 // pred_fallthru
        _
      // Predicated region
      $region41: #{dino_featurizer_forward.3} parent=23 // pred_check
        %p493 = pneg %p157
      $region42: #{dino_featurizer_forward.3} parent=23 // pred_check_branch
        %495 = sbr.rel (%p493) target = $region44
      $region43: #{dino_featurizer_forward.3} parent=23 // pred_region
        %p496 = scmp.lt.s32.totalorder %s29, 1
        %s497 = scalar_select %p496, %s29, 1
        %s498 = smul.addr %s497, 4
        %s499 = scalar_lea.vmem %s4, %s498
      $region44: #{dino_featurizer_forward.3} parent=23 // pred_fallthru
        _
      // Predicated region
      $region45: #{dino_featurizer_forward.3} parent=23 // pred_check
        %p500 = pneg %p183
      $region46: #{dino_featurizer_forward.3} parent=23 // pred_check_branch
        %502 = sbr.rel (%p500) target = $region48
      $region47: #{dino_featurizer_forward.3} parent=23 // pred_region
        %p503 = scmp.lt.s32.totalorder %s29, 1
        %s504 = scalar_select %p503, %s29, 1
        %s505 = smul.addr %s504, 16
        %s506 = smul.addr %s505, 4
        %s507 = scalar_lea.vmem %s5, %s506
      $region48: #{dino_featurizer_forward.3} parent=23 // pred_fallthru
        _
      // Predicated region
      $region49: #{dino_featurizer_forward.3} parent=23 // pred_check
        %p508 = pneg %p209
      $region50: #{dino_featurizer_forward.3} parent=23 // pred_check_branch
        %510 = sbr.rel (%p508) target = $region52
      $region51: #{dino_featurizer_forward.3} parent=23 // pred_region
        %p511 = scmp.lt.s32.totalorder %s29, 1
        %s512 = scalar_select %p511, %s29, 1
        %s513 = scalar_lea.vmem %s6, %s512
      $region52: #{dino_featurizer_forward.3} parent=23 // pred_fallthru
        _
      // Predicated region
      $region53: #{dino_featurizer_forward.3} parent=23 // pred_check
        %p514 = pneg %p235
      $region54: #{dino_featurizer_forward.3} parent=23 // pred_check_branch
        %516 = sbr.rel (%p514) target = $region56
      $region55: #{dino_featurizer_forward.3} parent=23 // pred_region
        %p517 = scmp.lt.s32.totalorder %s29, 1
        %s518 = scalar_select %p517, %s29, 1
        %s519 = scalar_lea.vmem %s7, %s518
      $region56: #{dino_featurizer_forward.3} parent=23 // pred_fallthru
        _
      // Predicated region
      $region57: #{dino_featurizer_forward.3} parent=23 // pred_check
        %p520 = pneg %p261
      $region58: #{dino_featurizer_forward.3} parent=23 // pred_check_branch
        %522 = sbr.rel (%p520) target = $region60
      $region59: #{dino_featurizer_forward.3} parent=23 // pred_region
        %p523 = scmp.lt.s32.totalorder %s29, 1
        %s524 = scalar_select %p523, %s29, 1
        %s525 = scalar_lea.vmem %s8, %s524
      $region60: #{dino_featurizer_forward.3} parent=23 // pred_fallthru
        _
      // Predicated region
      $region61: #{dino_featurizer_forward.3} parent=23 // pred_check
        %p526 = pneg %p287
      $region62: #{dino_featurizer_forward.3} parent=23 // pred_check_branch
        %528 = sbr.rel (%p526) target = $region64
      $region63: #{dino_featurizer_forward.3} parent=23 // pred_region
        %p529 = scmp.lt.s32.totalorder %s29, 1
        %s530 = scalar_select %p529, %s29, 1
        %s531 = smul.addr %s530, 64
        %s532 = smul.addr %s531, 4
        %s533 = scalar_lea.vmem %s9, %s532
      $region64: #{dino_featurizer_forward.3} parent=23 // pred_fallthru
        _
      // Predicated region
      $region65: #{dino_featurizer_forward.3} parent=23 // pred_check
        %p534 = pneg %p313
      $region66: #{dino_featurizer_forward.3} parent=23 // pred_check_branch
        %536 = sbr.rel (%p534) target = $region68
      $region67: #{dino_featurizer_forward.3} parent=23 // pred_region
        %p537 = scmp.lt.s32.totalorder %s29, 1
        %s538 = scalar_select %p537, %s29, 1
        %s539 = smul.addr %s538, 4
        %s540 = scalar_lea.vmem %s10, %s539
      $region68: #{dino_featurizer_forward.3} parent=23 // pred_fallthru
        _
      // Predicated region
      $region69: #{dino_featurizer_forward.3} parent=23 // pred_check
        %p541 = pneg %p339
      $region70: #{dino_featurizer_forward.3} parent=23 // pred_check_branch
        %543 = sbr.rel (%p541) target = $region72
      $region71: #{dino_featurizer_forward.3} parent=23 // pred_region
        %p544 = scmp.lt.s32.totalorder %s29, 1
        %s545 = scalar_select %p544, %s29, 1
        %s546 = smul.addr %s545, 64
        %s547 = smul.addr %s546, 4
        %s548 = scalar_lea.vmem %s11, %s547
      $region72: #{dino_featurizer_forward.3} parent=23 // pred_fallthru
        _
      // Predicated region
      $region73: #{dino_featurizer_forward.3} parent=23 // pred_check
        %p549 = pneg %p365
      $region74: #{dino_featurizer_forward.3} parent=23 // pred_check_branch
        %551 = sbr.rel (%p549) target = $region76
      $region75: #{dino_featurizer_forward.3} parent=23 // pred_region
        %p552 = scmp.lt.s32.totalorder %s29, 1
        %s553 = scalar_select %p552, %s29, 1
        %s554 = scalar_lea.vmem %s12, %s553
      $region76: #{dino_featurizer_forward.3} parent=23 // pred_fallthru
        _
    $region24: #{dino_featurizer_forward.3} parent=5 // pred_fallthru
      _
    %p555 = scmp.le.s32.totalorder 1, %s21
    %p556 = scmp.lt.s32.totalorder %s21, 5
    %p557 = pnand %p555, %p556
    %p558 = pneg %p557
    // Predicated region
    $region77: #{dino_featurizer_forward.3} parent=5 // pred_check
      _
    $region78: #{dino_featurizer_forward.3} parent=5 // pred_check_branch
      %560 = sbr.rel (%p557) target = $region80
    $region79: #{dino_featurizer_forward.3} parent=5 // pred_region
      %s561 = ssub.s32 %s21, 1
      %s562 = smul.u32 6, %s30
      %p563 = scmp.lt.s32.totalorder %s562, 11
      %s564 = scalar_select %p563, %s562, 11
      %s565 = smul.addr %s564, 8
      %s566 = scalar_lea.vmem %s0, %s565
      %p567 = pneg %p59
      %p568 = pneg %p56
      %p569 = scmp.lt.s32.totalorder %s31, 1
      %s570 = scalar_select %p569, %s31, 1
      %s571 = scalar_lea.vmem %s1, %s570
      %p572 = pneg %p85
      %p573 = pneg %p82
      %p574 = scmp.lt.s32.totalorder %s31, 1
      %s575 = scalar_select %p574, %s31, 1
      %s576 = scalar_lea.vmem %s2, %s575
      %p577 = pneg %p111
      %p578 = pneg %p108
      %p579 = scmp.lt.s32.totalorder %s31, 1
      %s580 = scalar_select %p579, %s31, 1
      %s581 = smul.addr %s580, 64
      %s582 = smul.addr %s581, 4
      %s583 = scalar_lea.vmem %s3, %s582
      %p584 = pneg %p137
      %p585 = pneg %p134
      %p586 = scmp.lt.s32.totalorder %s31, 1
      %s587 = scalar_select %p586, %s31, 1
      %s588 = smul.addr %s587, 4
      %s589 = scalar_lea.vmem %s4, %s588
      %p590 = pneg %p163
      %p591 = pneg %p160
      %p592 = scmp.lt.s32.totalorder %s31, 1
      %s593 = scalar_select %p592, %s31, 1
      %s594 = smul.addr %s593, 16
      %s595 = smul.addr %s594, 4
      %s596 = scalar_lea.vmem %s5, %s595
      %p597 = pneg %p189
      %p598 = pneg %p186
      %p599 = scmp.lt.s32.totalorder %s31, 1
      %s600 = scalar_select %p599, %s31, 1
      %s601 = scalar_lea.vmem %s6, %s600
      %p602 = pneg %p215
      %p603 = pneg %p212
      %p604 = scmp.lt.s32.totalorder %s31, 1
      %s605 = scalar_select %p604, %s31, 1
      %s606 = scalar_lea.vmem %s7, %s605
      %p607 = pneg %p241
      %p608 = pneg %p238
      %p609 = scmp.lt.s32.totalorder %s31, 1
      %s610 = scalar_select %p609, %s31, 1
      %s611 = scalar_lea.vmem %s8, %s610
      %p612 = pneg %p267
      %p613 = pneg %p264
      %p614 = scmp.lt.s32.totalorder %s31, 1
      %s615 = scalar_select %p614, %s31, 1
      %s616 = smul.addr %s615, 64
      %s617 = smul.addr %s616, 4
      %s618 = scalar_lea.vmem %s9, %s617
      %p619 = pneg %p293
      %p620 = pneg %p290
      %p621 = scmp.lt.s32.totalorder %s31, 1
      %s622 = scalar_select %p621, %s31, 1
      %s623 = smul.addr %s622, 4
      %s624 = scalar_lea.vmem %s10, %s623
      %p625 = pneg %p319
      %p626 = pneg %p316
      %p627 = scmp.lt.s32.totalorder %s31, 1
      %s628 = scalar_select %p627, %s31, 1
      %s629 = smul.addr %s628, 64
      %s630 = smul.addr %s629, 4
      %s631 = scalar_lea.vmem %s11, %s630
      %p632 = pneg %p345
      %p633 = pneg %p342
      %p634 = scmp.lt.s32.totalorder %s31, 1
      %s635 = scalar_select %p634, %s31, 1
      %s636 = scalar_lea.vmem %s12, %s635
      %p637 = pneg %p371
      %p638 = pneg %p368
      %p639 = pneg %p392
      %p640 = pneg %p389
      %p641 = pneg %p413
      %p642 = pneg %p410
      %p643 = pneg %p439
      %p644 = pneg %p436
      %s645 = smul.u32 6, %s30
      %p646 = scmp.lt.s32.totalorder %s645, 11
      %s647 = scalar_select %p646, %s645, 11
      %s648 = smul.addr %s647, 8
      %s649 = scalar_lea.vmem %s15, %s648
      %s650 = smul.u32 6, %s30
      %p651 = scmp.lt.s32.totalorder %s650, 11
      %s652 = scalar_select %p651, %s650, 11
      %s653 = smul.addr %s652, 8
      %s654 = scalar_lea.vmem %s0, %s653
      %s655 = smul.u32 6, %s30
      %p656 = scmp.lt.s32.totalorder %s31, 1
      %s657 = scalar_select %p656, %s31, 1
      %s658 = scalar_lea.vmem %s1, %s657
      %p659 = scmp.lt.s32.totalorder %s31, 1
      %s660 = scalar_select %p659, %s31, 1
      %s661 = scalar_lea.vmem %s2, %s660
      %p662 = scmp.lt.s32.totalorder %s31, 1
      %s663 = scalar_select %p662, %s31, 1
      %s664 = smul.addr %s663, 64
      %s665 = smul.addr %s664, 4
      %s666 = scalar_lea.vmem %s3, %s665
      %p667 = scmp.lt.s32.totalorder %s31, 1
      %s668 = scalar_select %p667, %s31, 1
      %s669 = smul.addr %s668, 4
      %s670 = scalar_lea.vmem %s4, %s669
      %p671 = scmp.lt.s32.totalorder %s31, 1
      %s672 = scalar_select %p671, %s31, 1
      %s673 = smul.addr %s672, 16
      %s674 = smul.addr %s673, 4
      %s675 = scalar_lea.vmem %s5, %s674
      %p676 = scmp.lt.s32.totalorder %s31, 1
      %s677 = scalar_select %p676, %s31, 1
      %s678 = scalar_lea.vmem %s6, %s677
      %p679 = scmp.lt.s32.totalorder %s31, 1
      %s680 = scalar_select %p679, %s31, 1
      %s681 = scalar_lea.vmem %s7, %s680
      %p682 = scmp.lt.s32.totalorder %s31, 1
      %s683 = scalar_select %p682, %s31, 1
      %s684 = scalar_lea.vmem %s8, %s683
      %p685 = scmp.lt.s32.totalorder %s31, 1
      %s686 = scalar_select %p685, %s31, 1
      %s687 = smul.addr %s686, 64
      %s688 = smul.addr %s687, 4
      %s689 = scalar_lea.vmem %s9, %s688
      %p690 = scmp.lt.s32.totalorder %s31, 1
      %s691 = scalar_select %p690, %s31, 1
      %s692 = smul.addr %s691, 4
      %s693 = scalar_lea.vmem %s10, %s692
      %p694 = scmp.lt.s32.totalorder %s31, 1
      %s695 = scalar_select %p694, %s31, 1
      %s696 = smul.addr %s695, 64
      %s697 = smul.addr %s696, 4
      %s698 = scalar_lea.vmem %s11, %s697
      %p699 = scmp.lt.s32.totalorder %s31, 1
      %s700 = scalar_select %p699, %s31, 1
      %s701 = scalar_lea.vmem %s12, %s700
      %s702 = smul.u32 6, %s30
      %p703 = scmp.lt.s32.totalorder %s702, 11
      %s704 = scalar_select %p703, %s702, 11
      %s705 = smul.addr %s704, 8
      %s706 = scalar_lea.vmem %s15, %s705
      %s707 = smul.u32 6, %s30
      %p709 = scmp.eq.s32.totalorder %s31, 0
      // Predicated region
      $region81: #{dino_featurizer_forward.3} parent=79 // pred_check
        %p710 = pneg %p709
      $region82: #{dino_featurizer_forward.3} parent=79 // pred_check_branch
        %712 = sbr.rel (%p710) target = $region84
      $region83: #{dino_featurizer_forward.3} parent=79 // pred_region
        %v713 = vld [vmem:[%s654] sm:$0xff]
        %v714 = vld [vmem:[%s654 + $0x8] sm:$0xff]
        %v715 = vld [vmem:[%s654 + $0x10] sm:$0xff]
        %v716 = vld [vmem:[%s654 + $0x18] sm:$0xff]
        %v717 = vld [vmem:[%s654 + $0x20] sm:$0xff]
        %v718 = vld [vmem:[%s654 + $0x28] sm:$0xff]
        %719 = vst [vmem:[%s706] sm:$0xff] %v713
        %720 = vst [vmem:[%s706 + $0x8] sm:$0xff] %v714
        %721 = vst [vmem:[%s706 + $0x10] sm:$0xff] %v715
        %722 = vst [vmem:[%s706 + $0x18] sm:$0xff] %v716
        %723 = vst [vmem:[%s706 + $0x20] sm:$0xff] %v717
        %724 = vst [vmem:[%s706 + $0x28] sm:$0xff] %v718
      $region84: #{dino_featurizer_forward.3} parent=79 // pred_fallthru
        _
      %v725 = vld [vmem:[%s706] sm:$0xff]
      %v726 = vld [vmem:[%s706 + $0x8] sm:$0xff]
      %v727 = vld [vmem:[%s706 + $0x10] sm:$0xff]
      %v728 = vld [vmem:[%s706 + $0x18] sm:$0xff]
      %v729 = vld [vmem:[%s706 + $0x20] sm:$0xff]
      %v730 = vld [vmem:[%s706 + $0x28] sm:$0xff]
      %v731 = vlaneseq
      %v732 = vand.u32 %v731, 127
      %vm733 = vcmp.lt.s32.totalorder %v732, 17
      %v734 = vld [vmem:[%s658] sm:$0x1]
      %v735 = vld [vmem:[%s661] sm:$0x1]
      %736 = vadd.xlane.f32.xlu0 %v725
      %v737 = vpop.xlane.xlu0 %736
      %738 = vadd.xlane.f32.xlu0 %v726
      %v739 = vpop.xlane.xlu0 %738
      %740 = vadd.xlane.f32.xlu0 %v727
      %v741 = vpop.xlane.xlu0 %740
      %742 = vadd.xlane.f32.xlu0 %v728
      %v743 = vpop.xlane.xlu0 %742
      %744 = vadd.xlane.f32.xlu0 %v729
      %v745 = vpop.xlane.xlu0 %744
      %746 = vadd.xlane.f32.xlu0 %v730
      %v747 = vpop.xlane.xlu0 %746
      %v748 = vrcp.pop 128.0
      %v749 = vmul.f32 %v737, %v748
      %v750 = vmul.f32 %v739, %v748
      %v751 = vmul.f32 %v741, %v748
      %v752 = vmul.f32 %v743, %v748
      %v753 = vmul.f32 %v745, %v748
      %v754 = vmul.f32 %v747, %v748
      %v755 = vsub.f32 %v725, %v749
      %v756 = vsub.f32 %v726, %v750
      %v757 = vsub.f32 %v727, %v751
      %v758 = vsub.f32 %v728, %v752
      %v759 = vsub.f32 %v729, %v753
      %v760 = vsub.f32 %v730, %v754
      %v761 = vmul.f32 %v755, %v755
      %v762 = vmul.f32 %v756, %v756
      %v763 = vmul.f32 %v757, %v757
      %v764 = vmul.f32 %v758, %v758
      %v765 = vmul.f32 %v759, %v759
      %v766 = vmul.f32 %v760, %v760
      %767 = vadd.xlane.f32.xlu0 %v761
      %v768 = vpop.xlane.xlu0 %767
      %769 = vadd.xlane.f32.xlu0 %v762
      %v770 = vpop.xlane.xlu0 %769
      %771 = vadd.xlane.f32.xlu0 %v763
      %v772 = vpop.xlane.xlu0 %771
      %773 = vadd.xlane.f32.xlu0 %v764
      %v774 = vpop.xlane.xlu0 %773
      %775 = vadd.xlane.f32.xlu0 %v765
      %v776 = vpop.xlane.xlu0 %775
      %777 = vadd.xlane.f32.xlu0 %v766
      %v778 = vpop.xlane.xlu0 %777
      %v779 = vmul.f32 %v768, %v748
      %v780 = vmul.f32 %v770, %v748
      %v781 = vmul.f32 %v772, %v748
      %v782 = vmul.f32 %v774, %v748
      %v783 = vmul.f32 %v776, %v748
      %v784 = vmul.f32 %v778, %v748
      %v785 = vadd.f32 %v779, 1e-06
      %v786 = vadd.f32 %v780, 1e-06
      %v787 = vadd.f32 %v781, 1e-06
      %v788 = vadd.f32 %v782, 1e-06
      %v789 = vadd.f32 %v783, 1e-06
      %v790 = vadd.f32 %v784, 1e-06
      %v791 = vrsqrt.pop %v785
      %v792 = vrsqrt.pop %v786
      %v793 = vrsqrt.pop %v787
      %v794 = vrsqrt.pop %v788
      %v795 = vrsqrt.pop %v789
      %v796 = vrsqrt.pop %v790
      %v797 = vmul.f32 %v755, %v791
      %v798 = vmul.f32 %v756, %v792
      %v799 = vmul.f32 %v757, %v793
      %v800 = vmul.f32 %v758, %v794
      %v801 = vmul.f32 %v759, %v795
      %v802 = vmul.f32 %v760, %v796
      %v804 = vlaneseq
      %v805 = vshrl.u32 %v804, 7
      %v806 = vsub.s32 0, %v805
      %v807 = vrot.slane %v734, %v806
      %v809 = vmul.f32 %v797, %v807
      %v810 = vmul.f32 %v798, %v807
      %v811 = vmul.f32 %v799, %v807
      %v812 = vmul.f32 %v800, %v807
      %v813 = vmul.f32 %v801, %v807
      %v814 = vmul.f32 %v802, %v807
      %v816 = vlaneseq
      %v817 = vshrl.u32 %v816, 7
      %v818 = vsub.s32 0, %v817
      %v819 = vrot.slane %v735, %v818
      %v821 = vadd.f32 %v809, %v819
      %v822 = vadd.f32 %v810, %v819
      %v823 = vadd.f32 %v811, %v819
      %v824 = vadd.f32 %v812, %v819
      %v825 = vadd.f32 %v813, %v819
      %v826 = vadd.f32 %v814, %v819
      %827 = vst [vmem:[#allocation2] sm:$0xff] 0.0
      %828 = vst [vmem:[#allocation2 + $0x8] sm:$0xff] 0.0
      %829 = vst [vmem:[#allocation2 + $0x10] sm:$0xff] 0.0
      %830 = vst [vmem:[#allocation2 + $0x18] sm:$0xff] 0.0
      %831 = vst [vmem:[#allocation2 + $0x20] sm:$0xff] 0.0
      %832 = vst [vmem:[#allocation2 + $0x28] sm:$0xff] 0.0
      loop: start=0, step=1, limit=2
      $region85: #{dino_featurizer_forward.3} parent=79 // loop_pre_header
        _
      $region86: #{dino_featurizer_forward.3} parent=79 // loop_header
        %s834 = sphi 0, %s838
        %p835 = scmp.ge.s32.totalorder %s834, 2
      $region87: #{dino_featurizer_forward.3} parent=79 // loop_header_branch
        %837 = sbr.rel (%p835) target = $region91
      $region88: #{dino_featurizer_forward.3} parent=79 // loop_body
        %s839 = smul.u32 %s834, 32
        %s840 = smul.addr %s839, 4
        %s841 = scalar_lea.vmem %s666, %s840
        %v842 = vld [vmem:[%s841] sm:$0xff]
        %v843 = vld [vmem:[%s841 + $0x8] sm:$0xff]
        %v844 = vld [vmem:[%s841 + $0x10] sm:$0xff]
        %v845 = vld [vmem:[%s841 + $0x18] sm:$0xff]
        %v846 = vld [vmem:[%s841 + $0x20] sm:$0xff]
        %v847 = vld [vmem:[%s841 + $0x28] sm:$0xff]
        %v848 = vld [vmem:[%s841 + $0x30] sm:$0xff]
        %v849 = vld [vmem:[%s841 + $0x38] sm:$0xff]
        %v850 = vld [vmem:[%s841 + $0x40] sm:$0xff]
        %v851 = vld [vmem:[%s841 + $0x48] sm:$0xff]
        %v852 = vld [vmem:[%s841 + $0x50] sm:$0xff]
        %v853 = vld [vmem:[%s841 + $0x58] sm:$0xff]
        %v854 = vld [vmem:[%s841 + $0x60] sm:$0xff]
        %v855 = vld [vmem:[%s841 + $0x68] sm:$0xff]
        %v856 = vld [vmem:[%s841 + $0x70] sm:$0xff]
        %v857 = vld [vmem:[%s841 + $0x78] sm:$0xff]
        %s858 = smul.u32 %s834, 2
        %s859 = scalar_lea.vmem %s670, %s858
        %v860 = vld [vmem:[%s859] sm:$0x3]
        %s861 = smul.u32 %s834, 8
        %s862 = smul.addr %s861, 4
        %s863 = scalar_lea.vmem %s675, %s862
        %v864 = vld [vmem:[%s863] sm:$0xf]
        %v865 = vld [vmem:[%s863 + $0x4] sm:$0xf]
        %v866 = vld [vmem:[%s863 + $0x8] sm:$0xf]
        %v867 = vld [vmem:[%s863 + $0xc] sm:$0xf]
        %v868 = vld [vmem:[%s863 + $0x10] sm:$0xf]
        %v869 = vld [vmem:[%s863 + $0x14] sm:$0xf]
        %v870 = vld [vmem:[%s863 + $0x18] sm:$0xf]
        %v871 = vld [vmem:[%s863 + $0x1c] sm:$0xf]
        %v872 = vpack.c.bf16 %v822, %v821
        %v873 = vpack.c.bf16 %v824, %v823
        %v874 = vpack.c.bf16 %v826, %v825
        %v876 = vlaneseq
        %v877 = vshrl.u32 %v876, 7
        %v878 = vsub.s32 0, %v877
        %v879 = vrot.slane %v860, %v878
        %v880 = vlaneseq
        %v881 = vshrl.u32 %v880, 7
        %v882 = vsub.s32 1, %v881
        %v883 = vrot.slane %v860, %v882
        %v902 = vunpack.c.l.b16 %v842
        %v903 = vunpack.c.h.b16 %v842
        %v904 = vunpack.c.l.b16 %v843
        %v905 = vunpack.c.h.b16 %v843
        %v906 = vunpack.c.l.b16 %v844
        %v907 = vunpack.c.h.b16 %v844
        %v908 = vunpack.c.l.b16 %v845
        %v909 = vunpack.c.h.b16 %v845
        %v910 = vunpack.c.l.b16 %v846
        %v911 = vunpack.c.h.b16 %v846
        %v912 = vunpack.c.l.b16 %v847
        %v913 = vunpack.c.h.b16 %v847
        %v914 = vunpack.c.l.b16 %v848
        %v915 = vunpack.c.h.b16 %v848
        %v916 = vunpack.c.l.b16 %v849
        %v917 = vunpack.c.h.b16 %v849
        %v918 = vunpack.c.l.b16 %v850
        %v919 = vunpack.c.h.b16 %v850
        %v920 = vunpack.c.l.b16 %v851
        %v921 = vunpack.c.h.b16 %v851
        %v922 = vunpack.c.l.b16 %v852
        %v923 = vunpack.c.h.b16 %v852
        %v924 = vunpack.c.l.b16 %v853
        %v925 = vunpack.c.h.b16 %v853
        %v926 = vunpack.c.l.b16 %v854
        %v927 = vunpack.c.h.b16 %v854
        %v928 = vunpack.c.l.b16 %v855
        %v929 = vunpack.c.h.b16 %v855
        %v930 = vunpack.c.l.b16 %v856
        %v931 = vunpack.c.h.b16 %v856
        %v932 = vunpack.c.l.b16 %v857
        %v933 = vunpack.c.h.b16 %v857
        %v934 = vpack.c.b16 %v904, %v902
        %v935 = vpack.c.b16 %v905, %v903
        %v936 = vpack.c.b16 %v908, %v906
        %v937 = vpack.c.b16 %v909, %v907
        %v938 = vpack.c.b16 %v912, %v910
        %v939 = vpack.c.b16 %v913, %v911
        %v940 = vpack.c.b16 %v916, %v914
        %v941 = vpack.c.b16 %v917, %v915
        %v942 = vpack.c.b16 %v920, %v918
        %v943 = vpack.c.b16 %v921, %v919
        %v944 = vpack.c.b16 %v924, %v922
        %v945 = vpack.c.b16 %v925, %v923
        %v946 = vpack.c.b16 %v928, %v926
        %v947 = vpack.c.b16 %v929, %v927
        %v948 = vpack.c.b16 %v932, %v930
        %v949 = vpack.c.b16 %v933, %v931
        %966 = vmatprep.subr.bf16.mxu0 %v935
        %967 = vmatpush1.bf16.msra.mxu0 %v934
        %968 = vmatprep.subr.bf16.mxu0 %v937
        %969 = vmatpush1.bf16.msra.mxu0 %v936
        %970 = vmatprep.subr.bf16.mxu0 %v939
        %971 = vmatpush1.bf16.msra.mxu0 %v938
        %972 = vmatprep.subr.bf16.mxu0 %v941
        %973 = vmatpush1.bf16.msra.mxu0 %v940
        %974 = vmatprep.subr.bf16.mxu0 %v943
        %975 = vmatpush1.bf16.msra.mxu0 %v942
        %976 = vmatprep.subr.bf16.mxu0 %v945
        %977 = vmatpush1.bf16.msra.mxu0 %v944
        %978 = vmatprep.subr.bf16.mxu0 %v947
        %979 = vmatpush1.bf16.msra.mxu0 %v946
        %980 = vmatprep.subr.bf16.mxu0 %v949
        %981 = vmatpush1.bf16.msra.mxu0 %v948
        %982 = vmatprep.subr.bf16.mxu0 0
        %983 = vmatpush1.bf16.msra.mxu0 0
        %984 = vmatprep.subr.bf16.mxu0 0
        %985 = vmatpush1.bf16.msra.mxu0 0
        %986 = vmatprep.subr.bf16.mxu0 0
        %987 = vmatpush1.bf16.msra.mxu0 0
        %988 = vmatprep.subr.bf16.mxu0 0
        %989 = vmatpush1.bf16.msra.mxu0 0
        %990 = vmatprep.subr.bf16.mxu0 0
        %991 = vmatpush1.bf16.msra.mxu0 0
        %992 = vmatprep.subr.bf16.mxu0 0
        %993 = vmatpush1.bf16.msra.mxu0 0
        %994 = vmatprep.subr.bf16.mxu0 0
        %995 = vmatpush1.bf16.msra.mxu0 0
        %996 = vmatprep.subr.bf16.mxu0 0
        %997 = vmatpush1.bf16.msra.mxu0 0
        %998 = vmatprep.mubr.bf16.mxu0 0
        %999 = vmatmul.mubr.bf16.gmra.mrb[0].mxu0 %v872
        %v1000 = vpop.f32.mrb[0].mxu0
        %v1001 = vadd.f32 %v879, %v1000
        %v1002 = vpop.f32.mrb[0].mxu0
        %v1003 = vadd.f32 %v883, %v1002
        %v1004 = vpop.f32.mrb[0].mxu0
        %v1005 = vadd.f32 %v879, %v1004
        %v1006 = vpop.f32.mrb[0].mxu0
        %v1007 = vadd.f32 %v883, %v1006
        %1008 = vmatprep.mubr.bf16.mxu0 0
        %1009 = vmatmul.mubr.bf16.gmra.mrb[0].mxu0 %v873
        %v1010 = vpop.f32.mrb[0].mxu0
        %v1011 = vadd.f32 %v879, %v1010
        %v1012 = vpop.f32.mrb[0].mxu0
        %v1013 = vadd.f32 %v883, %v1012
        %v1014 = vpop.f32.mrb[0].mxu0
        %v1015 = vadd.f32 %v879, %v1014
        %v1016 = vpop.f32.mrb[0].mxu0
        %v1017 = vadd.f32 %v883, %v1016
        %1018 = vmatprep.mubr.bf16.mxu0 0
        %1019 = vmatmul.mubr.bf16.gmra.mrb[0].mxu0 %v874
        %v1020 = vpop.f32.mrb[0].mxu0
        %v1021 = vadd.f32 %v879, %v1020
        %v1022 = vpop.f32.mrb[0].mxu0
        %v1023 = vadd.f32 %v883, %v1022
        %v1024 = vpop.f32.mrb[0].mxu0
        %v1025 = vadd.f32 %v879, %v1024
        %v1026 = vpop.f32.mrb[0].mxu0
        %v1027 = vadd.f32 %v883, %v1026
        %1028 = vdwg.mxu0
        %v1029 = vpack.c.bf16 %v1005, %v1001
        %v1030 = vpack.c.bf16 %v1011, %v1011
        %1033 = vrot.lane.b32.xlu0 %v1029, 64
        %v1034 = vpop.permute.xlu0 %1033
        %1035 = vrot.lane.b32.xlu0 %v1030, 64
        %v1036 = vpop.permute.xlu0 %1035
        %vm1037 = vcmask 523264
        %v1039 = vsel %vm1037, %v1029, 0
        %v1042 = vsel %vm1037, %v1030, 0
        %v1045 = vsel %vm1037, %v1034, 0
        %v1048 = vsel %vm1037, %v1036, 0
        %1050 = vmatprep.subr.bf16.mxu0 0
        %1051 = vmatpush1.bf16.xpose.msra.mxu0 %v1045
        %1052 = vmatprep.subr.bf16.mxu0 0
        %1053 = vmatpush1.bf16.xpose.msra.mxu0 %v1048
        %1054 = vmatprep.subr.bf16.mxu0 0
        %1055 = vmatpush1.bf16.xpose.msra.mxu0 0
        %1056 = vmatprep.subr.bf16.mxu0 0
        %1057 = vmatpush1.bf16.xpose.msra.mxu0 0
        %1058 = vmatprep.subr.bf16.mxu0 0
        %1059 = vmatpush1.bf16.xpose.msra.mxu0 0
        %1060 = vmatprep.subr.bf16.mxu0 0
        %1061 = vmatpush1.bf16.xpose.msra.mxu0 0
        %1062 = vmatprep.subr.bf16.mxu0 0
        %1063 = vmatpush1.bf16.xpose.msra.mxu0 0
        %1064 = vmatprep.subr.bf16.mxu0 0
        %1065 = vmatpush1.bf16.xpose.msra.mxu0 0
        %1066 = vmatprep.subr.bf16.mxu0 0
        %1067 = vmatpush1.bf16.xpose.msra.mxu0 0
        %1068 = vmatprep.subr.bf16.mxu0 0
        %1069 = vmatpush1.bf16.xpose.msra.mxu0 0
        %1070 = vmatprep.subr.bf16.mxu0 0
        %1071 = vmatpush1.bf16.xpose.msra.mxu0 0
        %1072 = vmatprep.subr.bf16.mxu0 0
        %1073 = vmatpush1.bf16.xpose.msra.mxu0 0
        %1074 = vmatprep.subr.bf16.mxu0 0
        %1075 = vmatpush1.bf16.xpose.msra.mxu0 0
        %1076 = vmatprep.subr.bf16.mxu0 0
        %1077 = vmatpush1.bf16.xpose.msra.mxu0 0
        %1078 = vmatprep.subr.bf16.mxu0 0
        %1079 = vmatpush1.bf16.xpose.msra.mxu0 0
        %1080 = vmatprep.subr.bf16.mxu0 0
        %1081 = vmatpush1.bf16.xpose.msra.mxu0 0
        %1082 = vmatprep.mubr.bf16.mxu0 0
        %1083 = vmatmul.mubr.bf16.gmra.mrb[0].mxu0 %v1039
        %v1084 = vpop.f32.mrb[0].mxu0
        %v1085 = vadd.f32 0.0, %v1084
        %v1086 = vpop.f32.mrb[0].mxu0
        %v1087 = vpop.f32.mrb[0].mxu0
        %v1088 = vadd.f32 0.0, %v1087
        %v1089 = vpop.f32.mrb[0].mxu0
        %1090 = vmatprep.mubr.bf16.mxu0 0
        %1091 = vmatmul.mubr.bf16.gmra.mrb[0].mxu0 %v1042
        %v1092 = vpop.f32.mrb[0].mxu0
        %v1093 = vadd.f32 0.0, %v1092
        %v1094 = vpop.f32.mrb[0].mxu0
        %v1095 = vpop.f32.mrb[0].mxu0
        %v1096 = vpop.f32.mrb[0].mxu0
        %1097 = vdwg.mxu0
        %v1098 = vmul.f32 %v1085, 0.125
        %v1099 = vmul.f32 %v1088, 0.125
        %v1100 = vmul.f32 %v1093, 0.125
        %v1101 = vsel %vm733, %v1098, -1e+30
        %v1102 = vsel %vm733, %v1099, -1e+30
        %v1103 = vsel %vm733, %v1100, -1e+30
        %vm1104 = vcmask 195584
        %v1105 = vsel %vm1104, %v1101, -inf
        %1106 = vmax.xlane.f32.xlu0 %v1105
        %v1107 = vpop.xlane.xlu0 %1106
        %v1108 = vsel %vm1104, %v1102, -inf
        %1109 = vmax.xlane.f32.xlu0 %v1108
        %v1110 = vpop.xlane.xlu0 %1109
        %v1111 = vsel %vm1104, %v1103, -inf
        %1112 = vmax.xlane.f32.xlu0 %v1111
        %v1113 = vpop.xlane.xlu0 %1112
        %v1114 = vsub.f32 %v1101, %v1107
        %v1115 = vsub.f32 %v1102, %v1110
        %v1116 = vsub.f32 %v1103, %v1113
        %v1117 = vmul.f32 %v1114, 1.442695
        %v1118 = vpow.pop %v1117
        %v1119 = vmul.f32 %v1115, 1.442695
        %v1120 = vpow.pop %v1119
        %v1121 = vmul.f32 %v1116, 1.442695
        %v1122 = vpow.pop %v1121
        %v1123 = vsel %vm1104, %v1118, 0.0
        %1124 = vadd.xlane.f32.xlu0 %v1123
        %v1125 = vpop.xlane.xlu0 %1124
        %v1126 = vsel %vm1104, %v1120, 0.0
        %1127 = vadd.xlane.f32.xlu0 %v1126
        %v1128 = vpop.xlane.xlu0 %1127
        %v1129 = vsel %vm1104, %v1122, 0.0
        %1130 = vadd.xlane.f32.xlu0 %v1129
        %v1131 = vpop.xlane.xlu0 %1130
        %v1132 = vrcp.pop %v1125
        %v1133 = vrcp.pop %v1128
        %v1134 = vrcp.pop %v1131
        %v1135 = vmul.f32 %v1118, %v1132
        %v1136 = vmul.f32 %v1120, %v1133
        %v1137 = vmul.f32 %v1122, %v1134
        %v1138 = vpack.c.bf16 %v1136, %v1135
        %v1139 = vpack.c.bf16 %v1137, %v1137
        %v1140 = vpack.c.bf16 %v1007, %v1003
        %v1141 = vpack.c.bf16 %v1013, %v1013
        %v1143 = vsel %vm1104, %v1138, 0
        %v1146 = vsel %vm1104, %v1139, 0
        %vm1148 = vcmask 1043456
        %v1150 = vsel %vm1148, %v1141, 0
        %1152 = vmatprep.subr.bf16.mxu0 0
        %1153 = vmatpush1.bf16.msra.mxu0 %v1140
        %1154 = vmatprep.subr.bf16.mxu0 0
        %1155 = vmatpush1.bf16.msra.mxu0 %v1150
        %1156 = vmatprep.subr.bf16.mxu0 0
        %1157 = vmatpush1.bf16.msra.mxu0 0
        %1158 = vmatprep.subr.bf16.mxu0 0
        %1159 = vmatpush1.bf16.msra.mxu0 0
        %1160 = vmatprep.subr.bf16.mxu0 0
        %1161 = vmatpush1.bf16.msra.mxu0 0
        %1162 = vmatprep.subr.bf16.mxu0 0
        %1163 = vmatpush1.bf16.msra.mxu0 0
        %1164 = vmatprep.subr.bf16.mxu0 0
        %1165 = vmatpush1.bf16.msra.mxu0 0
        %1166 = vmatprep.subr.bf16.mxu0 0
        %1167 = vmatpush1.bf16.msra.mxu0 0
        %1168 = vmatprep.subr.bf16.mxu0 0
        %1169 = vmatpush1.bf16.msra.mxu0 0
        %1170 = vmatprep.subr.bf16.mxu0 0
        %1171 = vmatpush1.bf16.msra.mxu0 0
        %1172 = vmatprep.subr.bf16.mxu0 0
        %1173 = vmatpush1.bf16.msra.mxu0 0
        %1174 = vmatprep.subr.bf16.mxu0 0
        %1175 = vmatpush1.bf16.msra.mxu0 0
        %1176 = vmatprep.subr.bf16.mxu0 0
        %1177 = vmatpush1.bf16.msra.mxu0 0
        %1178 = vmatprep.subr.bf16.mxu0 0
        %1179 = vmatpush1.bf16.msra.mxu0 0
        %1180 = vmatprep.subr.bf16.mxu0 0
        %1181 = vmatpush1.bf16.msra.mxu0 0
        %1182 = vmatprep.subr.bf16.mxu0 0
        %1183 = vmatpush1.bf16.msra.mxu0 0
        %1184 = vmatprep.mubr.bf16.mxu0 0
        %1185 = vmatmul.mubr.bf16.gmra.mrb[0].mxu0 %v1143
        %v1186 = vpop.f32.mrb[0].mxu0
        %v1187 = vadd.f32 0.0, %v1186
        %v1188 = vpop.f32.mrb[0].mxu0
        %v1189 = vpop.f32.mrb[0].mxu0
        %v1190 = vadd.f32 0.0, %v1189
        %v1191 = vpop.f32.mrb[0].mxu0
        %1192 = vmatprep.mubr.bf16.mxu0 0
        %1193 = vmatmul.mubr.bf16.gmra.mrb[0].mxu0 %v1146
        %v1194 = vpop.f32.mrb[0].mxu0
        %v1195 = vadd.f32 0.0, %v1194
        %v1196 = vpop.f32.mrb[0].mxu0
        %v1197 = vpop.f32.mrb[0].mxu0
        %v1198 = vpop.f32.mrb[0].mxu0
        %1199 = vdwg.mxu0
        %v1200 = vld [vmem:[#allocation2] sm:$0xff]
        %v1201 = vld [vmem:[#allocation2 + $0x8] sm:$0xff]
        %v1202 = vld [vmem:[#allocation2 + $0x10] sm:$0xff]
        %v1203 = vpack.c.bf16 %v1190, %v1187
        %v1204 = vpack.c.bf16 %v1195, %v1195
        %v1213 = vunpack.c.l.b16 %v864
        %v1214 = vunpack.c.l.b16 %v865
        %v1215 = vunpack.c.l.b16 %v866
        %v1216 = vunpack.c.l.b16 %v867
        %v1217 = vunpack.c.l.b16 %v868
        %v1218 = vunpack.c.l.b16 %v869
        %v1219 = vunpack.c.l.b16 %v870
        %v1220 = vunpack.c.l.b16 %v871
        %v1221 = vpack.c.b16 %v1214, %v1213
        %v1222 = vpack.c.b16 %v1216, %v1215
        %v1223 = vpack.c.b16 %v1218, %v1217
        %v1224 = vpack.c.b16 %v1220, %v1219
        %v1230 = vsel %vm1037, %v1203, 0
        %v1233 = vsel %vm1037, %v1204, 0
        %1235 = vmatprep.subr.bf16.mxu0 0
        %1236 = vmatpush1.bf16.msra.mxu0 %v1221
        %1237 = vmatprep.subr.bf16.mxu0 0
        %1238 = vmatpush1.bf16.msra.mxu0 %v1222
        %1239 = vmatprep.subr.bf16.mxu0 0
        %1240 = vmatpush1.bf16.msra.mxu0 %v1223
        %1241 = vmatprep.subr.bf16.mxu0 0
        %1242 = vmatpush1.bf16.msra.mxu0 %v1224
        %1243 = vmatprep.subr.bf16.mxu0 0
        %1244 = vmatpush1.bf16.msra.mxu0 0
        %1245 = vmatprep.subr.bf16.mxu0 0
        %1246 = vmatpush1.bf16.msra.mxu0 0
        %1247 = vmatprep.subr.bf16.mxu0 0
        %1248 = vmatpush1.bf16.msra.mxu0 0
        %1249 = vmatprep.subr.bf16.mxu0 0
        %1250 = vmatpush1.bf16.msra.mxu0 0
        %1251 = vmatprep.subr.bf16.mxu0 0
        %1252 = vmatpush1.bf16.msra.mxu0 0
        %1253 = vmatprep.subr.bf16.mxu0 0
        %1254 = vmatpush1.bf16.msra.mxu0 0
        %1255 = vmatprep.subr.bf16.mxu0 0
        %1256 = vmatpush1.bf16.msra.mxu0 0
        %1257 = vmatprep.subr.bf16.mxu0 0
        %1258 = vmatpush1.bf16.msra.mxu0 0
        %1259 = vmatprep.subr.bf16.mxu0 0
        %1260 = vmatpush1.bf16.msra.mxu0 0
        %1261 = vmatprep.subr.bf16.mxu0 0
        %1262 = vmatpush1.bf16.msra.mxu0 0
        %1263 = vmatprep.subr.bf16.mxu0 0
        %1264 = vmatpush1.bf16.msra.mxu0 0
        %1265 = vmatprep.subr.bf16.mxu0 0
        %1266 = vmatpush1.bf16.msra.mxu0 0
        %1267 = vmatprep.mubr.bf16.mxu0 0
        %1268 = vmatmul.mubr.bf16.gmra.mrb[0].mxu0 %v1230
        %v1269 = vpop.f32.mrb[0].mxu0
        %v1270 = vadd.f32 0.0, %v1269
        %v1271 = vpop.f32.mrb[0].mxu0
        %v1272 = vpop.f32.mrb[0].mxu0
        %v1273 = vadd.f32 0.0, %v1272
        %v1274 = vpop.f32.mrb[0].mxu0
        %1275 = vmatprep.mubr.bf16.mxu0 0
        %1276 = vmatmul.mubr.bf16.gmra.mrb[0].mxu0 %v1233
        %v1277 = vpop.f32.mrb[0].mxu0
        %v1278 = vadd.f32 0.0, %v1277
        %v1279 = vpop.f32.mrb[0].mxu0
        %v1280 = vpop.f32.mrb[0].mxu0
        %v1281 = vpop.f32.mrb[0].mxu0
        %1282 = vdwg.mxu0
        %v1283 = vadd.f32 %v1200, %v1270
        %v1284 = vadd.f32 %v1201, %v1273
        %v1285 = vadd.f32 %v1202, %v1278
        %1286 = vst [vmem:[#allocation2] sm:$0xff] %v1283
        %1287 = vst [vmem:[#allocation2 + $0x8] sm:$0xff] %v1284
        %1288 = vst [vmem:[#allocation2 + $0x10] sm:$0xff] %v1285
        %v1289 = vpack.c.bf16 %v1021, %v1015
        %v1290 = vpack.c.bf16 %v1025, %v1025
        %1293 = vrot.lane.b32.xlu0 %v1289, 64
        %v1294 = vpop.permute.xlu0 %1293
        %1295 = vrot.lane.b32.xlu0 %v1290, 64
        %v1296 = vpop.permute.xlu0 %1295
        %v1298 = vsel %vm1037, %v1289, 0
        %v1301 = vsel %vm1037, %v1290, 0
        %v1304 = vsel %vm1037, %v1294, 0
        %v1307 = vsel %vm1037, %v1296, 0
        %1309 = vmatprep.subr.bf16.mxu0 0
        %1310 = vmatpush1.bf16.xpose.msra.mxu0 %v1304
        %1311 = vmatprep.subr.bf16.mxu0 0
        %1312 = vmatpush1.bf16.xpose.msra.mxu0 %v1307
        %1313 = vmatprep.subr.bf16.mxu0 0
        %1314 = vmatpush1.bf16.xpose.msra.mxu0 0
        %1315 = vmatprep.subr.bf16.mxu0 0
        %1316 = vmatpush1.bf16.xpose.msra.mxu0 0
        %1317 = vmatprep.subr.bf16.mxu0 0
        %1318 = vmatpush1.bf16.xpose.msra.mxu0 0
        %1319 = vmatprep.subr.bf16.mxu0 0
        %1320 = vmatpush1.bf16.xpose.msra.mxu0 0
        %1321 = vmatprep.subr.bf16.mxu0 0
        %1322 = vmatpush1.bf16.xpose.msra.mxu0 0
        %1323 = vmatprep.subr.bf16.mxu0 0
        %1324 = vmatpush1.bf16.xpose.msra.mxu0 0
        %1325 = vmatprep.subr.bf16.mxu0 0
        %1326 = vmatpush1.bf16.xpose.msra.mxu0 0
        %1327 = vmatprep.subr.bf16.mxu0 0
        %1328 = vmatpush1.bf16.xpose.msra.mxu0 0
        %1329 = vmatprep.subr.bf16.mxu0 0
        %1330 = vmatpush1.bf16.xpose.msra.mxu0 0
        %1331 = vmatprep.subr.bf16.mxu0 0
        %1332 = vmatpush1.bf16.xpose.msra.mxu0 0
        %1333 = vmatprep.subr.bf16.mxu0 0
        %1334 = vmatpush1.bf16.xpose.msra.mxu0 0
        %1335 = vmatprep.subr.bf16.mxu0 0
        %1336 = vmatpush1.bf16.xpose.msra.mxu0 0
        %1337 = vmatprep.subr.bf16.mxu0 0
        %1338 = vmatpush1.bf16.xpose.msra.mxu0 0
        %1339 = vmatprep.subr.bf16.mxu0 0
        %1340 = vmatpush1.bf16.xpose.msra.mxu0 0
        %1341 = vmatprep.mubr.bf16.mxu0 0
        %1342 = vmatmul.mubr.bf16.gmra.mrb[0].mxu0 %v1298
        %v1343 = vpop.f32.mrb[0].mxu0
        %v1344 = vadd.f32 0.0, %v1343
        %v1345 = vpop.f32.mrb[0].mxu0
        %v1346 = vpop.f32.mrb[0].mxu0
        %v1347 = vadd.f32 0.0, %v1346
        %v1348 = vpop.f32.mrb[0].mxu0
        %1349 = vmatprep.mubr.bf16.mxu0 0
        %1350 = vmatmul.mubr.bf16.gmra.mrb[0].mxu0 %v1301
        %v1351 = vpop.f32.mrb[0].mxu0
        %v1352 = vadd.f32 0.0, %v1351
        %v1353 = vpop.f32.mrb[0].mxu0
        %v1354 = vpop.f32.mrb[0].mxu0
        %v1355 = vpop.f32.mrb[0].mxu0
        %1356 = vdwg.mxu0
        %v1357 = vmul.f32 %v1344, 0.125
        %v1358 = vmul.f32 %v1347, 0.125
        %v1359 = vmul.f32 %v1352, 0.125
        %v1360 = vsel %vm733, %v1357, -1e+30
        %v1361 = vsel %vm733, %v1358, -1e+30
        %v1362 = vsel %vm733, %v1359, -1e+30
        %v1363 = vsel %vm1104, %v1360, -inf
        %1364 = vmax.xlane.f32.xlu0 %v1363
        %v1365 = vpop.xlane.xlu0 %1364
        %v1366 = vsel %vm1104, %v1361, -inf
        %1367 = vmax.xlane.f32.xlu0 %v1366
        %v1368 = vpop.xlane.xlu0 %1367
        %v1369 = vsel %vm1104, %v1362, -inf
        %1370 = vmax.xlane.f32.xlu0 %v1369
        %v1371 = vpop.xlane.xlu0 %1370
        %v1372 = vsub.f32 %v1360, %v1365
        %v1373 = vsub.f32 %v1361, %v1368
        %v1374 = vsub.f32 %v1362, %v1371
        %v1375 = vmul.f32 %v1372, 1.442695
        %v1376 = vpow.pop %v1375
        %v1377 = vmul.f32 %v1373, 1.442695
        %v1378 = vpow.pop %v1377
        %v1379 = vmul.f32 %v1374, 1.442695
        %v1380 = vpow.pop %v1379
        %v1381 = vsel %vm1104, %v1376, 0.0
        %1382 = vadd.xlane.f32.xlu0 %v1381
        %v1383 = vpop.xlane.xlu0 %1382
        %v1384 = vsel %vm1104, %v1378, 0.0
        %1385 = vadd.xlane.f32.xlu0 %v1384
        %v1386 = vpop.xlane.xlu0 %1385
        %v1387 = vsel %vm1104, %v1380, 0.0
        %1388 = vadd.xlane.f32.xlu0 %v1387
        %v1389 = vpop.xlane.xlu0 %1388
        %v1390 = vrcp.pop %v1383
        %v1391 = vrcp.pop %v1386
        %v1392 = vrcp.pop %v1389
        %v1393 = vmul.f32 %v1376, %v1390
        %v1394 = vmul.f32 %v1378, %v1391
        %v1395 = vmul.f32 %v1380, %v1392
        %v1396 = vpack.c.bf16 %v1394, %v1393
        %v1397 = vpack.c.bf16 %v1395, %v1395
        %v1398 = vpack.c.bf16 %v1023, %v1017
        %v1399 = vpack.c.bf16 %v1027, %v1027
        %v1401 = vsel %vm1104, %v1396, 0
        %v1404 = vsel %vm1104, %v1397, 0
        %v1407 = vsel %vm1148, %v1399, 0
        %1409 = vmatprep.subr.bf16.mxu0 0
        %1410 = vmatpush1.bf16.msra.mxu0 %v1398
        %1411 = vmatprep.subr.bf16.mxu0 0
        %1412 = vmatpush1.bf16.msra.mxu0 %v1407
        %1413 = vmatprep.subr.bf16.mxu0 0
        %1414 = vmatpush1.bf16.msra.mxu0 0
        %1415 = vmatprep.subr.bf16.mxu0 0
        %1416 = vmatpush1.bf16.msra.mxu0 0
        %1417 = vmatprep.subr.bf16.mxu0 0
        %1418 = vmatpush1.bf16.msra.mxu0 0
        %1419 = vmatprep.subr.bf16.mxu0 0
        %1420 = vmatpush1.bf16.msra.mxu0 0
        %1421 = vmatprep.subr.bf16.mxu0 0
        %1422 = vmatpush1.bf16.msra.mxu0 0
        %1423 = vmatprep.subr.bf16.mxu0 0
        %1424 = vmatpush1.bf16.msra.mxu0 0
        %1425 = vmatprep.subr.bf16.mxu0 0
        %1426 = vmatpush1.bf16.msra.mxu0 0
        %1427 = vmatprep.subr.bf16.mxu0 0
        %1428 = vmatpush1.bf16.msra.mxu0 0
        %1429 = vmatprep.subr.bf16.mxu0 0
        %1430 = vmatpush1.bf16.msra.mxu0 0
        %1431 = vmatprep.subr.bf16.mxu0 0
        %1432 = vmatpush1.bf16.msra.mxu0 0
        %1433 = vmatprep.subr.bf16.mxu0 0
        %1434 = vmatpush1.bf16.msra.mxu0 0
        %1435 = vmatprep.subr.bf16.mxu0 0
        %1436 = vmatpush1.bf16.msra.mxu0 0
        %1437 = vmatprep.subr.bf16.mxu0 0
        %1438 = vmatpush1.bf16.msra.mxu0 0
        %1439 = vmatprep.subr.bf16.mxu0 0
        %1440 = vmatpush1.bf16.msra.mxu0 0
        %1441 = vmatprep.mubr.bf16.mxu0 0
        %1442 = vmatmul.mubr.bf16.gmra.mrb[0].mxu0 %v1401
        %v1443 = vpop.f32.mrb[0].mxu0
        %v1444 = vadd.f32 0.0, %v1443
        %v1445 = vpop.f32.mrb[0].mxu0
        %v1446 = vpop.f32.mrb[0].mxu0
        %v1447 = vadd.f32 0.0, %v1446
        %v1448 = vpop.f32.mrb[0].mxu0
        %1449 = vmatprep.mubr.bf16.mxu0 0
        %1450 = vmatmul.mubr.bf16.gmra.mrb[0].mxu0 %v1404
        %v1451 = vpop.f32.mrb[0].mxu0
        %v1452 = vadd.f32 0.0, %v1451
        %v1453 = vpop.f32.mrb[0].mxu0
        %v1454 = vpop.f32.mrb[0].mxu0
        %v1455 = vpop.f32.mrb[0].mxu0
        %1456 = vdwg.mxu0
        %v1457 = vld [vmem:[#allocation2 + $0x18] sm:$0xff]
        %v1458 = vld [vmem:[#allocation2 + $0x20] sm:$0xff]
        %v1459 = vld [vmem:[#allocation2 + $0x28] sm:$0xff]
        %v1460 = vpack.c.bf16 %v1447, %v1444
        %v1461 = vpack.c.bf16 %v1452, %v1452
        %v1463 = vsel %vm1037, %v1460, 0
        %v1466 = vsel %vm1037, %v1461, 0
        %1468 = vmatprep.subr.bf16.mxu0 0
        %1469 = vmatpush1.bf16.msra.mxu0 %v1221
        %1470 = vmatprep.subr.bf16.mxu0 0
        %1471 = vmatpush1.bf16.msra.mxu0 %v1222
        %1472 = vmatprep.subr.bf16.mxu0 0
        %1473 = vmatpush1.bf16.msra.mxu0 %v1223
        %1474 = vmatprep.subr.bf16.mxu0 0
        %1475 = vmatpush1.bf16.msra.mxu0 %v1224
        %1476 = vmatprep.subr.bf16.mxu0 0
        %1477 = vmatpush1.bf16.msra.mxu0 0
        %1478 = vmatprep.subr.bf16.mxu0 0
        %1479 = vmatpush1.bf16.msra.mxu0 0
        %1480 = vmatprep.subr.bf16.mxu0 0
        %1481 = vmatpush1.bf16.msra.mxu0 0
        %1482 = vmatprep.subr.bf16.mxu0 0
        %1483 = vmatpush1.bf16.msra.mxu0 0
        %1484 = vmatprep.subr.bf16.mxu0 0
        %1485 = vmatpush1.bf16.msra.mxu0 0
        %1486 = vmatprep.subr.bf16.mxu0 0
        %1487 = vmatpush1.bf16.msra.mxu0 0
        %1488 = vmatprep.subr.bf16.mxu0 0
        %1489 = vmatpush1.bf16.msra.mxu0 0
        %1490 = vmatprep.subr.bf16.mxu0 0
        %1491 = vmatpush1.bf16.msra.mxu0 0
        %1492 = vmatprep.subr.bf16.mxu0 0
        %1493 = vmatpush1.bf16.msra.mxu0 0
        %1494 = vmatprep.subr.bf16.mxu0 0
        %1495 = vmatpush1.bf16.msra.mxu0 0
        %1496 = vmatprep.subr.bf16.mxu0 0
        %1497 = vmatpush1.bf16.msra.mxu0 0
        %1498 = vmatprep.subr.bf16.mxu0 0
        %1499 = vmatpush1.bf16.msra.mxu0 0
        %1500 = vmatprep.mubr.bf16.mxu0 0
        %1501 = vmatmul.mubr.bf16.gmra.mrb[0].mxu0 %v1463
        %v1502 = vpop.f32.mrb[0].mxu0
        %v1503 = vadd.f32 0.0, %v1502
        %v1504 = vpop.f32.mrb[0].mxu0
        %v1505 = vpop.f32.mrb[0].mxu0
        %v1506 = vadd.f32 0.0, %v1505
        %v1507 = vpop.f32.mrb[0].mxu0
        %1508 = vmatprep.mubr.bf16.mxu0 0
        %1509 = vmatmul.mubr.bf16.gmra.mrb[0].mxu0 %v1466
        %v1510 = vpop.f32.mrb[0].mxu0
        %v1511 = vadd.f32 0.0, %v1510
        %v1512 = vpop.f32.mrb[0].mxu0
        %v1513 = vpop.f32.mrb[0].mxu0
        %v1514 = vpop.f32.mrb[0].mxu0
        %1515 = vdwg.mxu0
        %v1516 = vadd.f32 %v1457, %v1503
        %v1517 = vadd.f32 %v1458, %v1506
        %v1518 = vadd.f32 %v1459, %v1511
        %1519 = vst [vmem:[#allocation2 + $0x18] sm:$0xff] %v1516
        %1520 = vst [vmem:[#allocation2 + $0x20] sm:$0xff] %v1517
        %1521 = vst [vmem:[#allocation2 + $0x28] sm:$0xff] %v1518
      $region89: #{dino_featurizer_forward.3} parent=79 // loop_footer
        %s838 = sadd.s32 1, %s834
      $region90: #{dino_featurizer_forward.3} parent=79 // loop_footer_branch
        %833 = sbr.rel target = $region86
      $region91: #{dino_featurizer_forward.3} parent=79 // loop_exit
        _
      %v1522 = vld [vmem:[#allocation2] sm:$0xff]
      %v1523 = vld [vmem:[#allocation2 + $0x8] sm:$0xff]
      %v1524 = vld [vmem:[#allocation2 + $0x10] sm:$0xff]
      %v1525 = vld [vmem:[#allocation2 + $0x18] sm:$0xff]
      %v1526 = vld [vmem:[#allocation2 + $0x20] sm:$0xff]
      %v1527 = vld [vmem:[#allocation2 + $0x28] sm:$0xff]
      %v1528 = vadd.f32 %v725, %v1522
      %v1529 = vadd.f32 %v726, %v1523
      %v1530 = vadd.f32 %v727, %v1524
      %v1531 = vadd.f32 %v728, %v1525
      %v1532 = vadd.f32 %v729, %v1526
      %v1533 = vadd.f32 %v730, %v1527
      %v1534 = vld [vmem:[%s678] sm:$0x1]
      %v1536 = vlaneseq
      %v1537 = vshrl.u32 %v1536, 7
      %v1538 = vsub.s32 0, %v1537
      %v1539 = vrot.slane %v1534, %v1538
      %v1541 = vadd.f32 %v1528, %v1539
      %v1542 = vadd.f32 %v1529, %v1539
      %v1543 = vadd.f32 %v1530, %v1539
      %v1544 = vadd.f32 %v1531, %v1539
      %v1545 = vadd.f32 %v1532, %v1539
      %v1546 = vadd.f32 %v1533, %v1539
      %v1547 = vld [vmem:[%s681] sm:$0x1]
      %v1548 = vld [vmem:[%s684] sm:$0x1]
      %1549 = vadd.xlane.f32.xlu0 %v1541
      %v1550 = vpop.xlane.xlu0 %1549
      %1551 = vadd.xlane.f32.xlu0 %v1542
      %v1552 = vpop.xlane.xlu0 %1551
      %1553 = vadd.xlane.f32.xlu0 %v1543
      %v1554 = vpop.xlane.xlu0 %1553
      %1555 = vadd.xlane.f32.xlu0 %v1544
      %v1556 = vpop.xlane.xlu0 %1555
      %1557 = vadd.xlane.f32.xlu0 %v1545
      %v1558 = vpop.xlane.xlu0 %1557
      %1559 = vadd.xlane.f32.xlu0 %v1546
      %v1560 = vpop.xlane.xlu0 %1559
      %v1561 = vmul.f32 %v1550, %v748
      %v1562 = vmul.f32 %v1552, %v748
      %v1563 = vmul.f32 %v1554, %v748
      %v1564 = vmul.f32 %v1556, %v748
      %v1565 = vmul.f32 %v1558, %v748
      %v1566 = vmul.f32 %v1560, %v748
      %v1567 = vsub.f32 %v1541, %v1561
      %v1568 = vsub.f32 %v1542, %v1562
      %v1569 = vsub.f32 %v1543, %v1563
      %v1570 = vsub.f32 %v1544, %v1564
      %v1571 = vsub.f32 %v1545, %v1565
      %v1572 = vsub.f32 %v1546, %v1566
      %v1573 = vmul.f32 %v1567, %v1567
      %v1574 = vmul.f32 %v1568, %v1568
      %v1575 = vmul.f32 %v1569, %v1569
      %v1576 = vmul.f32 %v1570, %v1570
      %v1577 = vmul.f32 %v1571, %v1571
      %v1578 = vmul.f32 %v1572, %v1572
      %1579 = vadd.xlane.f32.xlu0 %v1573
      %v1580 = vpop.xlane.xlu0 %1579
      %1581 = vadd.xlane.f32.xlu0 %v1574
      %v1582 = vpop.xlane.xlu0 %1581
      %1583 = vadd.xlane.f32.xlu0 %v1575
      %v1584 = vpop.xlane.xlu0 %1583
      %1585 = vadd.xlane.f32.xlu0 %v1576
      %v1586 = vpop.xlane.xlu0 %1585
      %1587 = vadd.xlane.f32.xlu0 %v1577
      %v1588 = vpop.xlane.xlu0 %1587
      %1589 = vadd.xlane.f32.xlu0 %v1578
      %v1590 = vpop.xlane.xlu0 %1589
      %v1591 = vmul.f32 %v1580, %v748
      %v1592 = vmul.f32 %v1582, %v748
      %v1593 = vmul.f32 %v1584, %v748
      %v1594 = vmul.f32 %v1586, %v748
      %v1595 = vmul.f32 %v1588, %v748
      %v1596 = vmul.f32 %v1590, %v748
      %v1597 = vadd.f32 %v1591, 1e-06
      %v1598 = vadd.f32 %v1592, 1e-06
      %v1599 = vadd.f32 %v1593, 1e-06
      %v1600 = vadd.f32 %v1594, 1e-06
      %v1601 = vadd.f32 %v1595, 1e-06
      %v1602 = vadd.f32 %v1596, 1e-06
      %v1603 = vrsqrt.pop %v1597
      %v1604 = vrsqrt.pop %v1598
      %v1605 = vrsqrt.pop %v1599
      %v1606 = vrsqrt.pop %v1600
      %v1607 = vrsqrt.pop %v1601
      %v1608 = vrsqrt.pop %v1602
      %v1609 = vmul.f32 %v1567, %v1603
      %v1610 = vmul.f32 %v1568, %v1604
      %v1611 = vmul.f32 %v1569, %v1605
      %v1612 = vmul.f32 %v1570, %v1606
      %v1613 = vmul.f32 %v1571, %v1607
      %v1614 = vmul.f32 %v1572, %v1608
      %v1616 = vlaneseq
      %v1617 = vshrl.u32 %v1616, 7
      %v1618 = vsub.s32 0, %v1617
      %v1619 = vrot.slane %v1547, %v1618
      %v1621 = vmul.f32 %v1609, %v1619
      %v1622 = vmul.f32 %v1610, %v1619
      %v1623 = vmul.f32 %v1611, %v1619
      %v1624 = vmul.f32 %v1612, %v1619
      %v1625 = vmul.f32 %v1613, %v1619
      %v1626 = vmul.f32 %v1614, %v1619
      %v1628 = vlaneseq
      %v1629 = vshrl.u32 %v1628, 7
      %v1630 = vsub.s32 0, %v1629
      %v1631 = vrot.slane %v1548, %v1630
      %v1633 = vadd.f32 %v1621, %v1631
      %v1634 = vadd.f32 %v1622, %v1631
      %v1635 = vadd.f32 %v1623, %v1631
      %v1636 = vadd.f32 %v1624, %v1631
      %v1637 = vadd.f32 %v1625, %v1631
      %v1638 = vadd.f32 %v1626, %v1631
      %v1639 = vld [vmem:[%s689] sm:$0xff]
      %v1640 = vld [vmem:[%s689 + $0x8] sm:$0xff]
      %v1641 = vld [vmem:[%s689 + $0x10] sm:$0xff]
      %v1642 = vld [vmem:[%s689 + $0x18] sm:$0xff]
      %v1643 = vld [vmem:[%s689 + $0x20] sm:$0xff]
      %v1644 = vld [vmem:[%s689 + $0x28] sm:$0xff]
      %v1645 = vld [vmem:[%s689 + $0x30] sm:$0xff]
      %v1646 = vld [vmem:[%s689 + $0x38] sm:$0xff]
      %v1647 = vld [vmem:[%s689 + $0x40] sm:$0xff]
      %v1648 = vld [vmem:[%s689 + $0x48] sm:$0xff]
      %v1649 = vld [vmem:[%s689 + $0x50] sm:$0xff]
      %v1650 = vld [vmem:[%s689 + $0x58] sm:$0xff]
      %v1651 = vld [vmem:[%s689 + $0x60] sm:$0xff]
      %v1652 = vld [vmem:[%s689 + $0x68] sm:$0xff]
      %v1653 = vld [vmem:[%s689 + $0x70] sm:$0xff]
      %v1654 = vld [vmem:[%s689 + $0x78] sm:$0xff]
      %v1655 = vld [vmem:[%s689 + $0x80] sm:$0xff]
      %v1656 = vld [vmem:[%s689 + $0x88] sm:$0xff]
      %v1657 = vld [vmem:[%s689 + $0x90] sm:$0xff]
      %v1658 = vld [vmem:[%s689 + $0x98] sm:$0xff]
      %v1659 = vld [vmem:[%s689 + $0xa0] sm:$0xff]
      %v1660 = vld [vmem:[%s689 + $0xa8] sm:$0xff]
      %v1661 = vld [vmem:[%s689 + $0xb0] sm:$0xff]
      %v1662 = vld [vmem:[%s689 + $0xb8] sm:$0xff]
      %v1663 = vld [vmem:[%s689 + $0xc0] sm:$0xff]
      %v1664 = vld [vmem:[%s689 + $0xc8] sm:$0xff]
      %v1665 = vld [vmem:[%s689 + $0xd0] sm:$0xff]
      %v1666 = vld [vmem:[%s689 + $0xd8] sm:$0xff]
      %v1667 = vld [vmem:[%s689 + $0xe0] sm:$0xff]
      %v1668 = vld [vmem:[%s689 + $0xe8] sm:$0xff]
      %v1669 = vld [vmem:[%s689 + $0xf0] sm:$0xff]
      %v1670 = vld [vmem:[%s689 + $0xf8] sm:$0xff]
      %v1671 = vpack.c.bf16 %v1634, %v1633
      %v1672 = vpack.c.bf16 %v1636, %v1635
      %v1673 = vpack.c.bf16 %v1638, %v1637
      %v1674 = vld [vmem:[%s693] sm:$0xf]
      %v1676 = vlaneseq
      %v1677 = vshrl.u32 %v1676, 7
      %v1678 = vsub.s32 0, %v1677
      %v1679 = vrot.slane %v1674, %v1678
      %v1680 = vlaneseq
      %v1681 = vshrl.u32 %v1680, 7
      %v1682 = vsub.s32 1, %v1681
      %v1683 = vrot.slane %v1674, %v1682
      %v1684 = vlaneseq
      %v1685 = vshrl.u32 %v1684, 7
      %v1686 = vsub.s32 2, %v1685
      %v1687 = vrot.slane %v1674, %v1686
      %v1688 = vlaneseq
      %v1689 = vshrl.u32 %v1688, 7
      %v1690 = vsub.s32 3, %v1689
      %v1691 = vrot.slane %v1674, %v1690
      %v1728 = vunpack.c.l.b16 %v1639
      %v1729 = vunpack.c.h.b16 %v1639
      %v1730 = vunpack.c.l.b16 %v1640
      %v1731 = vunpack.c.h.b16 %v1640
      %v1732 = vunpack.c.l.b16 %v1641
      %v1733 = vunpack.c.h.b16 %v1641
      %v1734 = vunpack.c.l.b16 %v1642
      %v1735 = vunpack.c.h.b16 %v1642
      %v1736 = vunpack.c.l.b16 %v1643
      %v1737 = vunpack.c.h.b16 %v1643
      %v1738 = vunpack.c.l.b16 %v1644
      %v1739 = vunpack.c.h.b16 %v1644
      %v1740 = vunpack.c.l.b16 %v1645
      %v1741 = vunpack.c.h.b16 %v1645
      %v1742 = vunpack.c.l.b16 %v1646
      %v1743 = vunpack.c.h.b16 %v1646
      %v1744 = vunpack.c.l.b16 %v1647
      %v1745 = vunpack.c.h.b16 %v1647
      %v1746 = vunpack.c.l.b16 %v1648
      %v1747 = vunpack.c.h.b16 %v1648
      %v1748 = vunpack.c.l.b16 %v1649
      %v1749 = vunpack.c.h.b16 %v1649
      %v1750 = vunpack.c.l.b16 %v1650
      %v1751 = vunpack.c.h.b16 %v1650
      %v1752 = vunpack.c.l.b16 %v1651
      %v1753 = vunpack.c.h.b16 %v1651
      %v1754 = vunpack.c.l.b16 %v1652
      %v1755 = vunpack.c.h.b16 %v1652
      %v1756 = vunpack.c.l.b16 %v1653
      %v1757 = vunpack.c.h.b16 %v1653
      %v1758 = vunpack.c.l.b16 %v1654
      %v1759 = vunpack.c.h.b16 %v1654
      %v1760 = vunpack.c.l.b16 %v1655
      %v1761 = vunpack.c.h.b16 %v1655
      %v1762 = vunpack.c.l.b16 %v1656
      %v1763 = vunpack.c.h.b16 %v1656
      %v1764 = vunpack.c.l.b16 %v1657
      %v1765 = vunpack.c.h.b16 %v1657
      %v1766 = vunpack.c.l.b16 %v1658
      %v1767 = vunpack.c.h.b16 %v1658
      %v1768 = vunpack.c.l.b16 %v1659
      %v1769 = vunpack.c.h.b16 %v1659
      %v1770 = vunpack.c.l.b16 %v1660
      %v1771 = vunpack.c.h.b16 %v1660
      %v1772 = vunpack.c.l.b16 %v1661
      %v1773 = vunpack.c.h.b16 %v1661
      %v1774 = vunpack.c.l.b16 %v1662
      %v1775 = vunpack.c.h.b16 %v1662
      %v1776 = vunpack.c.l.b16 %v1663
      %v1777 = vunpack.c.h.b16 %v1663
      %v1778 = vunpack.c.l.b16 %v1664
      %v1779 = vunpack.c.h.b16 %v1664
      %v1780 = vunpack.c.l.b16 %v1665
      %v1781 = vunpack.c.h.b16 %v1665
      %v1782 = vunpack.c.l.b16 %v1666
      %v1783 = vunpack.c.h.b16 %v1666
      %v1784 = vunpack.c.l.b16 %v1667
      %v1785 = vunpack.c.h.b16 %v1667
      %v1786 = vunpack.c.l.b16 %v1668
      %v1787 = vunpack.c.h.b16 %v1668
      %v1788 = vunpack.c.l.b16 %v1669
      %v1789 = vunpack.c.h.b16 %v1669
      %v1790 = vunpack.c.l.b16 %v1670
      %v1791 = vunpack.c.h.b16 %v1670
      %v1792 = vpack.c.b16 %v1732, %v1728
      %v1793 = vpack.c.b16 %v1733, %v1729
      %v1794 = vpack.c.b16 %v1734, %v1730
      %v1795 = vpack.c.b16 %v1735, %v1731
      %v1796 = vpack.c.b16 %v1740, %v1736
      %v1797 = vpack.c.b16 %v1741, %v1737
      %v1798 = vpack.c.b16 %v1742, %v1738
      %v1799 = vpack.c.b16 %v1743, %v1739
      %v1800 = vpack.c.b16 %v1748, %v1744
      %v1801 = vpack.c.b16 %v1749, %v1745
      %v1802 = vpack.c.b16 %v1750, %v1746
      %v1803 = vpack.c.b16 %v1751, %v1747
      %v1804 = vpack.c.b16 %v1756, %v1752
      %v1805 = vpack.c.b16 %v1757, %v1753
      %v1806 = vpack.c.b16 %v1758, %v1754
      %v1807 = vpack.c.b16 %v1759, %v1755
      %v1808 = vpack.c.b16 %v1764, %v1760
      %v1809 = vpack.c.b16 %v1765, %v1761
      %v1810 = vpack.c.b16 %v1766, %v1762
      %v1811 = vpack.c.b16 %v1767, %v1763
      %v1812 = vpack.c.b16 %v1772, %v1768
      %v1813 = vpack.c.b16 %v1773, %v1769
      %v1814 = vpack.c.b16 %v1774, %v1770
      %v1815 = vpack.c.b16 %v1775, %v1771
      %v1816 = vpack.c.b16 %v1780, %v1776
      %v1817 = vpack.c.b16 %v1781, %v1777
      %v1818 = vpack.c.b16 %v1782, %v1778
      %v1819 = vpack.c.b16 %v1783, %v1779
      %v1820 = vpack.c.b16 %v1788, %v1784
      %v1821 = vpack.c.b16 %v1789, %v1785
      %v1822 = vpack.c.b16 %v1790, %v1786
      %v1823 = vpack.c.b16 %v1791, %v1787
      %1856 = vmatprep.subr.bf16.mxu0 %v1793
      %1857 = vmatpush1.bf16.msra.mxu0 %v1792
      %1858 = vmatprep.subr.bf16.mxu0 %v1797
      %1859 = vmatpush1.bf16.msra.mxu0 %v1796
      %1860 = vmatprep.subr.bf16.mxu0 %v1801
      %1861 = vmatpush1.bf16.msra.mxu0 %v1800
      %1862 = vmatprep.subr.bf16.mxu0 %v1805
      %1863 = vmatpush1.bf16.msra.mxu0 %v1804
      %1864 = vmatprep.subr.bf16.mxu0 %v1809
      %1865 = vmatpush1.bf16.msra.mxu0 %v1808
      %1866 = vmatprep.subr.bf16.mxu0 %v1813
      %1867 = vmatpush1.bf16.msra.mxu0 %v1812
      %1868 = vmatprep.subr.bf16.mxu0 %v1817
      %1869 = vmatpush1.bf16.msra.mxu0 %v1816
      %1870 = vmatprep.subr.bf16.mxu0 %v1821
      %1871 = vmatpush1.bf16.msra.mxu0 %v1820
      %1872 = vmatprep.subr.bf16.mxu0 0
      %1873 = vmatpush1.bf16.msra.mxu0 0
      %1874 = vmatprep.subr.bf16.mxu0 0
      %1875 = vmatpush1.bf16.msra.mxu0 0
      %1876 = vmatprep.subr.bf16.mxu0 0
      %1877 = vmatpush1.bf16.msra.mxu0 0
      %1878 = vmatprep.subr.bf16.mxu0 0
      %1879 = vmatpush1.bf16.msra.mxu0 0
      %1880 = vmatprep.subr.bf16.mxu0 0
      %1881 = vmatpush1.bf16.msra.mxu0 0
      %1882 = vmatprep.subr.bf16.mxu0 0
      %1883 = vmatpush1.bf16.msra.mxu0 0
      %1884 = vmatprep.subr.bf16.mxu0 0
      %1885 = vmatpush1.bf16.msra.mxu0 0
      %1886 = vmatprep.subr.bf16.mxu0 0
      %1887 = vmatpush1.bf16.msra.mxu0 0
      %1888 = vmatprep.mubr.bf16.mxu0 0
      %1889 = vmatmul.mubr.bf16.gmra.mrb[0].mxu0 %v1671
      %v1890 = vpop.f32.mrb[0].mxu0
      %v1891 = vadd.f32 %v1679, %v1890
      %v1892 = vpop.f32.mrb[0].mxu0
      %v1893 = vadd.f32 %v1683, %v1892
      %v1894 = vpop.f32.mrb[0].mxu0
      %v1895 = vadd.f32 %v1679, %v1894
      %v1896 = vpop.f32.mrb[0].mxu0
      %v1897 = vadd.f32 %v1683, %v1896
      %1898 = vmatprep.mubr.bf16.mxu0 0
      %1899 = vmatmul.mubr.bf16.gmra.mrb[0].mxu0 %v1672
      %v1900 = vpop.f32.mrb[0].mxu0
      %v1901 = vadd.f32 %v1679, %v1900
      %v1902 = vpop.f32.mrb[0].mxu0
      %v1903 = vadd.f32 %v1683, %v1902
      %v1904 = vpop.f32.mrb[0].mxu0
      %v1905 = vadd.f32 %v1679, %v1904
      %v1906 = vpop.f32.mrb[0].mxu0
      %v1907 = vadd.f32 %v1683, %v1906
      %1908 = vmatprep.mubr.bf16.mxu0 0
      %1909 = vmatmul.mubr.bf16.gmra.mrb[0].mxu0 %v1673
      %v1910 = vpop.f32.mrb[0].mxu0
      %v1911 = vadd.f32 %v1679, %v1910
      %v1912 = vpop.f32.mrb[0].mxu0
      %v1913 = vadd.f32 %v1683, %v1912
      %v1914 = vpop.f32.mrb[0].mxu0
      %v1915 = vadd.f32 %v1679, %v1914
      %v1916 = vpop.f32.mrb[0].mxu0
      %v1917 = vadd.f32 %v1683, %v1916
      %1918 = vdwg.mxu0
      %1919 = vmatprep.subr.bf16.mxu0 %v1795
      %1920 = vmatpush1.bf16.msra.mxu0 %v1794
      %1921 = vmatprep.subr.bf16.mxu0 %v1799
      %1922 = vmatpush1.bf16.msra.mxu0 %v1798
      %1923 = vmatprep.subr.bf16.mxu0 %v1803
      %1924 = vmatpush1.bf16.msra.mxu0 %v1802
      %1925 = vmatprep.subr.bf16.mxu0 %v1807
      %1926 = vmatpush1.bf16.msra.mxu0 %v1806
      %1927 = vmatprep.subr.bf16.mxu0 %v1811
      %1928 = vmatpush1.bf16.msra.mxu0 %v1810
      %1929 = vmatprep.subr.bf16.mxu0 %v1815
      %1930 = vmatpush1.bf16.msra.mxu0 %v1814
      %1931 = vmatprep.subr.bf16.mxu0 %v1819
      %1932 = vmatpush1.bf16.msra.mxu0 %v1818
      %1933 = vmatprep.subr.bf16.mxu0 %v1823
      %1934 = vmatpush1.bf16.msra.mxu0 %v1822
      %1935 = vmatprep.subr.bf16.mxu0 0
      %1936 = vmatpush1.bf16.msra.mxu0 0
      %1937 = vmatprep.subr.bf16.mxu0 0
      %1938 = vmatpush1.bf16.msra.mxu0 0
      %1939 = vmatprep.subr.bf16.mxu0 0
      %1940 = vmatpush1.bf16.msra.mxu0 0
      %1941 = vmatprep.subr.bf16.mxu0 0
      %1942 = vmatpush1.bf16.msra.mxu0 0
      %1943 = vmatprep.subr.bf16.mxu0 0
      %1944 = vmatpush1.bf16.msra.mxu0 0
      %1945 = vmatprep.subr.bf16.mxu0 0
      %1946 = vmatpush1.bf16.msra.mxu0 0
      %1947 = vmatprep.subr.bf16.mxu0 0
      %1948 = vmatpush1.bf16.msra.mxu0 0
      %1949 = vmatprep.subr.bf16.mxu0 0
      %1950 = vmatpush1.bf16.msra.mxu0 0
      %1951 = vmatprep.mubr.bf16.mxu0 0
      %1952 = vmatmul.mubr.bf16.gmra.mrb[0].mxu0 %v1671
      %v1953 = vpop.f32.mrb[0].mxu0
      %v1954 = vadd.f32 %v1687, %v1953
      %v1955 = vpop.f32.mrb[0].mxu0
      %v1956 = vadd.f32 %v1691, %v1955
      %v1957 = vpop.f32.mrb[0].mxu0
      %v1958 = vadd.f32 %v1687, %v1957
      %v1959 = vpop.f32.mrb[0].mxu0
      %v1960 = vadd.f32 %v1691, %v1959
      %1961 = vmatprep.mubr.bf16.mxu0 0
      %1962 = vmatmul.mubr.bf16.gmra.mrb[0].mxu0 %v1672
      %v1963 = vpop.f32.mrb[0].mxu0
      %v1964 = vadd.f32 %v1687, %v1963
      %v1965 = vpop.f32.mrb[0].mxu0
      %v1966 = vadd.f32 %v1691, %v1965
      %v1967 = vpop.f32.mrb[0].mxu0
      %v1968 = vadd.f32 %v1687, %v1967
      %v1969 = vpop.f32.mrb[0].mxu0
      %v1970 = vadd.f32 %v1691, %v1969
      %1971 = vmatprep.mubr.bf16.mxu0 0
      %1972 = vmatmul.mubr.bf16.gmra.mrb[0].mxu0 %v1673
      %v1973 = vpop.f32.mrb[0].mxu0
      %v1974 = vadd.f32 %v1687, %v1973
      %v1975 = vpop.f32.mrb[0].mxu0
      %v1976 = vadd.f32 %v1691, %v1975
      %v1977 = vpop.f32.mrb[0].mxu0
      %v1978 = vadd.f32 %v1687, %v1977
      %v1979 = vpop.f32.mrb[0].mxu0
      %v1980 = vadd.f32 %v1691, %v1979
      %1981 = vdwg.mxu0
      %v1982 = vmul.f32 %v1891, 0.5
      %v1983 = vmul.f32 %v1893, 0.5
      %v1984 = vmul.f32 %v1954, 0.5
      %v1985 = vmul.f32 %v1956, 0.5
      %v1986 = vmul.f32 %v1895, 0.5
      %v1987 = vmul.f32 %v1897, 0.5
      %v1988 = vmul.f32 %v1958, 0.5
      %v1989 = vmul.f32 %v1960, 0.5
      %v1990 = vmul.f32 %v1901, 0.5
      %v1991 = vmul.f32 %v1903, 0.5
      %v1992 = vmul.f32 %v1964, 0.5
      %v1993 = vmul.f32 %v1966, 0.5
      %v1994 = vmul.f32 %v1905, 0.5
      %v1995 = vmul.f32 %v1907, 0.5
      %v1996 = vmul.f32 %v1968, 0.5
      %v1997 = vmul.f32 %v1970, 0.5
      %v1998 = vmul.f32 %v1911, 0.5
      %v1999 = vmul.f32 %v1913, 0.5
      %v2000 = vmul.f32 %v1974, 0.5
      %v2001 = vmul.f32 %v1976, 0.5
      %v2002 = vmul.f32 %v1915, 0.5
      %v2003 = vmul.f32 %v1917, 0.5
      %v2004 = vmul.f32 %v1978, 0.5
      %v2005 = vmul.f32 %v1980, 0.5
      %v2006 = vmul.f32 %v1891, 0.044715
      %v2007 = vmul.f32 %v1893, 0.044715
      %v2008 = vmul.f32 %v1954, 0.044715
      %v2009 = vmul.f32 %v1956, 0.044715
      %v2010 = vmul.f32 %v1895, 0.044715
      %v2011 = vmul.f32 %v1897, 0.044715
      %v2012 = vmul.f32 %v1958, 0.044715
      %v2013 = vmul.f32 %v1960, 0.044715
      %v2014 = vmul.f32 %v1901, 0.044715
      %v2015 = vmul.f32 %v1903, 0.044715
      %v2016 = vmul.f32 %v1964, 0.044715
      %v2017 = vmul.f32 %v1966, 0.044715
      %v2018 = vmul.f32 %v1905, 0.044715
      %v2019 = vmul.f32 %v1907, 0.044715
      %v2020 = vmul.f32 %v1968, 0.044715
      %v2021 = vmul.f32 %v1970, 0.044715
      %v2022 = vmul.f32 %v1911, 0.044715
      %v2023 = vmul.f32 %v1913, 0.044715
      %v2024 = vmul.f32 %v1974, 0.044715
      %v2025 = vmul.f32 %v1976, 0.044715
      %v2026 = vmul.f32 %v1915, 0.044715
      %v2027 = vmul.f32 %v1917, 0.044715
      %v2028 = vmul.f32 %v1978, 0.044715
      %v2029 = vmul.f32 %v1980, 0.044715
      %v2030 = vmul.f32 %v2006, %v1891
      %v2031 = vmul.f32 %v2007, %v1893
      %v2032 = vmul.f32 %v2008, %v1954
      %v2033 = vmul.f32 %v2009, %v1956
      %v2034 = vmul.f32 %v2010, %v1895
      %v2035 = vmul.f32 %v2011, %v1897
      %v2036 = vmul.f32 %v2012, %v1958
      %v2037 = vmul.f32 %v2013, %v1960
      %v2038 = vmul.f32 %v2014, %v1901
      %v2039 = vmul.f32 %v2015, %v1903
      %v2040 = vmul.f32 %v2016, %v1964
      %v2041 = vmul.f32 %v2017, %v1966
      %v2042 = vmul.f32 %v2018, %v1905
      %v2043 = vmul.f32 %v2019, %v1907
      %v2044 = vmul.f32 %v2020, %v1968
      %v2045 = vmul.f32 %v2021, %v1970
      %v2046 = vmul.f32 %v2022, %v1911
      %v2047 = vmul.f32 %v2023, %v1913
      %v2048 = vmul.f32 %v2024, %v1974
      %v2049 = vmul.f32 %v2025, %v1976
      %v2050 = vmul.f32 %v2026, %v1915
      %v2051 = vmul.f32 %v2027, %v1917
      %v2052 = vmul.f32 %v2028, %v1978
      %v2053 = vmul.f32 %v2029, %v1980
      %v2054 = vmul.f32 %v2030, %v1891
      %v2055 = vmul.f32 %v2031, %v1893
      %v2056 = vmul.f32 %v2032, %v1954
      %v2057 = vmul.f32 %v2033, %v1956
      %v2058 = vmul.f32 %v2034, %v1895
      %v2059 = vmul.f32 %v2035, %v1897
      %v2060 = vmul.f32 %v2036, %v1958
      %v2061 = vmul.f32 %v2037, %v1960
      %v2062 = vmul.f32 %v2038, %v1901
      %v2063 = vmul.f32 %v2039, %v1903
      %v2064 = vmul.f32 %v2040, %v1964
      %v2065 = vmul.f32 %v2041, %v1966
      %v2066 = vmul.f32 %v2042, %v1905
      %v2067 = vmul.f32 %v2043, %v1907
      %v2068 = vmul.f32 %v2044, %v1968
      %v2069 = vmul.f32 %v2045, %v1970
      %v2070 = vmul.f32 %v2046, %v1911
      %v2071 = vmul.f32 %v2047, %v1913
      %v2072 = vmul.f32 %v2048, %v1974
      %v2073 = vmul.f32 %v2049, %v1976
      %v2074 = vmul.f32 %v2050, %v1915
      %v2075 = vmul.f32 %v2051, %v1917
      %v2076 = vmul.f32 %v2052, %v1978
      %v2077 = vmul.f32 %v2053, %v1980
      %v2078 = vadd.f32 %v1891, %v2054
      %v2079 = vadd.f32 %v1893, %v2055
      %v2080 = vadd.f32 %v1954, %v2056
      %v2081 = vadd.f32 %v1956, %v2057
      %v2082 = vadd.f32 %v1895, %v2058
      %v2083 = vadd.f32 %v1897, %v2059
      %v2084 = vadd.f32 %v1958, %v2060
      %v2085 = vadd.f32 %v1960, %v2061
      %v2086 = vadd.f32 %v1901, %v2062
      %v2087 = vadd.f32 %v1903, %v2063
      %v2088 = vadd.f32 %v1964, %v2064
      %v2089 = vadd.f32 %v1966, %v2065
      %v2090 = vadd.f32 %v1905, %v2066
      %v2091 = vadd.f32 %v1907, %v2067
      %v2092 = vadd.f32 %v1968, %v2068
      %v2093 = vadd.f32 %v1970, %v2069
      %v2094 = vadd.f32 %v1911, %v2070
      %v2095 = vadd.f32 %v1913, %v2071
      %v2096 = vadd.f32 %v1974, %v2072
      %v2097 = vadd.f32 %v1976, %v2073
      %v2098 = vadd.f32 %v1915, %v2074
      %v2099 = vadd.f32 %v1917, %v2075
      %v2100 = vadd.f32 %v1978, %v2076
      %v2101 = vadd.f32 %v1980, %v2077
      %v2102 = vmul.f32 %v2078, 0.7978846
      %v2103 = vmul.f32 %v2079, 0.7978846
      %v2104 = vmul.f32 %v2080, 0.7978846
      %v2105 = vmul.f32 %v2081, 0.7978846
      %v2106 = vmul.f32 %v2082, 0.7978846
      %v2107 = vmul.f32 %v2083, 0.7978846
      %v2108 = vmul.f32 %v2084, 0.7978846
      %v2109 = vmul.f32 %v2085, 0.7978846
      %v2110 = vmul.f32 %v2086, 0.7978846
      %v2111 = vmul.f32 %v2087, 0.7978846
      %v2112 = vmul.f32 %v2088, 0.7978846
      %v2113 = vmul.f32 %v2089, 0.7978846
      %v2114 = vmul.f32 %v2090, 0.7978846
      %v2115 = vmul.f32 %v2091, 0.7978846
      %v2116 = vmul.f32 %v2092, 0.7978846
      %v2117 = vmul.f32 %v2093, 0.7978846
      %v2118 = vmul.f32 %v2094, 0.7978846
      %v2119 = vmul.f32 %v2095, 0.7978846
      %v2120 = vmul.f32 %v2096, 0.7978846
      %v2121 = vmul.f32 %v2097, 0.7978846
      %v2122 = vmul.f32 %v2098, 0.7978846
      %v2123 = vmul.f32 %v2099, 0.7978846
      %v2124 = vmul.f32 %v2100, 0.7978846
      %v2125 = vmul.f32 %v2101, 0.7978846
      %v2126 = vtanh.pop %v2102
      %v2127 = vtanh.pop %v2103
      %v2128 = vtanh.pop %v2104
      %v2129 = vtanh.pop %v2105
      %v2130 = vtanh.pop %v2106
      %v2131 = vtanh.pop %v2107
      %v2132 = vtanh.pop %v2108
      %v2133 = vtanh.pop %v2109
      %v2134 = vtanh.pop %v2110
      %v2135 = vtanh.pop %v2111
      %v2136 = vtanh.pop %v2112
      %v2137 = vtanh.pop %v2113
      %v2138 = vtanh.pop %v2114
      %v2139 = vtanh.pop %v2115
      %v2140 = vtanh.pop %v2116
      %v2141 = vtanh.pop %v2117
      %v2142 = vtanh.pop %v2118
      %v2143 = vtanh.pop %v2119
      %v2144 = vtanh.pop %v2120
      %v2145 = vtanh.pop %v2121
      %v2146 = vtanh.pop %v2122
      %v2147 = vtanh.pop %v2123
      %v2148 = vtanh.pop %v2124
      %v2149 = vtanh.pop %v2125
      %v2150 = vadd.f32 %v2126, 1.0
      %v2151 = vadd.f32 %v2127, 1.0
      %v2152 = vadd.f32 %v2128, 1.0
      %v2153 = vadd.f32 %v2129, 1.0
      %v2154 = vadd.f32 %v2130, 1.0
      %v2155 = vadd.f32 %v2131, 1.0
      %v2156 = vadd.f32 %v2132, 1.0
      %v2157 = vadd.f32 %v2133, 1.0
      %v2158 = vadd.f32 %v2134, 1.0
      %v2159 = vadd.f32 %v2135, 1.0
      %v2160 = vadd.f32 %v2136, 1.0
      %v2161 = vadd.f32 %v2137, 1.0
      %v2162 = vadd.f32 %v2138, 1.0
      %v2163 = vadd.f32 %v2139, 1.0
      %v2164 = vadd.f32 %v2140, 1.0
      %v2165 = vadd.f32 %v2141, 1.0
      %v2166 = vadd.f32 %v2142, 1.0
      %v2167 = vadd.f32 %v2143, 1.0
      %v2168 = vadd.f32 %v2144, 1.0
      %v2169 = vadd.f32 %v2145, 1.0
      %v2170 = vadd.f32 %v2146, 1.0
      %v2171 = vadd.f32 %v2147, 1.0
      %v2172 = vadd.f32 %v2148, 1.0
      %v2173 = vadd.f32 %v2149, 1.0
      %v2174 = vmul.f32 %v1982, %v2150
      %v2175 = vmul.f32 %v1983, %v2151
      %v2176 = vmul.f32 %v1984, %v2152
      %v2177 = vmul.f32 %v1985, %v2153
      %v2178 = vmul.f32 %v1986, %v2154
      %v2179 = vmul.f32 %v1987, %v2155
      %v2180 = vmul.f32 %v1988, %v2156
      %v2181 = vmul.f32 %v1989, %v2157
      %v2182 = vmul.f32 %v1990, %v2158
      %v2183 = vmul.f32 %v1991, %v2159
      %v2184 = vmul.f32 %v1992, %v2160
      %v2185 = vmul.f32 %v1993, %v2161
      %v2186 = vmul.f32 %v1994, %v2162
      %v2187 = vmul.f32 %v1995, %v2163
      %v2188 = vmul.f32 %v1996, %v2164
      %v2189 = vmul.f32 %v1997, %v2165
      %v2190 = vmul.f32 %v1998, %v2166
      %v2191 = vmul.f32 %v1999, %v2167
      %v2192 = vmul.f32 %v2000, %v2168
      %v2193 = vmul.f32 %v2001, %v2169
      %v2194 = vmul.f32 %v2002, %v2170
      %v2195 = vmul.f32 %v2003, %v2171
      %v2196 = vmul.f32 %v2004, %v2172
      %v2197 = vmul.f32 %v2005, %v2173
      %v2198 = vld [vmem:[%s698] sm:$0xf]
      %v2199 = vld [vmem:[%s698 + $0x4] sm:$0xf]
      %v2200 = vld [vmem:[%s698 + $0x8] sm:$0xf]
      %v2201 = vld [vmem:[%s698 + $0xc] sm:$0xf]
      %v2202 = vld [vmem:[%s698 + $0x10] sm:$0xf]
      %v2203 = vld [vmem:[%s698 + $0x14] sm:$0xf]
      %v2204 = vld [vmem:[%s698 + $0x18] sm:$0xf]
      %v2205 = vld [vmem:[%s698 + $0x1c] sm:$0xf]
      %v2206 = vld [vmem:[%s698 + $0x20] sm:$0xf]
      %v2207 = vld [vmem:[%s698 + $0x24] sm:$0xf]
      %v2208 = vld [vmem:[%s698 + $0x28] sm:$0xf]
      %v2209 = vld [vmem:[%s698 + $0x2c] sm:$0xf]
      %v2210 = vld [vmem:[%s698 + $0x30] sm:$0xf]
      %v2211 = vld [vmem:[%s698 + $0x34] sm:$0xf]
      %v2212 = vld [vmem:[%s698 + $0x38] sm:$0xf]
      %v2213 = vld [vmem:[%s698 + $0x3c] sm:$0xf]
      %v2214 = vld [vmem:[%s698 + $0x40] sm:$0xf]
      %v2215 = vld [vmem:[%s698 + $0x44] sm:$0xf]
      %v2216 = vld [vmem:[%s698 + $0x48] sm:$0xf]
      %v2217 = vld [vmem:[%s698 + $0x4c] sm:$0xf]
      %v2218 = vld [vmem:[%s698 + $0x50] sm:$0xf]
      %v2219 = vld [vmem:[%s698 + $0x54] sm:$0xf]
      %v2220 = vld [vmem:[%s698 + $0x58] sm:$0xf]
      %v2221 = vld [vmem:[%s698 + $0x5c] sm:$0xf]
      %v2222 = vld [vmem:[%s698 + $0x60] sm:$0xf]
      %v2223 = vld [vmem:[%s698 + $0x64] sm:$0xf]
      %v2224 = vld [vmem:[%s698 + $0x68] sm:$0xf]
      %v2225 = vld [vmem:[%s698 + $0x6c] sm:$0xf]
      %v2226 = vld [vmem:[%s698 + $0x70] sm:$0xf]
      %v2227 = vld [vmem:[%s698 + $0x74] sm:$0xf]
      %v2228 = vld [vmem:[%s698 + $0x78] sm:$0xf]
      %v2229 = vld [vmem:[%s698 + $0x7c] sm:$0xf]
      %v2230 = vld [vmem:[%s698 + $0x80] sm:$0xf]
      %v2231 = vld [vmem:[%s698 + $0x84] sm:$0xf]
      %v2232 = vld [vmem:[%s698 + $0x88] sm:$0xf]
      %v2233 = vld [vmem:[%s698 + $0x8c] sm:$0xf]
      %v2234 = vld [vmem:[%s698 + $0x90] sm:$0xf]
      %v2235 = vld [vmem:[%s698 + $0x94] sm:$0xf]
      %v2236 = vld [vmem:[%s698 + $0x98] sm:$0xf]
      %v2237 = vld [vmem:[%s698 + $0x9c] sm:$0xf]
      %v2238 = vld [vmem:[%s698 + $0xa0] sm:$0xf]
      %v2239 = vld [vmem:[%s698 + $0xa4] sm:$0xf]
      %v2240 = vld [vmem:[%s698 + $0xa8] sm:$0xf]
      %v2241 = vld [vmem:[%s698 + $0xac] sm:$0xf]
      %v2242 = vld [vmem:[%s698 + $0xb0] sm:$0xf]
      %v2243 = vld [vmem:[%s698 + $0xb4] sm:$0xf]
      %v2244 = vld [vmem:[%s698 + $0xb8] sm:$0xf]
      %v2245 = vld [vmem:[%s698 + $0xbc] sm:$0xf]
      %v2246 = vld [vmem:[%s698 + $0xc0] sm:$0xf]
      %v2247 = vld [vmem:[%s698 + $0xc4] sm:$0xf]
      %v2248 = vld [vmem:[%s698 + $0xc8] sm:$0xf]
      %v2249 = vld [vmem:[%s698 + $0xcc] sm:$0xf]
      %v2250 = vld [vmem:[%s698 + $0xd0] sm:$0xf]
      %v2251 = vld [vmem:[%s698 + $0xd4] sm:$0xf]
      %v2252 = vld [vmem:[%s698 + $0xd8] sm:$0xf]
      %v2253 = vld [vmem:[%s698 + $0xdc] sm:$0xf]
      %v2254 = vld [vmem:[%s698 + $0xe0] sm:$0xf]
      %v2255 = vld [vmem:[%s698 + $0xe4] sm:$0xf]
      %v2256 = vld [vmem:[%s698 + $0xe8] sm:$0xf]
      %v2257 = vld [vmem:[%s698 + $0xec] sm:$0xf]
      %v2258 = vld [vmem:[%s698 + $0xf0] sm:$0xf]
      %v2259 = vld [vmem:[%s698 + $0xf4] sm:$0xf]
      %v2260 = vld [vmem:[%s698 + $0xf8] sm:$0xf]
      %v2261 = vld [vmem:[%s698 + $0xfc] sm:$0xf]
      %v2262 = vpack.c.bf16 %v2178, %v2174
      %v2263 = vpack.c.bf16 %v2179, %v2175
      %v2264 = vpack.c.bf16 %v2180, %v2176
      %v2265 = vpack.c.bf16 %v2181, %v2177
      %v2266 = vpack.c.bf16 %v2186, %v2182
      %v2267 = vpack.c.bf16 %v2187, %v2183
      %v2268 = vpack.c.bf16 %v2188, %v2184
      %v2269 = vpack.c.bf16 %v2189, %v2185
      %v2270 = vpack.c.bf16 %v2194, %v2190
      %v2271 = vpack.c.bf16 %v2195, %v2191
      %v2272 = vpack.c.bf16 %v2196, %v2192
      %v2273 = vpack.c.bf16 %v2197, %v2193
      %v2338 = vunpack.c.l.b16 %v2198
      %v2339 = vunpack.c.l.b16 %v2199
      %v2340 = vunpack.c.l.b16 %v2200
      %v2341 = vunpack.c.l.b16 %v2201
      %v2342 = vunpack.c.l.b16 %v2202
      %v2343 = vunpack.c.l.b16 %v2203
      %v2344 = vunpack.c.l.b16 %v2204
      %v2345 = vunpack.c.l.b16 %v2205
      %v2346 = vunpack.c.l.b16 %v2206
      %v2347 = vunpack.c.l.b16 %v2207
      %v2348 = vunpack.c.l.b16 %v2208
      %v2349 = vunpack.c.l.b16 %v2209
      %v2350 = vunpack.c.l.b16 %v2210
      %v2351 = vunpack.c.l.b16 %v2211
      %v2352 = vunpack.c.l.b16 %v2212
      %v2353 = vunpack.c.l.b16 %v2213
      %v2354 = vunpack.c.l.b16 %v2214
      %v2355 = vunpack.c.l.b16 %v2215
      %v2356 = vunpack.c.l.b16 %v2216
      %v2357 = vunpack.c.l.b16 %v2217
      %v2358 = vunpack.c.l.b16 %v2218
      %v2359 = vunpack.c.l.b16 %v2219
      %v2360 = vunpack.c.l.b16 %v2220
      %v2361 = vunpack.c.l.b16 %v2221
      %v2362 = vunpack.c.l.b16 %v2222
      %v2363 = vunpack.c.l.b16 %v2223
      %v2364 = vunpack.c.l.b16 %v2224
      %v2365 = vunpack.c.l.b16 %v2225
      %v2366 = vunpack.c.l.b16 %v2226
      %v2367 = vunpack.c.l.b16 %v2227
      %v2368 = vunpack.c.l.b16 %v2228
      %v2369 = vunpack.c.l.b16 %v2229
      %v2370 = vunpack.c.l.b16 %v2230
      %v2371 = vunpack.c.l.b16 %v2231
      %v2372 = vunpack.c.l.b16 %v2232
      %v2373 = vunpack.c.l.b16 %v2233
      %v2374 = vunpack.c.l.b16 %v2234
      %v2375 = vunpack.c.l.b16 %v2235
      %v2376 = vunpack.c.l.b16 %v2236
      %v2377 = vunpack.c.l.b16 %v2237
      %v2378 = vunpack.c.l.b16 %v2238
      %v2379 = vunpack.c.l.b16 %v2239
      %v2380 = vunpack.c.l.b16 %v2240
      %v2381 = vunpack.c.l.b16 %v2241
      %v2382 = vunpack.c.l.b16 %v2242
      %v2383 = vunpack.c.l.b16 %v2243
      %v2384 = vunpack.c.l.b16 %v2244
      %v2385 = vunpack.c.l.b16 %v2245
      %v2386 = vunpack.c.l.b16 %v2246
      %v2387 = vunpack.c.l.b16 %v2247
      %v2388 = vunpack.c.l.b16 %v2248
      %v2389 = vunpack.c.l.b16 %v2249
      %v2390 = vunpack.c.l.b16 %v2250
      %v2391 = vunpack.c.l.b16 %v2251
      %v2392 = vunpack.c.l.b16 %v2252
      %v2393 = vunpack.c.l.b16 %v2253
      %v2394 = vunpack.c.l.b16 %v2254
      %v2395 = vunpack.c.l.b16 %v2255
      %v2396 = vunpack.c.l.b16 %v2256
      %v2397 = vunpack.c.l.b16 %v2257
      %v2398 = vunpack.c.l.b16 %v2258
      %v2399 = vunpack.c.l.b16 %v2259
      %v2400 = vunpack.c.l.b16 %v2260
      %v2401 = vunpack.c.l.b16 %v2261
      %v2402 = vpack.c.b16 %v2339, %v2338
      %v2403 = vpack.c.b16 %v2341, %v2340
      %v2404 = vpack.c.b16 %v2343, %v2342
      %v2405 = vpack.c.b16 %v2345, %v2344
      %v2406 = vpack.c.b16 %v2347, %v2346
      %v2407 = vpack.c.b16 %v2349, %v2348
      %v2408 = vpack.c.b16 %v2351, %v2350
      %v2409 = vpack.c.b16 %v2353, %v2352
      %v2410 = vpack.c.b16 %v2355, %v2354
      %v2411 = vpack.c.b16 %v2357, %v2356
      %v2412 = vpack.c.b16 %v2359, %v2358
      %v2413 = vpack.c.b16 %v2361, %v2360
      %v2414 = vpack.c.b16 %v2363, %v2362
      %v2415 = vpack.c.b16 %v2365, %v2364
      %v2416 = vpack.c.b16 %v2367, %v2366
      %v2417 = vpack.c.b16 %v2369, %v2368
      %v2418 = vpack.c.b16 %v2371, %v2370
      %v2419 = vpack.c.b16 %v2373, %v2372
      %v2420 = vpack.c.b16 %v2375, %v2374
      %v2421 = vpack.c.b16 %v2377, %v2376
      %v2422 = vpack.c.b16 %v2379, %v2378
      %v2423 = vpack.c.b16 %v2381, %v2380
      %v2424 = vpack.c.b16 %v2383, %v2382
      %v2425 = vpack.c.b16 %v2385, %v2384
      %v2426 = vpack.c.b16 %v2387, %v2386
      %v2427 = vpack.c.b16 %v2389, %v2388
      %v2428 = vpack.c.b16 %v2391, %v2390
      %v2429 = vpack.c.b16 %v2393, %v2392
      %v2430 = vpack.c.b16 %v2395, %v2394
      %v2431 = vpack.c.b16 %v2397, %v2396
      %v2432 = vpack.c.b16 %v2399, %v2398
      %v2433 = vpack.c.b16 %v2401, %v2400
      %2466 = vmatprep.subr.bf16.mxu0 0
      %2467 = vmatpush1.bf16.msra.mxu0 %v2402
      %2468 = vmatprep.subr.bf16.mxu0 0
      %2469 = vmatpush1.bf16.msra.mxu0 %v2403
      %2470 = vmatprep.subr.bf16.mxu0 0
      %2471 = vmatpush1.bf16.msra.mxu0 %v2404
      %2472 = vmatprep.subr.bf16.mxu0 0
      %2473 = vmatpush1.bf16.msra.mxu0 %v2405
      %2474 = vmatprep.subr.bf16.mxu0 0
      %2475 = vmatpush1.bf16.msra.mxu0 %v2406
      %2476 = vmatprep.subr.bf16.mxu0 0
      %2477 = vmatpush1.bf16.msra.mxu0 %v2407
      %2478 = vmatprep.subr.bf16.mxu0 0
      %2479 = vmatpush1.bf16.msra.mxu0 %v2408
      %2480 = vmatprep.subr.bf16.mxu0 0
      %2481 = vmatpush1.bf16.msra.mxu0 %v2409
      %2482 = vmatprep.subr.bf16.mxu0 0
      %2483 = vmatpush1.bf16.msra.mxu0 %v2410
      %2484 = vmatprep.subr.bf16.mxu0 0
      %2485 = vmatpush1.bf16.msra.mxu0 %v2411
      %2486 = vmatprep.subr.bf16.mxu0 0
      %2487 = vmatpush1.bf16.msra.mxu0 %v2412
      %2488 = vmatprep.subr.bf16.mxu0 0
      %2489 = vmatpush1.bf16.msra.mxu0 %v2413
      %2490 = vmatprep.subr.bf16.mxu0 0
      %2491 = vmatpush1.bf16.msra.mxu0 %v2414
      %2492 = vmatprep.subr.bf16.mxu0 0
      %2493 = vmatpush1.bf16.msra.mxu0 %v2415
      %2494 = vmatprep.subr.bf16.mxu0 0
      %2495 = vmatpush1.bf16.msra.mxu0 %v2416
      %2496 = vmatprep.subr.bf16.mxu0 0
      %2497 = vmatpush1.bf16.msra.mxu0 %v2417
      %2498 = vmatprep.mubr.bf16.mxu0 %v2263
      %2499 = vmatmul.mubr.bf16.gmra.mrb[0].mxu0 %v2262
      %v2500 = vpop.f32.mrb[0].mxu0
      %v2501 = vadd.f32 0.0, %v2500
      %v2502 = vpop.f32.mrb[0].mxu0
      %v2503 = vpop.f32.mrb[0].mxu0
      %v2504 = vadd.f32 0.0, %v2503
      %v2505 = vpop.f32.mrb[0].mxu0
      %2506 = vmatprep.mubr.bf16.mxu0 %v2267
      %2507 = vmatmul.mubr.bf16.gmra.mrb[0].mxu0 %v2266
      %v2508 = vpop.f32.mrb[0].mxu0
      %v2509 = vadd.f32 0.0, %v2508
      %v2510 = vpop.f32.mrb[0].mxu0
      %v2511 = vpop.f32.mrb[0].mxu0
      %v2512 = vadd.f32 0.0, %v2511
      %v2513 = vpop.f32.mrb[0].mxu0
      %2514 = vmatprep.mubr.bf16.mxu0 %v2271
      %2515 = vmatmul.mubr.bf16.gmra.mrb[0].mxu0 %v2270
      %v2516 = vpop.f32.mrb[0].mxu0
      %v2517 = vadd.f32 0.0, %v2516
      %v2518 = vpop.f32.mrb[0].mxu0
      %v2519 = vpop.f32.mrb[0].mxu0
      %v2520 = vadd.f32 0.0, %v2519
      %v2521 = vpop.f32.mrb[0].mxu0
      %2522 = vdwg.mxu0
      %2523 = vmatprep.subr.bf16.mxu0 0
      %2524 = vmatpush1.bf16.msra.mxu0 %v2418
      %2525 = vmatprep.subr.bf16.mxu0 0
      %2526 = vmatpush1.bf16.msra.mxu0 %v2419
      %2527 = vmatprep.subr.bf16.mxu0 0
      %2528 = vmatpush1.bf16.msra.mxu0 %v2420
      %2529 = vmatprep.subr.bf16.mxu0 0
      %2530 = vmatpush1.bf16.msra.mxu0 %v2421
      %2531 = vmatprep.subr.bf16.mxu0 0
      %2532 = vmatpush1.bf16.msra.mxu0 %v2422
      %2533 = vmatprep.subr.bf16.mxu0 0
      %2534 = vmatpush1.bf16.msra.mxu0 %v2423
      %2535 = vmatprep.subr.bf16.mxu0 0
      %2536 = vmatpush1.bf16.msra.mxu0 %v2424
      %2537 = vmatprep.subr.bf16.mxu0 0
      %2538 = vmatpush1.bf16.msra.mxu0 %v2425
      %2539 = vmatprep.subr.bf16.mxu0 0
      %2540 = vmatpush1.bf16.msra.mxu0 %v2426
      %2541 = vmatprep.subr.bf16.mxu0 0
      %2542 = vmatpush1.bf16.msra.mxu0 %v2427
      %2543 = vmatprep.subr.bf16.mxu0 0
      %2544 = vmatpush1.bf16.msra.mxu0 %v2428
      %2545 = vmatprep.subr.bf16.mxu0 0
      %2546 = vmatpush1.bf16.msra.mxu0 %v2429
      %2547 = vmatprep.subr.bf16.mxu0 0
      %2548 = vmatpush1.bf16.msra.mxu0 %v2430
      %2549 = vmatprep.subr.bf16.mxu0 0
      %2550 = vmatpush1.bf16.msra.mxu0 %v2431
      %2551 = vmatprep.subr.bf16.mxu0 0
      %2552 = vmatpush1.bf16.msra.mxu0 %v2432
      %2553 = vmatprep.subr.bf16.mxu0 0
      %2554 = vmatpush1.bf16.msra.mxu0 %v2433
      %2555 = vmatprep.mubr.bf16.mxu0 %v2265
      %2556 = vmatmul.mubr.bf16.gmra.mrb[0].mxu0 %v2264
      %v2557 = vpop.f32.mrb[0].mxu0
      %v2558 = vadd.f32 %v2501, %v2557
      %v2559 = vpop.f32.mrb[0].mxu0
      %v2560 = vpop.f32.mrb[0].mxu0
      %v2561 = vadd.f32 %v2504, %v2560
      %v2562 = vpop.f32.mrb[0].mxu0
      %2563 = vmatprep.mubr.bf16.mxu0 %v2269
      %2564 = vmatmul.mubr.bf16.gmra.mrb[0].mxu0 %v2268
      %v2565 = vpop.f32.mrb[0].mxu0
      %v2566 = vadd.f32 %v2509, %v2565
      %v2567 = vpop.f32.mrb[0].mxu0
      %v2568 = vpop.f32.mrb[0].mxu0
      %v2569 = vadd.f32 %v2512, %v2568
      %v2570 = vpop.f32.mrb[0].mxu0
      %2571 = vmatprep.mubr.bf16.mxu0 %v2273
      %2572 = vmatmul.mubr.bf16.gmra.mrb[0].mxu0 %v2272
      %v2573 = vpop.f32.mrb[0].mxu0
      %v2574 = vadd.f32 %v2517, %v2573
      %v2575 = vpop.f32.mrb[0].mxu0
      %v2576 = vpop.f32.mrb[0].mxu0
      %v2577 = vadd.f32 %v2520, %v2576
      %v2578 = vpop.f32.mrb[0].mxu0
      %2579 = vdwg.mxu0
      %v2580 = vadd.f32 %v1541, %v2558
      %v2581 = vadd.f32 %v1542, %v2561
      %v2582 = vadd.f32 %v1543, %v2566
      %v2583 = vadd.f32 %v1544, %v2569
      %v2584 = vadd.f32 %v1545, %v2574
      %v2585 = vadd.f32 %v1546, %v2577
      %v2586 = vld [vmem:[%s701] sm:$0x1]
      %v2588 = vlaneseq
      %v2589 = vshrl.u32 %v2588, 7
      %v2590 = vsub.s32 0, %v2589
      %v2591 = vrot.slane %v2586, %v2590
      %v2593 = vadd.f32 %v2580, %v2591
      %v2594 = vadd.f32 %v2581, %v2591
      %v2595 = vadd.f32 %v2582, %v2591
      %v2596 = vadd.f32 %v2583, %v2591
      %v2597 = vadd.f32 %v2584, %v2591
      %v2598 = vadd.f32 %v2585, %v2591
      %p2599 = scmp.eq.s32.totalorder %s31, 1
      // Predicated region
      $region92: #{dino_featurizer_forward.3} parent=79 // pred_check
        %p2600 = pneg %p2599
      $region93: #{dino_featurizer_forward.3} parent=79 // pred_check_branch
        %2602 = sbr.rel (%p2600) target = $region95
      $region94: #{dino_featurizer_forward.3} parent=79 // pred_region
        %v2603 = vld [vmem:[%s13] sm:$0x1]
        %v2604 = vld [vmem:[%s14] sm:$0x1]
        %2605 = vadd.xlane.f32.xlu0 %v2593
        %v2606 = vpop.xlane.xlu0 %2605
        %2607 = vadd.xlane.f32.xlu0 %v2594
        %v2608 = vpop.xlane.xlu0 %2607
        %2609 = vadd.xlane.f32.xlu0 %v2595
        %v2610 = vpop.xlane.xlu0 %2609
        %2611 = vadd.xlane.f32.xlu0 %v2596
        %v2612 = vpop.xlane.xlu0 %2611
        %2613 = vadd.xlane.f32.xlu0 %v2597
        %v2614 = vpop.xlane.xlu0 %2613
        %2615 = vadd.xlane.f32.xlu0 %v2598
        %v2616 = vpop.xlane.xlu0 %2615
        %v2617 = vmul.f32 %v2606, %v748
        %v2618 = vmul.f32 %v2608, %v748
        %v2619 = vmul.f32 %v2610, %v748
        %v2620 = vmul.f32 %v2612, %v748
        %v2621 = vmul.f32 %v2614, %v748
        %v2622 = vmul.f32 %v2616, %v748
        %v2623 = vsub.f32 %v2593, %v2617
        %v2624 = vsub.f32 %v2594, %v2618
        %v2625 = vsub.f32 %v2595, %v2619
        %v2626 = vsub.f32 %v2596, %v2620
        %v2627 = vsub.f32 %v2597, %v2621
        %v2628 = vsub.f32 %v2598, %v2622
        %v2629 = vmul.f32 %v2623, %v2623
        %v2630 = vmul.f32 %v2624, %v2624
        %v2631 = vmul.f32 %v2625, %v2625
        %v2632 = vmul.f32 %v2626, %v2626
        %v2633 = vmul.f32 %v2627, %v2627
        %v2634 = vmul.f32 %v2628, %v2628
        %2635 = vadd.xlane.f32.xlu0 %v2629
        %v2636 = vpop.xlane.xlu0 %2635
        %2637 = vadd.xlane.f32.xlu0 %v2630
        %v2638 = vpop.xlane.xlu0 %2637
        %2639 = vadd.xlane.f32.xlu0 %v2631
        %v2640 = vpop.xlane.xlu0 %2639
        %2641 = vadd.xlane.f32.xlu0 %v2632
        %v2642 = vpop.xlane.xlu0 %2641
        %2643 = vadd.xlane.f32.xlu0 %v2633
        %v2644 = vpop.xlane.xlu0 %2643
        %2645 = vadd.xlane.f32.xlu0 %v2634
        %v2646 = vpop.xlane.xlu0 %2645
        %v2647 = vmul.f32 %v2636, %v748
        %v2648 = vmul.f32 %v2638, %v748
        %v2649 = vmul.f32 %v2640, %v748
        %v2650 = vmul.f32 %v2642, %v748
        %v2651 = vmul.f32 %v2644, %v748
        %v2652 = vmul.f32 %v2646, %v748
        %v2653 = vadd.f32 %v2647, 1e-06
        %v2654 = vadd.f32 %v2648, 1e-06
        %v2655 = vadd.f32 %v2649, 1e-06
        %v2656 = vadd.f32 %v2650, 1e-06
        %v2657 = vadd.f32 %v2651, 1e-06
        %v2658 = vadd.f32 %v2652, 1e-06
        %v2659 = vrsqrt.pop %v2653
        %v2660 = vrsqrt.pop %v2654
        %v2661 = vrsqrt.pop %v2655
        %v2662 = vrsqrt.pop %v2656
        %v2663 = vrsqrt.pop %v2657
        %v2664 = vrsqrt.pop %v2658
        %v2665 = vmul.f32 %v2623, %v2659
        %v2666 = vmul.f32 %v2624, %v2660
        %v2667 = vmul.f32 %v2625, %v2661
        %v2668 = vmul.f32 %v2626, %v2662
        %v2669 = vmul.f32 %v2627, %v2663
        %v2670 = vmul.f32 %v2628, %v2664
        %v2672 = vlaneseq
        %v2673 = vshrl.u32 %v2672, 7
        %v2674 = vsub.s32 0, %v2673
        %v2675 = vrot.slane %v2603, %v2674
        %v2677 = vmul.f32 %v2665, %v2675
        %v2678 = vmul.f32 %v2666, %v2675
        %v2679 = vmul.f32 %v2667, %v2675
        %v2680 = vmul.f32 %v2668, %v2675
        %v2681 = vmul.f32 %v2669, %v2675
        %v2682 = vmul.f32 %v2670, %v2675
        %v2684 = vlaneseq
        %v2685 = vshrl.u32 %v2684, 7
        %v2686 = vsub.s32 0, %v2685
        %v2687 = vrot.slane %v2604, %v2686
        %v2689 = vadd.f32 %v2677, %v2687
        %v2690 = vadd.f32 %v2678, %v2687
        %v2691 = vadd.f32 %v2679, %v2687
        %v2692 = vadd.f32 %v2680, %v2687
        %v2693 = vadd.f32 %v2681, %v2687
        %v2694 = vadd.f32 %v2682, %v2687
        %2695 = vst [vmem:[%s706] sm:$0xff] %v2689
        %2696 = vst [vmem:[%s706 + $0x8] sm:$0xff] %v2690
        %2697 = vst [vmem:[%s706 + $0x10] sm:$0xff] %v2691
        %2698 = vst [vmem:[%s706 + $0x18] sm:$0xff] %v2692
        %2699 = vst [vmem:[%s706 + $0x20] sm:$0xff] %v2693
        %2700 = vst [vmem:[%s706 + $0x28] sm:$0xff] %v2694
      $region95: #{dino_featurizer_forward.3} parent=79 // pred_fallthru
        _
      %p2701 = scmp.ne.s32.totalorder %s31, 1
      // Predicated region
      $region96: #{dino_featurizer_forward.3} parent=79 // pred_check
        %p2702 = pneg %p2701
      $region97: #{dino_featurizer_forward.3} parent=79 // pred_check_branch
        %2704 = sbr.rel (%p2702) target = $region99
      $region98: #{dino_featurizer_forward.3} parent=79 // pred_region
        %2705 = vst [vmem:[%s706] sm:$0xff] %v2593
        %2706 = vst [vmem:[%s706 + $0x8] sm:$0xff] %v2594
        %2707 = vst [vmem:[%s706 + $0x10] sm:$0xff] %v2595
        %2708 = vst [vmem:[%s706 + $0x18] sm:$0xff] %v2596
        %2709 = vst [vmem:[%s706 + $0x20] sm:$0xff] %v2597
        %2710 = vst [vmem:[%s706 + $0x28] sm:$0xff] %v2598
      $region99: #{dino_featurizer_forward.3} parent=79 // pred_fallthru
        _
      %s2711 = smul.u32 6, %s30
      %p2712 = scmp.lt.s32.totalorder %s2711, 11
      %s2713 = scalar_select %p2712, %s2711, 11
      %s2714 = smul.addr %s2713, 8
      %s2715 = scalar_lea.vmem %s15, %s2714
      // Predicated region
      $region100: #{dino_featurizer_forward.3} parent=79 // pred_check
        %p2716 = pneg %p436
      $region101: #{dino_featurizer_forward.3} parent=79 // pred_check_branch
        %2718 = sbr.rel (%p2716) target = $region103
      $region102: #{dino_featurizer_forward.3} parent=79 // pred_region
        %s2719 = smul.u32 6, %s30
      $region103: #{dino_featurizer_forward.3} parent=79 // pred_fallthru
        _
    $region80: #{dino_featurizer_forward.3} parent=5 // pred_fallthru
      _
    %p2720 = scmp.le.s32.totalorder 2, %s21
    // Predicated region
    $region104: #{dino_featurizer_forward.3} parent=5 // pred_check
      %p2721 = pneg %p2720
    $region105: #{dino_featurizer_forward.3} parent=5 // pred_check_branch
      %2723 = sbr.rel (%p2721) target = $region107
    $region106: #{dino_featurizer_forward.3} parent=5 // pred_region
      %s2724 = ssub.s32 %s21, 2
      // Predicated region
      $region108: #{dino_featurizer_forward.3} parent=106 // pred_check
        %p2725 = pneg %p442
      $region109: #{dino_featurizer_forward.3} parent=106 // pred_check_branch
        %2727 = sbr.rel (%p2725) target = $region111
      $region110: #{dino_featurizer_forward.3} parent=106 // pred_region
        %s2728 = smul.u32 6, %s32
        %p2729 = scmp.lt.s32.totalorder %s2728, 11
        %s2730 = scalar_select %p2729, %s2728, 11
        %s2731 = smul.addr %s2730, 8
        %s2732 = scalar_lea.vmem %s15, %s2731
      $region111: #{dino_featurizer_forward.3} parent=106 // pred_fallthru
        _
    $region107: #{dino_featurizer_forward.3} parent=5 // pred_fallthru
      _
  $region6: #{dino_featurizer_forward.3} parent=0 // loop_footer
    %s25 = sadd.s32 1, %s21
  $region7: #{dino_featurizer_forward.3} parent=0 // loop_footer_branch
    %20 = sbr.rel target = $region3
  $region8: #{dino_featurizer_forward.3} parent=0 // loop_exit
    _

</llo_original>
